<compile_context>
chip_gen: v5e
topology: v5e:2x2
jax: 0.10.0
libtpu: 0.0.40
codegen_flags: <defaults>
</compile_context>

<pallas_src>
import numpy as np
import jax
import jax.numpy as jnp
from jax.experimental import pallas as pl
from jax.experimental.pallas import tpu as pltpu


# ---------------------------------------------------------------------------
# Pallas kernel: per-tile elementwise loss, accumulated; final reduce to scalar.
# ---------------------------------------------------------------------------
def _svi_loss_kernel(c_ref, y_ref, qbd_ref, qls_ref, qlf_ref,
                     alls_ref, allf_ref, local_ref, out_ref, acc_ref):
    i = pl.program_id(0)
    j = pl.program_id(1)
    ni = pl.num_programs(0)
    nj = pl.num_programs(1)

    @pl.when((i == 0) & (j == 0))
    def _init():
        acc_ref[...] = jnp.zeros_like(acc_ref)

    # ---- scalar constants precomputed in the wrapper (SMEM reads) ----
    w0 = c_ref[0]
    fA, fB, fC, fD = c_ref[1], c_ref[2], c_ref[3], c_ref[4]
    fE, fF, fG, fH = c_ref[5], c_ref[6], c_ref[7], c_ref[8]
    w3, w13, h10 = c_ref[9], c_ref[10], c_ref[11]
    w4, w14, h11 = c_ref[12], c_ref[13], c_ref[14]
    half_log_var = c_ref[15]
    inv_2var_eps = c_ref[16]
    inv_2var = c_ref[17]
    inv_var = c_ref[18]
    w7, w8, w9 = c_ref[19], c_ref[20], c_ref[21]
    w78, w79, w89, w789 = c_ref[22], c_ref[23], c_ref[24], c_ref[25]
    inv_2delta = c_ref[26]

    Y = y_ref[...]
    xBD = qbd_ref[...]
    xLS = qls_ref[...]
    xLF = qlf_ref[...]
    alLS = alls_ref[...]
    alLF = allf_ref[...]
    local = local_ref[...]

    # sigmoid + Bernoulli entropy straight from the logits (stable; 1 exp + 1 log each)
    def sig_and_entropy(x):
        e = jnp.exp(-jnp.abs(x))
        r = 1.0 / (1.0 + e)
        q = jnp.where(x >= 0, r, e * r)                    # sigmoid(x)
        sp_pos = jnp.maximum(x, 0.0) + jnp.log(1.0 + e)    # softplus(x)
        sp_neg = sp_pos - x                                # softplus(-x)
        ent = q * sp_neg + (1.0 - q) * sp_pos              # -q log q - (1-q) log(1-q)
        return q, ent

    qBD, entBD = sig_and_entropy(xBD)
    qLS, entLS = sig_and_entropy(xLS)
    qLF, entLF = sig_and_entropy(xLF)

    # stable f(a) = -log(1 + exp(a)) for the two element-wise arguments per side
    def fneg(a):
        return -(jnp.maximum(a, 0.0) + jnp.log(1.0 + jnp.exp(-jnp.abs(a))))

    # class masks (only the combinations actually used)
    e1 = local == 1
    e2 = local == 2
    e3 = local == 3
    e4 = local == 4
    e5 = local == 5
    e6 = local == 6
    fm = lambda b: b.astype(jnp.float32)
    m3, m4, m5, m6 = fm(e3), fm(e4), fm(e5), fm(e6)
    m346 = fm(e3 | e4 | e6)
    m1356 = fm(e1 | e3 | e5 | e6)
    m2456 = fm(e2 | e4 | e5 | e6)
    m56 = fm(e5 | e6)

    one_mqBD = 1.0 - qBD
    one_mqLS = 1.0 - qLS
    one_mqLF = 1.0 - qLF

    # ----- LBD (all softplus(w...) factors are precomputed scalars fA..fH) -----
    part1 = m3 * qBD * (qLS * fA + one_mqLS * fB)
    part2 = m3 * one_mqBD * (qLS * fC + one_mqLS * fD)
    part3 = m4 * qBD * (qLF * fE + one_mqLF * fB)
    part4 = m4 * one_mqBD * (qLF * fF + one_mqLF * fD)
    part5 = m6 * (
        qBD * (qLS * qLF * fG + qLS * one_mqLF * fA
               + one_mqLS * qLF * fE + one_mqLS * one_mqLF * fB)
        + one_mqBD * (qLS * qLF * fH + qLS * one_mqLF * fC
                      + one_mqLS * qLF * fF + one_mqLS * one_mqLF * fD))
    part6 = m346 * entBD
    LBD = part1 + part2 + part3 + part4 + part5 + part6
    # (original "* (1 - mask + mask*1e-6)" rescale dropped: LBD is already 0 there)

    # ----- LLS -----
    t_ls = w3 + w13 * alLS
    LLS = m1356 * (qLS * fneg(h10 - t_ls) + one_mqLS * fneg(h10 + t_ls) + entLS)

    # ----- LLF -----
    t_lf = w4 + w14 * alLF
    LLF = m2456 * (qLF * fneg(h11 - t_lf) + one_mqLF * fneg(h11 + t_lf) + entLF)

    # ----- Leps -----
    y = jnp.log(1e-06 + Y)
    ym = y - w0
    Leps = -(half_log_var + ym * ym * inv_2var_eps)
    Leps = Leps - inv_2var * m346 * w7 * qBD * (w7 - 2.0 * ym)
    Leps = Leps - inv_2var * m1356 * w8 * qLS * (w8 - 2.0 * ym)
    Leps = Leps - inv_2var * m2456 * w9 * qLF * (w9 - 2.0 * ym)
    Leps = Leps - inv_var * (m3 * w78 * qBD * qLS
                             + m4 * w79 * qBD * qLF
                             + m5 * w89 * qLS * qLF
                             + m6 * w789 * qBD * qLS * qLF)
    Leps = Leps - y

    # ----- L_ex -----
    f_qLS = jnp.clip(qLS, 1e-06, 1.0 - 1e-06)
    f_qLF = jnp.clip(qLF, 1e-06, 1.0 - 1e-06)
    L_ex = jnp.maximum(-m56 * (f_qLS * f_qLF) * inv_2delta, -100.0)

    L = LBD + LLS + LLF + Leps + L_ex
    acc_ref[...] += -L                          # per-step: pure VPU add

    @pl.when((i == ni - 1) & (j == nj - 1))
    def _finalize():
        out_ref[0, 0] = jnp.sum(acc_ref[...])   # single XLU reduce at the end


# ---------------------------------------------------------------------------
# Wrapper
# ---------------------------------------------------------------------------
def _pick_tile(dim, target, quantum):
    """Largest multiple of `quantum` that divides `dim` and is <= target (else full dim)."""
    if dim <= target:
        return dim
    t = (min(target, dim) // quantum) * quantum
    while t >= quantum:
        if dim % t == 0:
            return t
        t -= quantum
    return dim


def svi_forward(w, QBD, QLS, QLF, Y, LOCAL, alLS, alLF, delta,
                *, block_h=256, block_w=512):
    """Returns mean(-L) exactly like SVIModel.forward (QBD/QLS/QLF are the raw logits)."""
    H, W = Y.shape
    th = _pick_tile(H, block_h, 8)
    tw = _pick_tile(W, block_w, 128)
    grid = (H // th, W // tw)

    # ---- scalar-only work hoisted out of the (EUP-bound) kernel body ----
    w = jnp.asarray(w, dtype=jnp.float32)
    w0, w1, w2, w3, w4, w5, w6, w7, w8, w9, w10, w11, w12, w13, w14 = (
        w[k] for k in range(15))
    h10, h11, h12 = 0.5 * w10 * w10, 0.5 * w11 * w11, 0.5 * w12 * w12
    fneg = lambda a: -jax.nn.softplus(a)        # f(a) = -log(1 + exp(a)), stable
    two_var = 2.0 * w1 * w1
    consts = jnp.stack([
        w0,                                      # 0
        fneg(-w2 - w5 + h12),                    # 1  fA
        fneg(-w2 + h12),                         # 2  fB
        fneg(w2 + w5 + h12),                     # 3  fC
        fneg(w2 + h12),                          # 4  fD
        fneg(-w2 - w6 + h12),                    # 5  fE
        fneg(w2 + w6 + h12),                     # 6  fF
        fneg(-w2 - w5 - w6 + h12),               # 7  fG
        fneg(w2 + w5 + w6 + h12),                # 8  fH
        w3, w13, h10,                            # 9,10,11
        w4, w14, h11,                            # 12,13,14
        0.5 * jnp.log(w1 * w1 + 1e-06),          # 15
        1.0 / (two_var + 1e-06),                 # 16
        1.0 / two_var,                           # 17
        1.0 / (w1 * w1),                         # 18
        w7, w8, w9,                              # 19,20,21
        w7 * w8, w7 * w9, w8 * w9, w7 * w8 * w9, # 22..25
        1.0 / (2.0 * jnp.float32(delta)),        # 26
    ]).astype(jnp.float32)

    def field_spec():
        return pl.BlockSpec((th, tw), lambda i, j: (i, j))

    grid_spec = pltpu.PrefetchScalarGridSpec(
        num_scalar_prefetch=0,
        grid=grid,
        in_specs=[pl.BlockSpec(memory_space=pltpu.MemorySpace.SMEM),   # consts
                  field_spec(), field_spec(), field_spec(), field_spec(),  # Y,QBD,QLS,QLF
                  field_spec(), field_spec(), field_spec()],               # alLS,alLF,LOCAL
        out_specs=pl.BlockSpec(memory_space=pltpu.MemorySpace.SMEM),
        scratch_shapes=[pltpu.VMEM((th, tw), jnp.float32)],
    )

    loss_sum = pl.pallas_call(
        _svi_loss_kernel,
        out_shape=jax.ShapeDtypeStruct((1, 1), jnp.float32),
        grid_spec=grid_spec,
        compiler_params=pltpu.CompilerParams(
            dimension_semantics=("arbitrary", "arbitrary")),
    )(consts, Y, QBD, QLS, QLF, alLS, alLF, LOCAL)

    return loss_sum[0, 0] / (H * W)


# ---------------------------------------------------------------------------
# Pure-JAX reference that mirrors the original torch math verbatim (for checking).
# ---------------------------------------------------------------------------
def _reference_forward(w, QBD, QLS, QLF, Y, LOCAL, alLS, alLF, delta):
    qBD = jax.nn.sigmoid(QBD)
    qLS = jax.nn.sigmoid(QLS)
    qLF = jax.nn.sigmoid(QLF)
    y = jnp.log(1e-06 + Y)

    def f(a):
        return -jnp.log(1.0 + jnp.exp(a))

    f_qBD = jnp.clip(qBD, 1e-06, 1.0 - 1e-06)
    f_qLS = jnp.clip(qLS, 1e-06, 1.0 - 1e-06)
    f_qLF = jnp.clip(qLF, 1e-06, 1.0 - 1e-06)
    e0, e1, e2, e3, e4, e5, e6 = (LOCAL == k for k in range(7))
    m = lambda b: b.astype(jnp.float32)
    h12 = w[12] ** 2 / 2
    h10 = w[10] ** 2 / 2
    h11 = w[11] ** 2 / 2

    part1 = m(e3) * qBD * (qLS * f(-w[2] - w[5] + h12) + (1 - qLS) * f(-w[2] + h12))
    part2 = m(e3) * (1 - qBD) * (qLS * f(w[2] + w[5] + h12) + (1 - qLS) * f(w[2] + h12))
    part3 = m(e4) * qBD * (qLF * f(-w[2] - w[6] + h12) + (1 - qLF) * f(-w[2] + h12))
    part4 = m(e4) * (1 - qBD) * (qLF * f(w[2] + w[6] + h12) + (1 - qLF) * f(w[2] + h12))
    part5 = m(e6) * (
        qBD * (qLS * qLF * f(-w[2] - w[5] - w[6] + h12)
               + qLS * (1 - qLF) * f(-w[2] - w[5] + h12)
               + (1 - qLS) * qLF * f(-w[2] - w[6] + h12)
               + (1 - qLS) * (1 - qLF) * f(-w[2] + h12))
        + (1 - qBD) * (qLS * qLF * f(w[2] + w[5] + w[6] + h12)
                       + qLS * (1 - qLF) * f(w[2] + w[5] + h12)
                       + (1 - qLS) * qLF * f(w[2] + w[6] + h12)
                       + (1 - qLS) * (1 - qLF) * f(w[2] + h12)))
    part6 = -1.0 * m(e3 | e4 | e6) * (qBD * jnp.log(f_qBD + 1e-06)
                                      + (1 - qBD) * jnp.log(1 - f_qBD + 1e-06))
    LBD = part1 + part2 + part3 + part4 + part5 + part6
    lbd_mask = m(e0 | e1 | e2 | e5)
    LBD = LBD * (1 - lbd_mask + lbd_mask * 1e-06)

    LLS = m(e1 | e3 | e5 | e6) * (qLS * f(-w[3] - w[13] * alLS + h10)
                                  + (1 - qLS) * f(w[3] + w[13] * alLS + h10)
                                  - qLS * jnp.log(f_qLS + 1e-06)
                                  - (1 - qLS) * jnp.log(1 - f_qLS + 1e-06))
    lls_mask = m(e0 | e2 | e4)
    LLS = LLS * (1 - lls_mask + lls_mask * 1e-06)

    LLF = m(e2 | e4 | e5 | e6) * (qLF * f(-w[4] - w[14] * alLF + h11)
                                  + (1 - qLF) * f(w[4] + w[14] * alLF + h11)
                                  - qLF * jnp.log(f_qLF + 1e-06)
                                  - (1 - qLF) * jnp.log(1 - f_qLF + 1e-06))
    llf_mask = m(e0 | e1 | e3)
    LLF = LLF * (1 - llf_mask + llf_mask * 1e-06)

    Leps = -(0.5 * jnp.log(w[1] ** 2 + 1e-06)
             + (y - w[0]) * (y - w[0]) / (2 * w[1] ** 2 + 1e-06))
    Leps = Leps - 1 / (2 * w[1] ** 2) * m(e3 | e4 | e6) * w[7] * qBD * (w[7] - 2 * y + 2 * w[0])
    Leps = Leps - 1 / (2 * w[1] ** 2) * m(e1 | e3 | e5 | e6) * w[8] * qLS * (w[8] - 2 * y + 2 * w[0])
    Leps = Leps - 1 / (2 * w[1] ** 2) * m(e2 | e4 | e5 | e6) * w[9] * qLF * (w[9] - 2 * y + 2 * w[0])
    Leps = Leps - 1 / w[1] ** 2 * (m(e3) * w[7] * w[8] * qBD * qLS
                                   + m(e4) * w[7] * w[9] * qBD * qLF
                                   + m(e5) * w[8] * w[9] * qLS * qLF
                                   + m(e6) * w[7] * w[8] * w[9] * qBD * qLS * qLF)
    Leps = Leps - y

    L_ex = jnp.maximum(-1.0 * m(e5 | e6) * (f_qLS * f_qLF) / (2 * delta), -100.0)
    L = LBD + LLS + LLF + Leps + L_ex
    return jnp.mean(-L)


# ---------------------------------------------------------------------------
if __name__ == "__main__":
    H, W = 256, 512          # (H, W) = shape passed to SVIModel.__init__
    key = jax.random.PRNGKey(0)
    k_w, k_qbd, k_qls, k_qlf, k_y, k_loc, k_als, k_alf = jax.random.split(key, 8)

    # Deterministic parameter init (mirrors the torch init shapes):
    w = jax.random.uniform(k_w, (15,), dtype=jnp.float32) * 0.1
    kaiming_std = np.float32(np.sqrt(2.0 / W))
    QBD = jax.random.normal(k_qbd, (H, W), dtype=jnp.float32) * kaiming_std
    QLS = jax.random.normal(k_qls, (H, W), dtype=jnp.float32) * kaiming_std
    QLF = jax.random.normal(k_qlf, (H, W), dtype=jnp.float32) * kaiming_std

    # Forward inputs (LS / LF args of the torch forward are unused, so omitted).
    Y = jax.random.uniform(k_y, (H, W), dtype=jnp.float32) * 2.0 + 0.1
    LOCAL = jax.random.randint(k_loc, (H, W), 0, 7, dtype=jnp.int32)
    alLS = jax.random.uniform(k_als, (H, W), dtype=jnp.float32)
    alLF = jax.random.uniform(k_alf, (H, W), dtype=jnp.float32)
    delta = 0.5

    # Small blocks here to exercise a multi-step (4x4) grid + accumulator at demo size;
    # at production sizes the defaults (256x512 f32 tiles, ~0.5 MiB/array) are used.
    out = jax.block_until_ready(
        svi_forward(w, QBD, QLS, QLF, Y, LOCAL, alLS, alLF, delta,
                    block_h=64, block_w=128))

    ref = jax.block_until_ready(
        _reference_forward(w, QBD, QLS, QLF, Y, LOCAL, alLS, alLF, delta))

    assert np.isfinite(float(out)), "kernel produced non-finite loss"
    np.testing.assert_allclose(float(out), float(ref), rtol=1e-4, atol=1e-4)
    print("KERNEL_OK")
</pallas_src>

<mosaic_0001>
module attributes {stable_mosaic.version = 11 : i64} {
  func.func @_svi_loss_kernel(%arg0: i32, %arg1: i32, %arg2: memref<27xf32, #tpu.memory_space<smem>>, %arg3: memref<64x128xf32, #tpu.memory_space<vmem>>, %arg4: memref<64x128xf32, #tpu.memory_space<vmem>>, %arg5: memref<64x128xf32, #tpu.memory_space<vmem>>, %arg6: memref<64x128xf32, #tpu.memory_space<vmem>>, %arg7: memref<64x128xf32, #tpu.memory_space<vmem>>, %arg8: memref<64x128xf32, #tpu.memory_space<vmem>>, %arg9: memref<64x128xi32, #tpu.memory_space<vmem>>, %arg10: memref<1x1xf32, #tpu.memory_space<smem>>, %arg11: memref<64x128xf32, #tpu.memory_space<vmem>>) attributes {dimension_semantics = [#tpu.dimension_semantics<arbitrary>, #tpu.dimension_semantics<arbitrary>], iteration_bounds = array<i64: 4, 4>, scalar_prefetch = 0 : i64, scratch_operands = 1 : i64, tpu.core_type = #tpu.core_type<tc>, window_params = [{transform_indices = @transform_0, window_bounds = array<i64: 27>}, {transform_indices = @transform_1, window_bounds = array<i64: 64, 128>}, {transform_indices = @transform_2, window_bounds = array<i64: 64, 128>}, {transform_indices = @transform_3, window_bounds = array<i64: 64, 128>}, {transform_indices = @transform_4, window_bounds = array<i64: 64, 128>}, {transform_indices = @transform_5, window_bounds = array<i64: 64, 128>}, {transform_indices = @transform_6, window_bounds = array<i64: 64, 128>}, {transform_indices = @transform_7, window_bounds = array<i64: 64, 128>}, {transform_indices = @transform_8, window_bounds = array<i64: 1, 1>}]} {
    %c0_i32 = arith.constant 0 : i32
    %0 = arith.cmpi eq, %arg0, %c0_i32 : i32
    %c0_i32_0 = arith.constant 0 : i32
    %1 = arith.cmpi eq, %arg1, %c0_i32_0 : i32
    %2 = arith.andi %0, %1 : i1
    %3 = arith.extui %2 : i1 to i32
    %c0_i32_1 = arith.constant 0 : i32
    %4 = arith.cmpi ne, %3, %c0_i32_1 : i32
    scf.if %4 {
      %cst_74 = arith.constant 0.000000e+00 : f32
      %395 = vector.broadcast %cst_74 : f32 to vector<64x128xf32>
      %c0_75 = arith.constant 0 : index
      %c0_76 = arith.constant 0 : index
      %396 = vector.load %arg11[%c0_75, %c0_76] : memref<64x128xf32, #tpu.memory_space<vmem>>, vector<64x128xf32>
      tpu.vector_store %arg11[%c0_75, %c0_76], %395 {strides = array<i32>} : memref<64x128xf32, #tpu.memory_space<vmem>>, vector<64x128xf32>,
    } else {
    }
    %c0 = arith.constant 0 : index
    %5 = memref.load %arg2[%c0] : memref<27xf32, #tpu.memory_space<smem>>
    %c1 = arith.constant 1 : index
    %6 = memref.load %arg2[%c1] : memref<27xf32, #tpu.memory_space<smem>>
    %c2 = arith.constant 2 : index
    %7 = memref.load %arg2[%c2] : memref<27xf32, #tpu.memory_space<smem>>
    %c3 = arith.constant 3 : index
    %8 = memref.load %arg2[%c3] : memref<27xf32, #tpu.memory_space<smem>>
    %c4 = arith.constant 4 : index
    %9 = memref.load %arg2[%c4] : memref<27xf32, #tpu.memory_space<smem>>
    %c5 = arith.constant 5 : index
    %10 = memref.load %arg2[%c5] : memref<27xf32, #tpu.memory_space<smem>>
    %c6 = arith.constant 6 : index
    %11 = memref.load %arg2[%c6] : memref<27xf32, #tpu.memory_space<smem>>
    %c7 = arith.constant 7 : index
    %12 = memref.load %arg2[%c7] : memref<27xf32, #tpu.memory_space<smem>>
    %c8 = arith.constant 8 : index
    %13 = memref.load %arg2[%c8] : memref<27xf32, #tpu.memory_space<smem>>
    %c9 = arith.constant 9 : index
    %14 = memref.load %arg2[%c9] : memref<27xf32, #tpu.memory_space<smem>>
    %c10 = arith.constant 10 : index
    %15 = memref.load %arg2[%c10] : memref<27xf32, #tpu.memory_space<smem>>
    %c11 = arith.constant 11 : index
    %16 = memref.load %arg2[%c11] : memref<27xf32, #tpu.memory_space<smem>>
    %c12 = arith.constant 12 : index
    %17 = memref.load %arg2[%c12] : memref<27xf32, #tpu.memory_space<smem>>
    %c13 = arith.constant 13 : index
    %18 = memref.load %arg2[%c13] : memref<27xf32, #tpu.memory_space<smem>>
    %c14 = arith.constant 14 : index
    %19 = memref.load %arg2[%c14] : memref<27xf32, #tpu.memory_space<smem>>
    %c15 = arith.constant 15 : index
    %20 = memref.load %arg2[%c15] : memref<27xf32, #tpu.memory_space<smem>>
    %c16 = arith.constant 16 : index
    %21 = memref.load %arg2[%c16] : memref<27xf32, #tpu.memory_space<smem>>
    %c17 = arith.constant 17 : index
    %22 = memref.load %arg2[%c17] : memref<27xf32, #tpu.memory_space<smem>>
    %c18 = arith.constant 18 : index
    %23 = memref.load %arg2[%c18] : memref<27xf32, #tpu.memory_space<smem>>
    %c19 = arith.constant 19 : index
    %24 = memref.load %arg2[%c19] : memref<27xf32, #tpu.memory_space<smem>>
    %c20 = arith.constant 20 : index
    %25 = memref.load %arg2[%c20] : memref<27xf32, #tpu.memory_space<smem>>
    %c21 = arith.constant 21 : index
    %26 = memref.load %arg2[%c21] : memref<27xf32, #tpu.memory_space<smem>>
    %c22 = arith.constant 22 : index
    %27 = memref.load %arg2[%c22] : memref<27xf32, #tpu.memory_space<smem>>
    %c23 = arith.constant 23 : index
    %28 = memref.load %arg2[%c23] : memref<27xf32, #tpu.memory_space<smem>>
    %c24 = arith.constant 24 : index
    %29 = memref.load %arg2[%c24] : memref<27xf32, #tpu.memory_space<smem>>
    %c25 = arith.constant 25 : index
    %30 = memref.load %arg2[%c25] : memref<27xf32, #tpu.memory_space<smem>>
    %c26 = arith.constant 26 : index
    %31 = memref.load %arg2[%c26] : memref<27xf32, #tpu.memory_space<smem>>
    %c0_2 = arith.constant 0 : index
    %c0_3 = arith.constant 0 : index
    %32 = vector.load %arg3[%c0_2, %c0_3] : memref<64x128xf32, #tpu.memory_space<vmem>>, vector<64x128xf32>
    %c0_4 = arith.constant 0 : index
    %c0_5 = arith.constant 0 : index
    %33 = vector.load %arg4[%c0_4, %c0_5] : memref<64x128xf32, #tpu.memory_space<vmem>>, vector<64x128xf32>
    %c0_6 = arith.constant 0 : index
    %c0_7 = arith.constant 0 : index
    %34 = vector.load %arg5[%c0_6, %c0_7] : memref<64x128xf32, #tpu.memory_space<vmem>>, vector<64x128xf32>
    %c0_8 = arith.constant 0 : index
    %c0_9 = arith.constant 0 : index
    %35 = vector.load %arg6[%c0_8, %c0_9] : memref<64x128xf32, #tpu.memory_space<vmem>>, vector<64x128xf32>
    %c0_10 = arith.constant 0 : index
    %c0_11 = arith.constant 0 : index
    %36 = vector.load %arg7[%c0_10, %c0_11] : memref<64x128xf32, #tpu.memory_space<vmem>>, vector<64x128xf32>
    %c0_12 = arith.constant 0 : index
    %c0_13 = arith.constant 0 : index
    %37 = vector.load %arg8[%c0_12, %c0_13] : memref<64x128xf32, #tpu.memory_space<vmem>>, vector<64x128xf32>
    %c0_14 = arith.constant 0 : index
    %c0_15 = arith.constant 0 : index
    %38 = vector.load %arg9[%c0_14, %c0_15] : memref<64x128xi32, #tpu.memory_space<vmem>>, vector<64x128xi32>
    %39 = math.absf %33 : vector<64x128xf32>
    %cst = arith.constant 0.000000e+00 : f32
    %40 = vector.broadcast %cst : f32 to vector<64x128xf32>
    %41 = arith.subf %40, %39 : vector<64x128xf32>
    %42 = math.exp %41 : vector<64x128xf32>
    %cst_16 = arith.constant 1.000000e+00 : f32
    %43 = vector.broadcast %cst_16 : f32 to vector<64x128xf32>
    %44 = arith.addf %43, %42 : vector<64x128xf32>
    %cst_17 = arith.constant 1.000000e+00 : f32
    %45 = vector.broadcast %cst_17 : f32 to vector<64x128xf32>
    %46 = arith.divf %45, %44 : vector<64x128xf32>
    %cst_18 = arith.constant 0.000000e+00 : f32
    %47 = vector.broadcast %cst_18 : f32 to vector<64x128xf32>
    %48 = arith.cmpf oge, %33, %47 : vector<64x128xf32>
    %49 = arith.mulf %42, %46 : vector<64x128xf32>
    %50 = arith.select %48, %46, %49 : vector<64x128xi1>, vector<64x128xf32>
    %cst_19 = arith.constant 0.000000e+00 : f32
    %51 = vector.broadcast %cst_19 : f32 to vector<64x128xf32>
    %52 = arith.maximumf %33, %51 : vector<64x128xf32>
    %cst_20 = arith.constant 1.000000e+00 : f32
    %53 = vector.broadcast %cst_20 : f32 to vector<64x128xf32>
    %54 = arith.addf %53, %42 : vector<64x128xf32>
    %55 = math.log %54 : vector<64x128xf32>
    %56 = arith.addf %52, %55 : vector<64x128xf32>
    %57 = arith.subf %56, %33 : vector<64x128xf32>
    %58 = arith.mulf %50, %57 : vector<64x128xf32>
    %cst_21 = arith.constant 1.000000e+00 : f32
    %59 = vector.broadcast %cst_21 : f32 to vector<64x128xf32>
    %60 = arith.subf %59, %50 : vector<64x128xf32>
    %61 = arith.mulf %60, %56 : vector<64x128xf32>
    %62 = arith.addf %58, %61 : vector<64x128xf32>
    %63 = math.absf %34 : vector<64x128xf32>
    %cst_22 = arith.constant 0.000000e+00 : f32
    %64 = vector.broadcast %cst_22 : f32 to vector<64x128xf32>
    %65 = arith.subf %64, %63 : vector<64x128xf32>
    %66 = math.exp %65 : vector<64x128xf32>
    %cst_23 = arith.constant 1.000000e+00 : f32
    %67 = vector.broadcast %cst_23 : f32 to vector<64x128xf32>
    %68 = arith.addf %67, %66 : vector<64x128xf32>
    %cst_24 = arith.constant 1.000000e+00 : f32
    %69 = vector.broadcast %cst_24 : f32 to vector<64x128xf32>
    %70 = arith.divf %69, %68 : vector<64x128xf32>
    %cst_25 = arith.constant 0.000000e+00 : f32
    %71 = vector.broadcast %cst_25 : f32 to vector<64x128xf32>
    %72 = arith.cmpf oge, %34, %71 : vector<64x128xf32>
    %73 = arith.mulf %66, %70 : vector<64x128xf32>
    %74 = arith.select %72, %70, %73 : vector<64x128xi1>, vector<64x128xf32>
    %cst_26 = arith.constant 0.000000e+00 : f32
    %75 = vector.broadcast %cst_26 : f32 to vector<64x128xf32>
    %76 = arith.maximumf %34, %75 : vector<64x128xf32>
    %cst_27 = arith.constant 1.000000e+00 : f32
    %77 = vector.broadcast %cst_27 : f32 to vector<64x128xf32>
    %78 = arith.addf %77, %66 : vector<64x128xf32>
    %79 = math.log %78 : vector<64x128xf32>
    %80 = arith.addf %76, %79 : vector<64x128xf32>
    %81 = arith.subf %80, %34 : vector<64x128xf32>
    %82 = arith.mulf %74, %81 : vector<64x128xf32>
    %cst_28 = arith.constant 1.000000e+00 : f32
    %83 = vector.broadcast %cst_28 : f32 to vector<64x128xf32>
    %84 = arith.subf %83, %74 : vector<64x128xf32>
    %85 = arith.mulf %84, %80 : vector<64x128xf32>
    %86 = arith.addf %82, %85 : vector<64x128xf32>
    %87 = math.absf %35 : vector<64x128xf32>
    %cst_29 = arith.constant 0.000000e+00 : f32
    %88 = vector.broadcast %cst_29 : f32 to vector<64x128xf32>
    %89 = arith.subf %88, %87 : vector<64x128xf32>
    %90 = math.exp %89 : vector<64x128xf32>
    %cst_30 = arith.constant 1.000000e+00 : f32
    %91 = vector.broadcast %cst_30 : f32 to vector<64x128xf32>
    %92 = arith.addf %91, %90 : vector<64x128xf32>
    %cst_31 = arith.constant 1.000000e+00 : f32
    %93 = vector.broadcast %cst_31 : f32 to vector<64x128xf32>
    %94 = arith.divf %93, %92 : vector<64x128xf32>
    %cst_32 = arith.constant 0.000000e+00 : f32
    %95 = vector.broadcast %cst_32 : f32 to vector<64x128xf32>
    %96 = arith.cmpf oge, %35, %95 : vector<64x128xf32>
    %97 = arith.mulf %90, %94 : vector<64x128xf32>
    %98 = arith.select %96, %94, %97 : vector<64x128xi1>, vector<64x128xf32>
    %cst_33 = arith.constant 0.000000e+00 : f32
    %99 = vector.broadcast %cst_33 : f32 to vector<64x128xf32>
    %100 = arith.maximumf %35, %99 : vector<64x128xf32>
    %cst_34 = arith.constant 1.000000e+00 : f32
    %101 = vector.broadcast %cst_34 : f32 to vector<64x128xf32>
    %102 = arith.addf %101, %90 : vector<64x128xf32>
    %103 = math.log %102 : vector<64x128xf32>
    %104 = arith.addf %100, %103 : vector<64x128xf32>
    %105 = arith.subf %104, %35 : vector<64x128xf32>
    %106 = arith.mulf %98, %105 : vector<64x128xf32>
    %cst_35 = arith.constant 1.000000e+00 : f32
    %107 = vector.broadcast %cst_35 : f32 to vector<64x128xf32>
    %108 = arith.subf %107, %98 : vector<64x128xf32>
    %109 = arith.mulf %108, %104 : vector<64x128xf32>
    %110 = arith.addf %106, %109 : vector<64x128xf32>
    %c1_i32 = arith.constant 1 : i32
    %111 = vector.broadcast %c1_i32 : i32 to vector<64x128xi32>
    %112 = arith.cmpi eq, %38, %111 : vector<64x128xi32>
    %c2_i32 = arith.constant 2 : i32
    %113 = vector.broadcast %c2_i32 : i32 to vector<64x128xi32>
    %114 = arith.cmpi eq, %38, %113 : vector<64x128xi32>
    %c3_i32 = arith.constant 3 : i32
    %115 = vector.broadcast %c3_i32 : i32 to vector<64x128xi32>
    %116 = arith.cmpi eq, %38, %115 : vector<64x128xi32>
    %c4_i32 = arith.constant 4 : i32
    %117 = vector.broadcast %c4_i32 : i32 to vector<64x128xi32>
    %118 = arith.cmpi eq, %38, %117 : vector<64x128xi32>
    %c5_i32 = arith.constant 5 : i32
    %119 = vector.broadcast %c5_i32 : i32 to vector<64x128xi32>
    %120 = arith.cmpi eq, %38, %119 : vector<64x128xi32>
    %c6_i32 = arith.constant 6 : i32
    %121 = vector.broadcast %c6_i32 : i32 to vector<64x128xi32>
    %122 = arith.cmpi eq, %38, %121 : vector<64x128xi32>
    %123 = arith.extui %116 : vector<64x128xi1> to vector<64x128xi32>
    %124 = arith.sitofp %123 : vector<64x128xi32> to vector<64x128xf32>
    %125 = arith.extui %118 : vector<64x128xi1> to vector<64x128xi32>
    %126 = arith.sitofp %125 : vector<64x128xi32> to vector<64x128xf32>
    %127 = arith.extui %120 : vector<64x128xi1> to vector<64x128xi32>
    %128 = arith.sitofp %127 : vector<64x128xi32> to vector<64x128xf32>
    %129 = arith.extui %122 : vector<64x128xi1> to vector<64x128xi32>
    %130 = arith.sitofp %129 : vector<64x128xi32> to vector<64x128xf32>
    %131 = arith.ori %116, %118 : vector<64x128xi1>
    %132 = arith.ori %131, %122 : vector<64x128xi1>
    %133 = arith.extui %132 : vector<64x128xi1> to vector<64x128xi32>
    %134 = arith.sitofp %133 : vector<64x128xi32> to vector<64x128xf32>
    %135 = arith.ori %112, %116 : vector<64x128xi1>
    %136 = arith.ori %135, %120 : vector<64x128xi1>
    %137 = arith.ori %136, %122 : vector<64x128xi1>
    %138 = arith.extui %137 : vector<64x128xi1> to vector<64x128xi32>
    %139 = arith.sitofp %138 : vector<64x128xi32> to vector<64x128xf32>
    %140 = arith.ori %114, %118 : vector<64x128xi1>
    %141 = arith.ori %140, %120 : vector<64x128xi1>
    %142 = arith.ori %141, %122 : vector<64x128xi1>
    %143 = arith.extui %142 : vector<64x128xi1> to vector<64x128xi32>
    %144 = arith.sitofp %143 : vector<64x128xi32> to vector<64x128xf32>
    %145 = arith.ori %120, %122 : vector<64x128xi1>
    %146 = arith.extui %145 : vector<64x128xi1> to vector<64x128xi32>
    %147 = arith.sitofp %146 : vector<64x128xi32> to vector<64x128xf32>
    %cst_36 = arith.constant 1.000000e+00 : f32
    %148 = vector.broadcast %cst_36 : f32 to vector<64x128xf32>
    %149 = arith.subf %148, %50 : vector<64x128xf32>
    %cst_37 = arith.constant 1.000000e+00 : f32
    %150 = vector.broadcast %cst_37 : f32 to vector<64x128xf32>
    %151 = arith.subf %150, %74 : vector<64x128xf32>
    %cst_38 = arith.constant 1.000000e+00 : f32
    %152 = vector.broadcast %cst_38 : f32 to vector<64x128xf32>
    %153 = arith.subf %152, %98 : vector<64x128xf32>
    %154 = arith.mulf %124, %50 : vector<64x128xf32>
    %155 = vector.broadcast %6 : f32 to vector<64x128xf32>
    %156 = arith.mulf %74, %155 : vector<64x128xf32>
    %157 = vector.broadcast %7 : f32 to vector<64x128xf32>
    %158 = arith.mulf %151, %157 : vector<64x128xf32>
    %159 = arith.addf %156, %158 : vector<64x128xf32>
    %160 = arith.mulf %154, %159 : vector<64x128xf32>
    %161 = arith.mulf %124, %149 : vector<64x128xf32>
    %162 = vector.broadcast %8 : f32 to vector<64x128xf32>
    %163 = arith.mulf %74, %162 : vector<64x128xf32>
    %164 = vector.broadcast %9 : f32 to vector<64x128xf32>
    %165 = arith.mulf %151, %164 : vector<64x128xf32>
    %166 = arith.addf %163, %165 : vector<64x128xf32>
    %167 = arith.mulf %161, %166 : vector<64x128xf32>
    %168 = arith.mulf %126, %50 : vector<64x128xf32>
    %169 = vector.broadcast %10 : f32 to vector<64x128xf32>
    %170 = arith.mulf %98, %169 : vector<64x128xf32>
    %171 = vector.broadcast %7 : f32 to vector<64x128xf32>
    %172 = arith.mulf %153, %171 : vector<64x128xf32>
    %173 = arith.addf %170, %172 : vector<64x128xf32>
    %174 = arith.mulf %168, %173 : vector<64x128xf32>
    %175 = arith.mulf %126, %149 : vector<64x128xf32>
    %176 = vector.broadcast %11 : f32 to vector<64x128xf32>
    %177 = arith.mulf %98, %176 : vector<64x128xf32>
    %178 = vector.broadcast %9 : f32 to vector<64x128xf32>
    %179 = arith.mulf %153, %178 : vector<64x128xf32>
    %180 = arith.addf %177, %179 : vector<64x128xf32>
    %181 = arith.mulf %175, %180 : vector<64x128xf32>
    %182 = arith.mulf %74, %98 : vector<64x128xf32>
    %183 = vector.broadcast %12 : f32 to vector<64x128xf32>
    %184 = arith.mulf %182, %183 : vector<64x128xf32>
    %185 = arith.mulf %74, %153 : vector<64x128xf32>
    %186 = vector.broadcast %6 : f32 to vector<64x128xf32>
    %187 = arith.mulf %185, %186 : vector<64x128xf32>
    %188 = arith.addf %184, %187 : vector<64x128xf32>
    %189 = arith.mulf %151, %98 : vector<64x128xf32>
    %190 = vector.broadcast %10 : f32 to vector<64x128xf32>
    %191 = arith.mulf %189, %190 : vector<64x128xf32>
    %192 = arith.addf %188, %191 : vector<64x128xf32>
    %193 = arith.mulf %151, %153 : vector<64x128xf32>
    %194 = vector.broadcast %7 : f32 to vector<64x128xf32>
    %195 = arith.mulf %193, %194 : vector<64x128xf32>
    %196 = arith.addf %192, %195 : vector<64x128xf32>
    %197 = arith.mulf %50, %196 : vector<64x128xf32>
    %198 = arith.mulf %74, %98 : vector<64x128xf32>
    %199 = vector.broadcast %13 : f32 to vector<64x128xf32>
    %200 = arith.mulf %198, %199 : vector<64x128xf32>
    %201 = arith.mulf %74, %153 : vector<64x128xf32>
    %202 = vector.broadcast %8 : f32 to vector<64x128xf32>
    %203 = arith.mulf %201, %202 : vector<64x128xf32>
    %204 = arith.addf %200, %203 : vector<64x128xf32>
    %205 = arith.mulf %151, %98 : vector<64x128xf32>
    %206 = vector.broadcast %11 : f32 to vector<64x128xf32>
    %207 = arith.mulf %205, %206 : vector<64x128xf32>
    %208 = arith.addf %204, %207 : vector<64x128xf32>
    %209 = arith.mulf %151, %153 : vector<64x128xf32>
    %210 = vector.broadcast %9 : f32 to vector<64x128xf32>
    %211 = arith.mulf %209, %210 : vector<64x128xf32>
    %212 = arith.addf %208, %211 : vector<64x128xf32>
    %213 = arith.mulf %149, %212 : vector<64x128xf32>
    %214 = arith.addf %197, %213 : vector<64x128xf32>
    %215 = arith.mulf %130, %214 : vector<64x128xf32>
    %216 = arith.mulf %134, %62 : vector<64x128xf32>
    %217 = arith.addf %160, %167 : vector<64x128xf32>
    %218 = arith.addf %217, %174 : vector<64x128xf32>
    %219 = arith.addf %218, %181 : vector<64x128xf32>
    %220 = arith.addf %219, %215 : vector<64x128xf32>
    %221 = arith.addf %220, %216 : vector<64x128xf32>
    %222 = vector.broadcast %15 : f32 to vector<64x128xf32>
    %223 = arith.mulf %222, %36 : vector<64x128xf32>
    %224 = vector.broadcast %14 : f32 to vector<64x128xf32>
    %225 = arith.addf %224, %223 : vector<64x128xf32>
    %226 = vector.broadcast %16 : f32 to vector<64x128xf32>
    %227 = arith.subf %226, %225 : vector<64x128xf32>
    %cst_39 = arith.constant 0.000000e+00 : f32
    %228 = vector.broadcast %cst_39 : f32 to vector<64x128xf32>
    %229 = arith.maximumf %227, %228 : vector<64x128xf32>
    %230 = math.absf %227 : vector<64x128xf32>
    %cst_40 = arith.constant 0.000000e+00 : f32
    %231 = vector.broadcast %cst_40 : f32 to vector<64x128xf32>
    %232 = arith.subf %231, %230 : vector<64x128xf32>
    %233 = math.exp %232 : vector<64x128xf32>
    %cst_41 = arith.constant 1.000000e+00 : f32
    %234 = vector.broadcast %cst_41 : f32 to vector<64x128xf32>
    %235 = arith.addf %234, %233 : vector<64x128xf32>
    %236 = math.log %235 : vector<64x128xf32>
    %237 = arith.addf %229, %236 : vector<64x128xf32>
    %cst_42 = arith.constant 0.000000e+00 : f32
    %238 = vector.broadcast %cst_42 : f32 to vector<64x128xf32>
    %239 = arith.subf %238, %237 : vector<64x128xf32>
    %240 = arith.mulf %74, %239 : vector<64x128xf32>
    %241 = vector.broadcast %16 : f32 to vector<64x128xf32>
    %242 = arith.addf %241, %225 : vector<64x128xf32>
    %cst_43 = arith.constant 0.000000e+00 : f32
    %243 = vector.broadcast %cst_43 : f32 to vector<64x128xf32>
    %244 = arith.maximumf %242, %243 : vector<64x128xf32>
    %245 = math.absf %242 : vector<64x128xf32>
    %cst_44 = arith.constant 0.000000e+00 : f32
    %246 = vector.broadcast %cst_44 : f32 to vector<64x128xf32>
    %247 = arith.subf %246, %245 : vector<64x128xf32>
    %248 = math.exp %247 : vector<64x128xf32>
    %cst_45 = arith.constant 1.000000e+00 : f32
    %249 = vector.broadcast %cst_45 : f32 to vector<64x128xf32>
    %250 = arith.addf %249, %248 : vector<64x128xf32>
    %251 = math.log %250 : vector<64x128xf32>
    %252 = arith.addf %244, %251 : vector<64x128xf32>
    %cst_46 = arith.constant 0.000000e+00 : f32
    %253 = vector.broadcast %cst_46 : f32 to vector<64x128xf32>
    %254 = arith.subf %253, %252 : vector<64x128xf32>
    %255 = arith.mulf %151, %254 : vector<64x128xf32>
    %256 = arith.addf %240, %255 : vector<64x128xf32>
    %257 = arith.addf %256, %86 : vector<64x128xf32>
    %258 = arith.mulf %139, %257 : vector<64x128xf32>
    %259 = vector.broadcast %18 : f32 to vector<64x128xf32>
    %260 = arith.mulf %259, %37 : vector<64x128xf32>
    %261 = vector.broadcast %17 : f32 to vector<64x128xf32>
    %262 = arith.addf %261, %260 : vector<64x128xf32>
    %263 = vector.broadcast %19 : f32 to vector<64x128xf32>
    %264 = arith.subf %263, %262 : vector<64x128xf32>
    %cst_47 = arith.constant 0.000000e+00 : f32
    %265 = vector.broadcast %cst_47 : f32 to vector<64x128xf32>
    %266 = arith.maximumf %264, %265 : vector<64x128xf32>
    %267 = math.absf %264 : vector<64x128xf32>
    %cst_48 = arith.constant 0.000000e+00 : f32
    %268 = vector.broadcast %cst_48 : f32 to vector<64x128xf32>
    %269 = arith.subf %268, %267 : vector<64x128xf32>
    %270 = math.exp %269 : vector<64x128xf32>
    %cst_49 = arith.constant 1.000000e+00 : f32
    %271 = vector.broadcast %cst_49 : f32 to vector<64x128xf32>
    %272 = arith.addf %271, %270 : vector<64x128xf32>
    %273 = math.log %272 : vector<64x128xf32>
    %274 = arith.addf %266, %273 : vector<64x128xf32>
    %cst_50 = arith.constant 0.000000e+00 : f32
    %275 = vector.broadcast %cst_50 : f32 to vector<64x128xf32>
    %276 = arith.subf %275, %274 : vector<64x128xf32>
    %277 = arith.mulf %98, %276 : vector<64x128xf32>
    %278 = vector.broadcast %19 : f32 to vector<64x128xf32>
    %279 = arith.addf %278, %262 : vector<64x128xf32>
    %cst_51 = arith.constant 0.000000e+00 : f32
    %280 = vector.broadcast %cst_51 : f32 to vector<64x128xf32>
    %281 = arith.maximumf %279, %280 : vector<64x128xf32>
    %282 = math.absf %279 : vector<64x128xf32>
    %cst_52 = arith.constant 0.000000e+00 : f32
    %283 = vector.broadcast %cst_52 : f32 to vector<64x128xf32>
    %284 = arith.subf %283, %282 : vector<64x128xf32>
    %285 = math.exp %284 : vector<64x128xf32>
    %cst_53 = arith.constant 1.000000e+00 : f32
    %286 = vector.broadcast %cst_53 : f32 to vector<64x128xf32>
    %287 = arith.addf %286, %285 : vector<64x128xf32>
    %288 = math.log %287 : vector<64x128xf32>
    %289 = arith.addf %281, %288 : vector<64x128xf32>
    %cst_54 = arith.constant 0.000000e+00 : f32
    %290 = vector.broadcast %cst_54 : f32 to vector<64x128xf32>
    %291 = arith.subf %290, %289 : vector<64x128xf32>
    %292 = arith.mulf %153, %291 : vector<64x128xf32>
    %293 = arith.addf %277, %292 : vector<64x128xf32>
    %294 = arith.addf %293, %110 : vector<64x128xf32>
    %295 = arith.mulf %144, %294 : vector<64x128xf32>
    %cst_55 = arith.constant 9.99999997E-7 : f32
    %296 = vector.broadcast %cst_55 : f32 to vector<64x128xf32>
    %297 = arith.addf %296, %32 : vector<64x128xf32>
    %298 = math.log %297 : vector<64x128xf32>
    %299 = vector.broadcast %5 : f32 to vector<64x128xf32>
    %300 = arith.subf %298, %299 : vector<64x128xf32>
    %301 = arith.mulf %300, %300 : vector<64x128xf32>
    %302 = vector.broadcast %21 : f32 to vector<64x128xf32>
    %303 = arith.mulf %301, %302 : vector<64x128xf32>
    %304 = vector.broadcast %20 : f32 to vector<64x128xf32>
    %305 = arith.addf %304, %303 : vector<64x128xf32>
    %cst_56 = arith.constant 0.000000e+00 : f32
    %306 = vector.broadcast %cst_56 : f32 to vector<64x128xf32>
    %307 = arith.subf %306, %305 : vector<64x128xf32>
    %308 = vector.broadcast %22 : f32 to vector<64x128xf32>
    %309 = arith.mulf %308, %134 : vector<64x128xf32>
    %310 = vector.broadcast %24 : f32 to vector<64x128xf32>
    %311 = arith.mulf %309, %310 : vector<64x128xf32>
    %312 = arith.mulf %311, %50 : vector<64x128xf32>
    %cst_57 = arith.constant 2.000000e+00 : f32
    %313 = vector.broadcast %cst_57 : f32 to vector<64x128xf32>
    %314 = arith.mulf %313, %300 : vector<64x128xf32>
    %315 = vector.broadcast %24 : f32 to vector<64x128xf32>
    %316 = arith.subf %315, %314 : vector<64x128xf32>
    %317 = arith.mulf %312, %316 : vector<64x128xf32>
    %318 = arith.subf %307, %317 : vector<64x128xf32>
    %319 = vector.broadcast %22 : f32 to vector<64x128xf32>
    %320 = arith.mulf %319, %139 : vector<64x128xf32>
    %321 = vector.broadcast %25 : f32 to vector<64x128xf32>
    %322 = arith.mulf %320, %321 : vector<64x128xf32>
    %323 = arith.mulf %322, %74 : vector<64x128xf32>
    %cst_58 = arith.constant 2.000000e+00 : f32
    %324 = vector.broadcast %cst_58 : f32 to vector<64x128xf32>
    %325 = arith.mulf %324, %300 : vector<64x128xf32>
    %326 = vector.broadcast %25 : f32 to vector<64x128xf32>
    %327 = arith.subf %326, %325 : vector<64x128xf32>
    %328 = arith.mulf %323, %327 : vector<64x128xf32>
    %329 = arith.subf %318, %328 : vector<64x128xf32>
    %330 = vector.broadcast %22 : f32 to vector<64x128xf32>
    %331 = arith.mulf %330, %144 : vector<64x128xf32>
    %332 = vector.broadcast %26 : f32 to vector<64x128xf32>
    %333 = arith.mulf %331, %332 : vector<64x128xf32>
    %334 = arith.mulf %333, %98 : vector<64x128xf32>
    %cst_59 = arith.constant 2.000000e+00 : f32
    %335 = vector.broadcast %cst_59 : f32 to vector<64x128xf32>
    %336 = arith.mulf %335, %300 : vector<64x128xf32>
    %337 = vector.broadcast %26 : f32 to vector<64x128xf32>
    %338 = arith.subf %337, %336 : vector<64x128xf32>
    %339 = arith.mulf %334, %338 : vector<64x128xf32>
    %340 = arith.subf %329, %339 : vector<64x128xf32>
    %341 = vector.broadcast %27 : f32 to vector<64x128xf32>
    %342 = arith.mulf %124, %341 : vector<64x128xf32>
    %343 = arith.mulf %342, %50 : vector<64x128xf32>
    %344 = arith.mulf %343, %74 : vector<64x128xf32>
    %345 = vector.broadcast %28 : f32 to vector<64x128xf32>
    %346 = arith.mulf %126, %345 : vector<64x128xf32>
    %347 = arith.mulf %346, %50 : vector<64x128xf32>
    %348 = arith.mulf %347, %98 : vector<64x128xf32>
    %349 = arith.addf %344, %348 : vector<64x128xf32>
    %350 = vector.broadcast %29 : f32 to vector<64x128xf32>
    %351 = arith.mulf %128, %350 : vector<64x128xf32>
    %352 = arith.mulf %351, %74 : vector<64x128xf32>
    %353 = arith.mulf %352, %98 : vector<64x128xf32>
    %354 = arith.addf %349, %353 : vector<64x128xf32>
    %355 = vector.broadcast %30 : f32 to vector<64x128xf32>
    %356 = arith.mulf %130, %355 : vector<64x128xf32>
    %357 = arith.mulf %356, %50 : vector<64x128xf32>
    %358 = arith.mulf %357, %74 : vector<64x128xf32>
    %359 = arith.mulf %358, %98 : vector<64x128xf32>
    %360 = arith.addf %354, %359 : vector<64x128xf32>
    %361 = vector.broadcast %23 : f32 to vector<64x128xf32>
    %362 = arith.mulf %361, %360 : vector<64x128xf32>
    %363 = arith.subf %340, %362 : vector<64x128xf32>
    %364 = arith.subf %363, %298 : vector<64x128xf32>
    %cst_60 = arith.constant 9.99999997E-7 : f32
    %cst_61 = arith.constant 0.999998986 : f32
    %365 = vector.broadcast %cst_60 : f32 to vector<64x128xf32>
    %366 = arith.maximumf %365, %74 : vector<64x128xf32>
    %367 = vector.broadcast %cst_61 : f32 to vector<64x128xf32>
    %368 = arith.minimumf %367, %366 : vector<64x128xf32>
    %cst_62 = arith.constant 9.99999997E-7 : f32
    %cst_63 = arith.constant 0.999998986 : f32
    %369 = vector.broadcast %cst_62 : f32 to vector<64x128xf32>
    %370 = arith.maximumf %369, %98 : vector<64x128xf32>
    %371 = vector.broadcast %cst_63 : f32 to vector<64x128xf32>
    %372 = arith.minimumf %371, %370 : vector<64x128xf32>
    %cst_64 = arith.constant 0.000000e+00 : f32
    %373 = vector.broadcast %cst_64 : f32 to vector<64x128xf32>
    %374 = arith.subf %373, %147 : vector<64x128xf32>
    %375 = arith.mulf %368, %372 : vector<64x128xf32>
    %376 = arith.mulf %374, %375 : vector<64x128xf32>
    %377 = vector.broadcast %31 : f32 to vector<64x128xf32>
    %378 = arith.mulf %376, %377 : vector<64x128xf32>
    %cst_65 = arith.constant -1.000000e+02 : f32
    %379 = vector.broadcast %cst_65 : f32 to vector<64x128xf32>
    %380 = arith.maximumf %378, %379 : vector<64x128xf32>
    %381 = arith.addf %221, %258 : vector<64x128xf32>
    %382 = arith.addf %381, %295 : vector<64x128xf32>
    %383 = arith.addf %382, %364 : vector<64x128xf32>
    %384 = arith.addf %383, %380 : vector<64x128xf32>
    %c0_66 = arith.constant 0 : index
    %c0_67 = arith.constant 0 : index
    %385 = vector.load %arg11[%c0_66, %c0_67] : memref<64x128xf32, #tpu.memory_space<vmem>>, vector<64x128xf32>
    %cst_68 = arith.constant 0.000000e+00 : f32
    %386 = vector.broadcast %cst_68 : f32 to vector<64x128xf32>
    %387 = arith.subf %386, %384 : vector<64x128xf32>
    %388 = arith.addf %385, %387 : vector<64x128xf32>
    %c0_69 = arith.constant 0 : index
    %c0_70 = arith.constant 0 : index
    %389 = vector.load %arg11[%c0_69, %c0_70] : memref<64x128xf32, #tpu.memory_space<vmem>>, vector<64x128xf32>
    tpu.vector_store %arg11[%c0_69, %c0_70], %388 {strides = array<i32>} : memref<64x128xf32, #tpu.memory_space<vmem>>, vector<64x128xf32>,
    %c3_i32_71 = arith.constant 3 : i32
    %390 = arith.cmpi eq, %arg0, %c3_i32_71 : i32
    %c3_i32_72 = arith.constant 3 : i32
    %391 = arith.cmpi eq, %arg1, %c3_i32_72 : i32
    %392 = arith.andi %390, %391 : i1
    %393 = arith.extui %392 : i1 to i32
    %c0_i32_73 = arith.constant 0 : i32
    %394 = arith.cmpi ne, %393, %c0_i32_73 : i32
    scf.if %394 {
      %c0_74 = arith.constant 0 : index
      %c0_75 = arith.constant 0 : index
      %395 = vector.load %arg11[%c0_74, %c0_75] : memref<64x128xf32, #tpu.memory_space<vmem>>, vector<64x128xf32>
      %396 = vector.shape_cast %395 : vector<64x128xf32> to vector<1x64x128xf32>
      %cst_76 = arith.constant dense<0.000000e+00> : vector<1xf32>
      %397 = vector.multi_reduction <add>, %396, %cst_76 [1, 2] : vector<1x64x128xf32> to vector<1xf32>
      %398 = vector.shape_cast %397 : vector<1xf32> to vector<1x1x1xf32>
      %399 = vector.extract %398[0, 0, 0] : f32 from vector<1x1x1xf32>
      %c0_77 = arith.constant 0 : index
      %c0_78 = arith.constant 0 : index
      %400 = memref.load %arg10[%c0_77, %c0_78] : memref<1x1xf32, #tpu.memory_space<smem>>
      memref.store %399, %arg10[%c0_77, %c0_78] : memref<1x1xf32, #tpu.memory_space<smem>>
    } else {
    }
    return
  }
  func.func @transform_0(%arg0: i32, %arg1: i32) -> i32 {
    %c0_i32 = arith.constant 0 : i32
    %c0_i32_0 = arith.constant 0 : i32
    return %c0_i32 : i32
  }
  func.func @transform_1(%arg0: i32, %arg1: i32) -> (i32, i32) {
    %c0_i32 = arith.constant 0 : i32
    return %arg0, %arg1 : i32, i32
  }
  func.func @transform_2(%arg0: i32, %arg1: i32) -> (i32, i32) {
    %c0_i32 = arith.constant 0 : i32
    return %arg0, %arg1 : i32, i32
  }
  func.func @transform_3(%arg0: i32, %arg1: i32) -> (i32, i32) {
    %c0_i32 = arith.constant 0 : i32
    return %arg0, %arg1 : i32, i32
  }
  func.func @transform_4(%arg0: i32, %arg1: i32) -> (i32, i32) {
    %c0_i32 = arith.constant 0 : i32
    return %arg0, %arg1 : i32, i32
  }
  func.func @transform_5(%arg0: i32, %arg1: i32) -> (i32, i32) {
    %c0_i32 = arith.constant 0 : i32
    return %arg0, %arg1 : i32, i32
  }
  func.func @transform_6(%arg0: i32, %arg1: i32) -> (i32, i32) {
    %c0_i32 = arith.constant 0 : i32
    return %arg0, %arg1 : i32, i32
  }
  func.func @transform_7(%arg0: i32, %arg1: i32) -> (i32, i32) {
    %c0_i32 = arith.constant 0 : i32
    return %arg0, %arg1 : i32, i32
  }
  func.func @transform_8(%arg0: i32, %arg1: i32) -> (i32, i32) {
    %c0_i32 = arith.constant 0 : i32
    %c0_i32_0 = arith.constant 0 : i32
    %c0_i32_1 = arith.constant 0 : i32
    return %c0_i32, %c0_i32_0 : i32, i32
  }
}

</mosaic_0001>

<llo_original>
// kernel: tpu_custom_call.1
$region0: #{tpu_custom_call.1}
  #allocation0 [shape = 'u32[]', space=smem, size = 0x4, offset = 0x4, fixed_abs, tag = 'smem constant byte address 0x4 - core index']
  #allocation1 [shape = 'u32[72,128]{1,0:T(1,128)}', space=vmem, size = 0x9000, scoped, tag = 'internal scratch']
  #allocation2 [shape = 'f32[64,128]{1,0:T(8,128)}', space=vmem, size = 0x8000, scoped, tag = 'scratch operand']
  %s0 = inlined_call_operand.hbm [shape: f32[27], index: 0, kind: input, shape index: {}]
  %s1 = inlined_call_operand.hbm [shape: f32[256,512], index: 1, kind: input, shape index: {}]
  %s2 = inlined_call_operand.hbm [shape: f32[256,512], index: 2, kind: input, shape index: {}]
  %s3 = inlined_call_operand.hbm [shape: f32[256,512], index: 3, kind: input, shape index: {}]
  %s4 = inlined_call_operand.hbm [shape: f32[256,512], index: 4, kind: input, shape index: {}]
  %s5 = inlined_call_operand.hbm [shape: f32[256,512], index: 5, kind: input, shape index: {}]
  %s6 = inlined_call_operand.hbm [shape: f32[256,512], index: 6, kind: input, shape index: {}]
  %s7 = inlined_call_operand.hbm [shape: s32[256,512], index: 7, kind: input, shape index: {}]
  %s8 = inlined_call_operand.hbm [shape: f32[1,1], index: 8, kind: output, shape index: {}]
  %s9 = sld [smem:[#allocation0]]
  $region105: #{tpu_custom_call.1} parent=0
    _
  %s11 = ssub.s32 1, %s9
  %s12 = scalar_select 0, %s11, %s9
  $region1: #{tpu_custom_call.1} parent=0
    #allocation3 [shape = 'u8[512]{0}', space=smem, size = 0x200, scoped, tag = 'input window, operand 0, single buffered']
    #allocation4 [shape = 's32[2]{0}', space=sflag, size = 0x8, scoped, tag = 'scoped memory for tpu_custom_call.1']
    #allocation5 [shape = 's32[2]{0}', space=sflag, size = 0x8, scoped, tag = 'scoped memory for tpu_custom_call.1']
    #allocation6 [shape = 's32[2]{0}', space=sflag, size = 0x8, scoped, tag = 'scoped memory for tpu_custom_call.1']
    #allocation7 [shape = 'u8[65536]{0}', space=vmem, size = 0x10000, scoped, tag = 'input window, operand 1']
    #allocation8 [shape = 'u8[65536]{0}', space=vmem, size = 0x10000, scoped, tag = 'input window, operand 2']
    #allocation9 [shape = 's32[2]{0}', space=sflag, size = 0x8, scoped, tag = 'scoped memory for tpu_custom_call.1']
    #allocation10 [shape = 'u8[65536]{0}', space=vmem, size = 0x10000, scoped, tag = 'input window, operand 3']
    #allocation11 [shape = 'u8[65536]{0}', space=vmem, size = 0x10000, scoped, tag = 'input window, operand 4']
    #allocation12 [shape = 's32[2]{0}', space=sflag, size = 0x8, scoped, tag = 'scoped memory for tpu_custom_call.1']
    #allocation13 [shape = 'u8[65536]{0}', space=vmem, size = 0x10000, scoped, tag = 'input window, operand 5']
    #allocation14 [shape = 'u8[65536]{0}', space=vmem, size = 0x10000, scoped, tag = 'input window, operand 6']
    #allocation15 [shape = 's32[2]{0}', space=sflag, size = 0x8, scoped, tag = 'scoped memory for tpu_custom_call.1']
    #allocation16 [shape = 'u8[65536]{0}', space=vmem, size = 0x10000, scoped, tag = 'input window, operand 7']
    #allocation17 [shape = 'u8[512]{0}', space=smem, size = 0x200, scoped, tag = 'output window, operand 0, single buffered']
    %13 = vsyncpa [#allocation5], 0
    %14 = vsyncpa [#allocation4], 0
    %s15 = scalar_lea.sflag [#allocation4], 1
    %16 = vsyncpa %s15, 0
    %17 = vsyncpa [#allocation9], 0
    %s18 = scalar_lea.sflag [#allocation9], 1
    %19 = vsyncpa %s18, 0
    %20 = vsyncpa [#allocation12], 0
    %s21 = scalar_lea.sflag [#allocation12], 1
    %22 = vsyncpa %s21, 0
    %23 = vsyncpa [#allocation15], 0
    %s24 = scalar_lea.sflag [#allocation15], 1
    %25 = vsyncpa %s24, 0
    %26 = vsyncpa [#allocation6], 0
    loop: start=0, step=1, limit=18
    $region2: #{tpu_custom_call.1} parent=1 // loop_pre_header
      _
    $region3: #{tpu_custom_call.1} parent=1 // loop_header
      %s28 = sphi 0, %s32
      %p29 = scmp.ge.s32.totalorder %s28, 18
      %s35 = sphi 0, %s47
      %s36 = sphi 0, %s43
      %s37 = sphi 0, %s35
      %s38 = sphi 0, %s36
      %s39 = sphi 0, %s37
      %s40 = sphi 0, %s38
      %s48 = sphi 0, %s48
      %s50 = sphi 0, %s48
      %s51 = sphi 0, %s50
      %s65 = sphi 0, %s51
      %s73 = sphi 0, %s75
      %s76 = sphi 0, %s73
      %s77 = sphi 0, %s76
      %s93 = sphi 0, %s77
      %s101 = sphi 0, %s103
      %s104 = sphi 0, %s101
      %s105 = sphi 0, %s104
      %s121 = sphi 0, %s105
      %s129 = sphi 0, %s131
      %s132 = sphi 0, %s129
      %s133 = sphi 0, %s132
      %s149 = sphi 0, %s133
      %s157 = sphi 0, %s159
      %s160 = sphi 0, %s157
      %s161 = sphi 0, %s160
      %s177 = sphi 0, %s161
      %s185 = sphi 0, %s187
      %s188 = sphi 0, %s185
      %s189 = sphi 0, %s188
      %s205 = sphi 0, %s189
      %s213 = sphi 0, %s215
      %s216 = sphi 0, %s213
      %s217 = sphi 0, %s216
      %s233 = sphi 0, %s217
      %s241 = sphi 0, %s243
      %s244 = sphi 0, %s241
      %s245 = sphi 0, %s244
      %s261 = sphi 0, %s245
      %s265 = sphi 0, %s265
      %s267 = sphi 0, %s265
      %s268 = sphi 0, %s267
      %s282 = sphi 0, %s268
    $region4: #{tpu_custom_call.1} parent=1 // loop_header_branch
      %31 = sbr.rel (%p29) target = $region8
    $region5: #{tpu_custom_call.1} parent=1 // loop_body
      %s33 = ssub.s32 %s28, 1
      %s34 = ssub.s32 %s28, 2
      %s41 = sadd.s32 1, %s36
      %p42 = scmp.ge.s32.totalorder %s41, 4
      %s43 = scalar_select %p42, 0, %s41
      %s44 = sadd.s32 1, %s35
      %s45 = scalar_select %p42, %s44, %s35
      %p46 = scmp.ge.s32.totalorder %s45, 4
      %s47 = scalar_select %p46, 0, %s45
      %s49 = sadd.s32 %s48, 1
      %p52 = scmp.eq.s32.totalorder %s28, 15
      %p53 = scmp.ne.s32.totalorder %s48, %s50
      %p54 = scmp.eq.s32.totalorder %s28, 0
      %p55 = por %p53, %p54
      %p56 = scmp.ne.s32.totalorder %s48, %s50
      %p57 = scmp.eq.s32.totalorder %s33, 15
      %p58 = por %p56, %p57
      %p59 = scmp.ne.s32.totalorder %s50, %s51
      %p60 = scmp.eq.s32.totalorder %s33, 0
      %p61 = por %p59, %p60
      %p62 = scmp.ne.s32.totalorder %s50, %s51
      %p63 = scmp.eq.s32.totalorder %s34, 15
      %p64 = por %p62, %p63
      %p66 = scmp.ne.s32.totalorder %s51, %s65
      %p67 = scmp.eq.s32.totalorder %s34, 0
      %p68 = por %p66, %p67
      %s69 = ssub.s32 %s35, %s47
      %s70 = ssub.s32 %s36, %s43
      %s71 = sor.u32 %s69, %s70
      %p72 = scmp.eq.s32.totalorder %s71, 0
      %s74 = sadd.s32 %s73, 1
      %s75 = scalar_select %p72, %s73, %s74
      %p78 = pneg %p72
      %p79 = scmp.eq.s32.totalorder %s28, 15
      %p80 = por %p78, %p79
      %p81 = scmp.ne.s32.totalorder %s73, %s76
      %p82 = scmp.eq.s32.totalorder %s28, 0
      %p83 = por %p81, %p82
      %p84 = scmp.ne.s32.totalorder %s73, %s76
      %p85 = scmp.eq.s32.totalorder %s33, 15
      %p86 = por %p84, %p85
      %p87 = scmp.ne.s32.totalorder %s76, %s77
      %p88 = scmp.eq.s32.totalorder %s33, 0
      %p89 = por %p87, %p88
      %p90 = scmp.ne.s32.totalorder %s76, %s77
      %p91 = scmp.eq.s32.totalorder %s34, 15
      %p92 = por %p90, %p91
      %p94 = scmp.ne.s32.totalorder %s77, %s93
      %p95 = scmp.eq.s32.totalorder %s34, 0
      %p96 = por %p94, %p95
      %s97 = ssub.s32 %s35, %s47
      %s98 = ssub.s32 %s36, %s43
      %s99 = sor.u32 %s97, %s98
      %p100 = scmp.eq.s32.totalorder %s99, 0
      %s102 = sadd.s32 %s101, 1
      %s103 = scalar_select %p100, %s101, %s102
      %p106 = pneg %p100
      %p107 = scmp.eq.s32.totalorder %s28, 15
      %p108 = por %p106, %p107
      %p109 = scmp.ne.s32.totalorder %s101, %s104
      %p110 = scmp.eq.s32.totalorder %s28, 0
      %p111 = por %p109, %p110
      %p112 = scmp.ne.s32.totalorder %s101, %s104
      %p113 = scmp.eq.s32.totalorder %s33, 15
      %p114 = por %p112, %p113
      %p115 = scmp.ne.s32.totalorder %s104, %s105
      %p116 = scmp.eq.s32.totalorder %s33, 0
      %p117 = por %p115, %p116
      %p118 = scmp.ne.s32.totalorder %s104, %s105
      %p119 = scmp.eq.s32.totalorder %s34, 15
      %p120 = por %p118, %p119
      %p122 = scmp.ne.s32.totalorder %s105, %s121
      %p123 = scmp.eq.s32.totalorder %s34, 0
      %p124 = por %p122, %p123
      %s125 = ssub.s32 %s35, %s47
      %s126 = ssub.s32 %s36, %s43
      %s127 = sor.u32 %s125, %s126
      %p128 = scmp.eq.s32.totalorder %s127, 0
      %s130 = sadd.s32 %s129, 1
      %s131 = scalar_select %p128, %s129, %s130
      %p134 = pneg %p128
      %p135 = scmp.eq.s32.totalorder %s28, 15
      %p136 = por %p134, %p135
      %p137 = scmp.ne.s32.totalorder %s129, %s132
      %p138 = scmp.eq.s32.totalorder %s28, 0
      %p139 = por %p137, %p138
      %p140 = scmp.ne.s32.totalorder %s129, %s132
      %p141 = scmp.eq.s32.totalorder %s33, 15
      %p142 = por %p140, %p141
      %p143 = scmp.ne.s32.totalorder %s132, %s133
      %p144 = scmp.eq.s32.totalorder %s33, 0
      %p145 = por %p143, %p144
      %p146 = scmp.ne.s32.totalorder %s132, %s133
      %p147 = scmp.eq.s32.totalorder %s34, 15
      %p148 = por %p146, %p147
      %p150 = scmp.ne.s32.totalorder %s133, %s149
      %p151 = scmp.eq.s32.totalorder %s34, 0
      %p152 = por %p150, %p151
      %s153 = ssub.s32 %s35, %s47
      %s154 = ssub.s32 %s36, %s43
      %s155 = sor.u32 %s153, %s154
      %p156 = scmp.eq.s32.totalorder %s155, 0
      %s158 = sadd.s32 %s157, 1
      %s159 = scalar_select %p156, %s157, %s158
      %p162 = pneg %p156
      %p163 = scmp.eq.s32.totalorder %s28, 15
      %p164 = por %p162, %p163
      %p165 = scmp.ne.s32.totalorder %s157, %s160
      %p166 = scmp.eq.s32.totalorder %s28, 0
      %p167 = por %p165, %p166
      %p168 = scmp.ne.s32.totalorder %s157, %s160
      %p169 = scmp.eq.s32.totalorder %s33, 15
      %p170 = por %p168, %p169
      %p171 = scmp.ne.s32.totalorder %s160, %s161
      %p172 = scmp.eq.s32.totalorder %s33, 0
      %p173 = por %p171, %p172
      %p174 = scmp.ne.s32.totalorder %s160, %s161
      %p175 = scmp.eq.s32.totalorder %s34, 15
      %p176 = por %p174, %p175
      %p178 = scmp.ne.s32.totalorder %s161, %s177
      %p179 = scmp.eq.s32.totalorder %s34, 0
      %p180 = por %p178, %p179
      %s181 = ssub.s32 %s35, %s47
      %s182 = ssub.s32 %s36, %s43
      %s183 = sor.u32 %s181, %s182
      %p184 = scmp.eq.s32.totalorder %s183, 0
      %s186 = sadd.s32 %s185, 1
      %s187 = scalar_select %p184, %s185, %s186
      %p190 = pneg %p184
      %p191 = scmp.eq.s32.totalorder %s28, 15
      %p192 = por %p190, %p191
      %p193 = scmp.ne.s32.totalorder %s185, %s188
      %p194 = scmp.eq.s32.totalorder %s28, 0
      %p195 = por %p193, %p194
      %p196 = scmp.ne.s32.totalorder %s185, %s188
      %p197 = scmp.eq.s32.totalorder %s33, 15
      %p198 = por %p196, %p197
      %p199 = scmp.ne.s32.totalorder %s188, %s189
      %p200 = scmp.eq.s32.totalorder %s33, 0
      %p201 = por %p199, %p200
      %p202 = scmp.ne.s32.totalorder %s188, %s189
      %p203 = scmp.eq.s32.totalorder %s34, 15
      %p204 = por %p202, %p203
      %p206 = scmp.ne.s32.totalorder %s189, %s205
      %p207 = scmp.eq.s32.totalorder %s34, 0
      %p208 = por %p206, %p207
      %s209 = ssub.s32 %s35, %s47
      %s210 = ssub.s32 %s36, %s43
      %s211 = sor.u32 %s209, %s210
      %p212 = scmp.eq.s32.totalorder %s211, 0
      %s214 = sadd.s32 %s213, 1
      %s215 = scalar_select %p212, %s213, %s214
      %p218 = pneg %p212
      %p219 = scmp.eq.s32.totalorder %s28, 15
      %p220 = por %p218, %p219
      %p221 = scmp.ne.s32.totalorder %s213, %s216
      %p222 = scmp.eq.s32.totalorder %s28, 0
      %p223 = por %p221, %p222
      %p224 = scmp.ne.s32.totalorder %s213, %s216
      %p225 = scmp.eq.s32.totalorder %s33, 15
      %p226 = por %p224, %p225
      %p227 = scmp.ne.s32.totalorder %s216, %s217
      %p228 = scmp.eq.s32.totalorder %s33, 0
      %p229 = por %p227, %p228
      %p230 = scmp.ne.s32.totalorder %s216, %s217
      %p231 = scmp.eq.s32.totalorder %s34, 15
      %p232 = por %p230, %p231
      %p234 = scmp.ne.s32.totalorder %s217, %s233
      %p235 = scmp.eq.s32.totalorder %s34, 0
      %p236 = por %p234, %p235
      %s237 = ssub.s32 %s35, %s47
      %s238 = ssub.s32 %s36, %s43
      %s239 = sor.u32 %s237, %s238
      %p240 = scmp.eq.s32.totalorder %s239, 0
      %s242 = sadd.s32 %s241, 1
      %s243 = scalar_select %p240, %s241, %s242
      %p246 = pneg %p240
      %p247 = scmp.eq.s32.totalorder %s28, 15
      %p248 = por %p246, %p247
      %p249 = scmp.ne.s32.totalorder %s241, %s244
      %p250 = scmp.eq.s32.totalorder %s28, 0
      %p251 = por %p249, %p250
      %p252 = scmp.ne.s32.totalorder %s241, %s244
      %p253 = scmp.eq.s32.totalorder %s33, 15
      %p254 = por %p252, %p253
      %p255 = scmp.ne.s32.totalorder %s244, %s245
      %p256 = scmp.eq.s32.totalorder %s33, 0
      %p257 = por %p255, %p256
      %p258 = scmp.ne.s32.totalorder %s244, %s245
      %p259 = scmp.eq.s32.totalorder %s34, 15
      %p260 = por %p258, %p259
      %p262 = scmp.ne.s32.totalorder %s245, %s261
      %p263 = scmp.eq.s32.totalorder %s34, 0
      %p264 = por %p262, %p263
      %s266 = sadd.s32 %s265, 1
      %p269 = scmp.eq.s32.totalorder %s28, 15
      %p270 = scmp.ne.s32.totalorder %s265, %s267
      %p271 = scmp.eq.s32.totalorder %s28, 0
      %p272 = por %p270, %p271
      %p273 = scmp.ne.s32.totalorder %s265, %s267
      %p274 = scmp.eq.s32.totalorder %s33, 15
      %p275 = por %p273, %p274
      %p276 = scmp.ne.s32.totalorder %s267, %s268
      %p277 = scmp.eq.s32.totalorder %s33, 0
      %p278 = por %p276, %p277
      %p279 = scmp.ne.s32.totalorder %s267, %s268
      %p280 = scmp.eq.s32.totalorder %s34, 15
      %p281 = por %p279, %p280
      %p283 = scmp.ne.s32.totalorder %s268, %s282
      %p284 = scmp.eq.s32.totalorder %s34, 0
      %p285 = por %p283, %p284
      %p286 = scmp.le.s32.totalorder 1, %s28
      %p287 = scmp.lt.s32.totalorder %s28, 17
      %p288 = pnand %p286, %p287
      %p289 = pneg %p288
      // Predicated region
      $region9: #{tpu_custom_call.1} parent=5 // pred_check
        _
      $region10: #{tpu_custom_call.1} parent=5 // pred_check_branch
        %291 = sbr.rel (%p288) target = $region12
      $region11: #{tpu_custom_call.1} parent=5 // pred_region
        %s292 = ssub.s32 %s28, 1
        // Predicated region
        $region13: #{tpu_custom_call.1} parent=11 // pred_check
          %p293 = pneg %p61
        $region14: #{tpu_custom_call.1} parent=11 // pred_check_branch
          %295 = sbr.rel (%p293) target = $region16
        $region15: #{tpu_custom_call.1} parent=11 // pred_region
          %297 = vsyncadd [#allocation5], 0
          %s299 = sshll.u32 %s0, 4
          %s300 = int_to_ptr.hbm [resolvable:$true] %s299
          %302 = dma.hbm_to_smem %s300, 16, [#allocation3], [#allocation5]
        $region16: #{tpu_custom_call.1} parent=11 // pred_fallthru
          _
      $region12: #{tpu_custom_call.1} parent=5 // pred_fallthru
        _
      %p303 = scmp.lt.s32.totalorder %s28, 16
      // Predicated region
      $region17: #{tpu_custom_call.1} parent=5 // pred_check
        %p304 = pneg %p303
      $region18: #{tpu_custom_call.1} parent=5 // pred_check_branch
        %306 = sbr.rel (%p304) target = $region20
      $region19: #{tpu_custom_call.1} parent=5 // pred_region
        // Predicated region
        $region21: #{tpu_custom_call.1} parent=19 // pred_check
          %p307 = pneg %p83
        $region22: #{tpu_custom_call.1} parent=19 // pred_check_branch
          %309 = sbr.rel (%p307) target = $region24
        $region23: #{tpu_custom_call.1} parent=19 // pred_region
          %s310 = sand.u32 %s73, 1
          %s311 = scalar_lea.sflag [#allocation4], %s310
          %s312 = sand.u32 %s73, 1
          %s313 = smul.addr %s312, 64
          %s314 = scalar_lea.vmem [#allocation7], %s313
          %s315 = smul.u32 8, %s35
          %317 = vsyncadd %s311, 0
          %s318 = smul.addr %s315, 4
          %s319 = sadd.s32 %s36, %s318
          %s320 = smul.addr %s319, 8
          %s321 = scalar_lea.hbm %s1, %s320
          %s322 = sshll.u32 %s321, 4
          %s323 = int_to_ptr.hbm [resolvable:$true] %s322
          %s324 = sshll.u32 %s314, 4
          %s325 = int_to_ptr.vmem [resolvable:$true] %s324
          %330 = dma.hbm_to_vmem [thread:$0]  %s323, 1024, %s325, %s311, 512, 128, 8
        $region24: #{tpu_custom_call.1} parent=19 // pred_fallthru
          _
        // Predicated region
        $region25: #{tpu_custom_call.1} parent=19 // pred_check
          %p331 = pneg %p111
        $region26: #{tpu_custom_call.1} parent=19 // pred_check_branch
          %333 = sbr.rel (%p331) target = $region28
        $region27: #{tpu_custom_call.1} parent=19 // pred_region
          %s334 = sand.u32 %s28, 1
          %s335 = scalar_lea.sflag [#allocation9], %s334
          %s336 = sand.u32 %s101, 1
          %s337 = smul.addr %s336, 64
          %s338 = scalar_lea.vmem [#allocation8], %s337
          %s339 = smul.u32 8, %s35
          %341 = vsyncadd %s335, 0
          %s342 = smul.addr %s339, 4
          %s343 = sadd.s32 %s36, %s342
          %s344 = smul.addr %s343, 8
          %s345 = scalar_lea.hbm %s2, %s344
          %s346 = sshll.u32 %s345, 4
          %s347 = int_to_ptr.hbm [resolvable:$true] %s346
          %s348 = sshll.u32 %s338, 4
          %s349 = int_to_ptr.vmem [resolvable:$true] %s348
          %354 = dma.hbm_to_vmem [thread:$0]  %s347, 1024, %s349, %s335, 512, 128, 8
        $region28: #{tpu_custom_call.1} parent=19 // pred_fallthru
          _
        // Predicated region
        $region29: #{tpu_custom_call.1} parent=19 // pred_check
          %p355 = pneg %p139
        $region30: #{tpu_custom_call.1} parent=19 // pred_check_branch
          %357 = sbr.rel (%p355) target = $region32
        $region31: #{tpu_custom_call.1} parent=19 // pred_region
          %s358 = sand.u32 %s28, 1
          %s359 = scalar_lea.sflag [#allocation9], %s358
          %s360 = sand.u32 %s129, 1
          %s361 = smul.addr %s360, 64
          %s362 = scalar_lea.vmem [#allocation10], %s361
          %s363 = smul.u32 8, %s35
          %365 = vsyncadd %s359, 0
          %s366 = smul.addr %s363, 4
          %s367 = sadd.s32 %s36, %s366
          %s368 = smul.addr %s367, 8
          %s369 = scalar_lea.hbm %s3, %s368
          %s370 = sshll.u32 %s369, 4
          %s371 = int_to_ptr.hbm [resolvable:$true] %s370
          %s372 = sshll.u32 %s362, 4
          %s373 = int_to_ptr.vmem [resolvable:$true] %s372
          %378 = dma.hbm_to_vmem [thread:$0]  %s371, 1024, %s373, %s359, 512, 128, 8
        $region32: #{tpu_custom_call.1} parent=19 // pred_fallthru
          _
        // Predicated region
        $region33: #{tpu_custom_call.1} parent=19 // pred_check
          %p379 = pneg %p167
        $region34: #{tpu_custom_call.1} parent=19 // pred_check_branch
          %381 = sbr.rel (%p379) target = $region36
        $region35: #{tpu_custom_call.1} parent=19 // pred_region
          %s382 = sand.u32 %s28, 1
          %s383 = scalar_lea.sflag [#allocation12], %s382
          %s384 = sand.u32 %s157, 1
          %s385 = smul.addr %s384, 64
          %s386 = scalar_lea.vmem [#allocation11], %s385
          %s387 = smul.u32 8, %s35
          %389 = vsyncadd %s383, 0
          %s390 = smul.addr %s387, 4
          %s391 = sadd.s32 %s36, %s390
          %s392 = smul.addr %s391, 8
          %s393 = scalar_lea.hbm %s4, %s392
          %s394 = sshll.u32 %s393, 4
          %s395 = int_to_ptr.hbm [resolvable:$true] %s394
          %s396 = sshll.u32 %s386, 4
          %s397 = int_to_ptr.vmem [resolvable:$true] %s396
          %402 = dma.hbm_to_vmem [thread:$0]  %s395, 1024, %s397, %s383, 512, 128, 8
        $region36: #{tpu_custom_call.1} parent=19 // pred_fallthru
          _
        // Predicated region
        $region37: #{tpu_custom_call.1} parent=19 // pred_check
          %p403 = pneg %p195
        $region38: #{tpu_custom_call.1} parent=19 // pred_check_branch
          %405 = sbr.rel (%p403) target = $region40
        $region39: #{tpu_custom_call.1} parent=19 // pred_region
          %s406 = sand.u32 %s28, 1
          %s407 = scalar_lea.sflag [#allocation12], %s406
          %s408 = sand.u32 %s185, 1
          %s409 = smul.addr %s408, 64
          %s410 = scalar_lea.vmem [#allocation13], %s409
          %s411 = smul.u32 8, %s35
          %413 = vsyncadd %s407, 0
          %s414 = smul.addr %s411, 4
          %s415 = sadd.s32 %s36, %s414
          %s416 = smul.addr %s415, 8
          %s417 = scalar_lea.hbm %s5, %s416
          %s418 = sshll.u32 %s417, 4
          %s419 = int_to_ptr.hbm [resolvable:$true] %s418
          %s420 = sshll.u32 %s410, 4
          %s421 = int_to_ptr.vmem [resolvable:$true] %s420
          %426 = dma.hbm_to_vmem [thread:$0]  %s419, 1024, %s421, %s407, 512, 128, 8
        $region40: #{tpu_custom_call.1} parent=19 // pred_fallthru
          _
        // Predicated region
        $region41: #{tpu_custom_call.1} parent=19 // pred_check
          %p427 = pneg %p223
        $region42: #{tpu_custom_call.1} parent=19 // pred_check_branch
          %429 = sbr.rel (%p427) target = $region44
        $region43: #{tpu_custom_call.1} parent=19 // pred_region
          %s430 = sand.u32 %s28, 1
          %s431 = scalar_lea.sflag [#allocation15], %s430
          %s432 = sand.u32 %s213, 1
          %s433 = smul.addr %s432, 64
          %s434 = scalar_lea.vmem [#allocation14], %s433
          %s435 = smul.u32 8, %s35
          %437 = vsyncadd %s431, 0
          %s438 = smul.addr %s435, 4
          %s439 = sadd.s32 %s36, %s438
          %s440 = smul.addr %s439, 8
          %s441 = scalar_lea.hbm %s6, %s440
          %s442 = sshll.u32 %s441, 4
          %s443 = int_to_ptr.hbm [resolvable:$true] %s442
          %s444 = sshll.u32 %s434, 4
          %s445 = int_to_ptr.vmem [resolvable:$true] %s444
          %450 = dma.hbm_to_vmem [thread:$0]  %s443, 1024, %s445, %s431, 512, 128, 8
        $region44: #{tpu_custom_call.1} parent=19 // pred_fallthru
          _
        // Predicated region
        $region45: #{tpu_custom_call.1} parent=19 // pred_check
          %p451 = pneg %p251
        $region46: #{tpu_custom_call.1} parent=19 // pred_check_branch
          %453 = sbr.rel (%p451) target = $region48
        $region47: #{tpu_custom_call.1} parent=19 // pred_region
          %s454 = sand.u32 %s28, 1
          %s455 = scalar_lea.sflag [#allocation15], %s454
          %s456 = sand.u32 %s241, 1
          %s457 = smul.addr %s456, 64
          %s458 = scalar_lea.vmem [#allocation16], %s457
          %s459 = smul.u32 8, %s35
          %461 = vsyncadd %s455, 0
          %s462 = smul.addr %s459, 4
          %s463 = sadd.s32 %s36, %s462
          %s464 = smul.addr %s463, 8
          %s465 = scalar_lea.hbm %s7, %s464
          %s466 = sshll.u32 %s465, 4
          %s467 = int_to_ptr.hbm [resolvable:$true] %s466
          %s468 = sshll.u32 %s458, 4
          %s469 = int_to_ptr.vmem [resolvable:$true] %s468
          %474 = dma.hbm_to_vmem [thread:$0]  %s467, 1024, %s469, %s455, 512, 128, 8
        $region48: #{tpu_custom_call.1} parent=19 // pred_fallthru
          _
      $region20: #{tpu_custom_call.1} parent=5 // pred_fallthru
        _
      %p475 = scmp.le.s32.totalorder 1, %s28
      %p476 = scmp.lt.s32.totalorder %s28, 17
      %p477 = pnand %p475, %p476
      %p478 = pneg %p477
      // Predicated region
      $region49: #{tpu_custom_call.1} parent=5 // pred_check
        _
      $region50: #{tpu_custom_call.1} parent=5 // pred_check_branch
        %480 = sbr.rel (%p477) target = $region52
      $region51: #{tpu_custom_call.1} parent=5 // pred_region
        %s481 = ssub.s32 %s28, 1
        // Predicated region
        $region53: #{tpu_custom_call.1} parent=51 // pred_check
          %p482 = pneg %p61
        $region54: #{tpu_custom_call.1} parent=51 // pred_check_branch
          %484 = sbr.rel (%p482) target = $region56
        $region55: #{tpu_custom_call.1} parent=51 // pred_region
          %486 = dma.done [#allocation5], 16
        $region56: #{tpu_custom_call.1} parent=51 // pred_fallthru
          _
        %s487 = sand.u32 %s76, 1
        %s488 = scalar_lea.sflag [#allocation4], %s487
        %s489 = sand.u32 %s76, 1
        %s490 = smul.addr %s489, 64
        %s491 = scalar_lea.vmem [#allocation7], %s490
        // Predicated region
        $region57: #{tpu_custom_call.1} parent=51 // pred_check
          %p492 = pneg %p89
        $region58: #{tpu_custom_call.1} parent=51 // pred_check_branch
          %494 = sbr.rel (%p492) target = $region60
        $region59: #{tpu_custom_call.1} parent=51 // pred_region
          %496 = dma.done %s488, 1024
        $region60: #{tpu_custom_call.1} parent=51 // pred_fallthru
          _
        %s497 = sand.u32 %s33, 1
        %s498 = scalar_lea.sflag [#allocation9], %s497
        %s499 = sand.u32 %s104, 1
        %s500 = smul.addr %s499, 64
        %s501 = scalar_lea.vmem [#allocation8], %s500
        // Predicated region
        $region61: #{tpu_custom_call.1} parent=51 // pred_check
          %p502 = pneg %p117
        $region62: #{tpu_custom_call.1} parent=51 // pred_check_branch
          %504 = sbr.rel (%p502) target = $region64
        $region63: #{tpu_custom_call.1} parent=51 // pred_region
          %506 = dma.done %s498, 1024
        $region64: #{tpu_custom_call.1} parent=51 // pred_fallthru
          _
        %s507 = sand.u32 %s33, 1
        %s508 = scalar_lea.sflag [#allocation9], %s507
        %s509 = sand.u32 %s132, 1
        %s510 = smul.addr %s509, 64
        %s511 = scalar_lea.vmem [#allocation10], %s510
        // Predicated region
        $region65: #{tpu_custom_call.1} parent=51 // pred_check
          %p512 = pneg %p145
        $region66: #{tpu_custom_call.1} parent=51 // pred_check_branch
          %514 = sbr.rel (%p512) target = $region68
        $region67: #{tpu_custom_call.1} parent=51 // pred_region
          %516 = dma.done %s508, 1024
        $region68: #{tpu_custom_call.1} parent=51 // pred_fallthru
          _
        %s517 = sand.u32 %s33, 1
        %s518 = scalar_lea.sflag [#allocation12], %s517
        %s519 = sand.u32 %s160, 1
        %s520 = smul.addr %s519, 64
        %s521 = scalar_lea.vmem [#allocation11], %s520
        // Predicated region
        $region69: #{tpu_custom_call.1} parent=51 // pred_check
          %p522 = pneg %p173
        $region70: #{tpu_custom_call.1} parent=51 // pred_check_branch
          %524 = sbr.rel (%p522) target = $region72
        $region71: #{tpu_custom_call.1} parent=51 // pred_region
          %526 = dma.done %s518, 1024
        $region72: #{tpu_custom_call.1} parent=51 // pred_fallthru
          _
        %s527 = sand.u32 %s33, 1
        %s528 = scalar_lea.sflag [#allocation12], %s527
        %s529 = sand.u32 %s188, 1
        %s530 = smul.addr %s529, 64
        %s531 = scalar_lea.vmem [#allocation13], %s530
        // Predicated region
        $region73: #{tpu_custom_call.1} parent=51 // pred_check
          %p532 = pneg %p201
        $region74: #{tpu_custom_call.1} parent=51 // pred_check_branch
          %534 = sbr.rel (%p532) target = $region76
        $region75: #{tpu_custom_call.1} parent=51 // pred_region
          %536 = dma.done %s528, 1024
        $region76: #{tpu_custom_call.1} parent=51 // pred_fallthru
          _
        %s537 = sand.u32 %s33, 1
        %s538 = scalar_lea.sflag [#allocation15], %s537
        %s539 = sand.u32 %s216, 1
        %s540 = smul.addr %s539, 64
        %s541 = scalar_lea.vmem [#allocation14], %s540
        // Predicated region
        $region77: #{tpu_custom_call.1} parent=51 // pred_check
          %p542 = pneg %p229
        $region78: #{tpu_custom_call.1} parent=51 // pred_check_branch
          %544 = sbr.rel (%p542) target = $region80
        $region79: #{tpu_custom_call.1} parent=51 // pred_region
          %546 = dma.done %s538, 1024
        $region80: #{tpu_custom_call.1} parent=51 // pred_fallthru
          _
        %s547 = sand.u32 %s33, 1
        %s548 = scalar_lea.sflag [#allocation15], %s547
        %s549 = sand.u32 %s244, 1
        %s550 = smul.addr %s549, 64
        %s551 = scalar_lea.vmem [#allocation16], %s550
        // Predicated region
        $region81: #{tpu_custom_call.1} parent=51 // pred_check
          %p552 = pneg %p257
        $region82: #{tpu_custom_call.1} parent=51 // pred_check_branch
          %554 = sbr.rel (%p552) target = $region84
        $region83: #{tpu_custom_call.1} parent=51 // pred_region
          %556 = dma.done %s548, 1024
        $region84: #{tpu_custom_call.1} parent=51 // pred_fallthru
          _
        %557 = sfence
        %p558 = pneg %p61
        %p559 = pneg %p58
        %s560 = sand.u32 %s76, 1
        %s561 = scalar_lea.sflag [#allocation4], %s560
        %s562 = sand.u32 %s76, 1
        %s563 = smul.addr %s562, 64
        %s564 = scalar_lea.vmem [#allocation7], %s563
        %p565 = pneg %p89
        %p566 = pneg %p86
        %s567 = sand.u32 %s33, 1
        %s568 = scalar_lea.sflag [#allocation9], %s567
        %s569 = sand.u32 %s104, 1
        %s570 = smul.addr %s569, 64
        %s571 = scalar_lea.vmem [#allocation8], %s570
        %p572 = pneg %p117
        %p573 = pneg %p114
        %s574 = sand.u32 %s33, 1
        %s575 = scalar_lea.sflag [#allocation9], %s574
        %s576 = sand.u32 %s132, 1
        %s577 = smul.addr %s576, 64
        %s578 = scalar_lea.vmem [#allocation10], %s577
        %p579 = pneg %p145
        %p580 = pneg %p142
        %s581 = sand.u32 %s33, 1
        %s582 = scalar_lea.sflag [#allocation12], %s581
        %s583 = sand.u32 %s160, 1
        %s584 = smul.addr %s583, 64
        %s585 = scalar_lea.vmem [#allocation11], %s584
        %p586 = pneg %p173
        %p587 = pneg %p170
        %s588 = sand.u32 %s33, 1
        %s589 = scalar_lea.sflag [#allocation12], %s588
        %s590 = sand.u32 %s188, 1
        %s591 = smul.addr %s590, 64
        %s592 = scalar_lea.vmem [#allocation13], %s591
        %p593 = pneg %p201
        %p594 = pneg %p198
        %s595 = sand.u32 %s33, 1
        %s596 = scalar_lea.sflag [#allocation15], %s595
        %s597 = sand.u32 %s216, 1
        %s598 = smul.addr %s597, 64
        %s599 = scalar_lea.vmem [#allocation14], %s598
        %p600 = pneg %p229
        %p601 = pneg %p226
        %s602 = sand.u32 %s33, 1
        %s603 = scalar_lea.sflag [#allocation15], %s602
        %s604 = sand.u32 %s244, 1
        %s605 = smul.addr %s604, 64
        %s606 = scalar_lea.vmem [#allocation16], %s605
        %p607 = pneg %p257
        %p608 = pneg %p254
        %p609 = pneg %p278
        %p610 = pneg %p275
        %s611 = smul.u32 8, %s37
        %s612 = smul.u32 8, %s37
        %s613 = smul.u32 8, %s37
        %s614 = smul.u32 8, %s37
        %s615 = smul.u32 8, %s37
        %s616 = smul.u32 8, %s37
        %s617 = smul.u32 8, %s37
        %p618 = scmp.eq.s32.totalorder %s37, 0
        %p619 = scmp.eq.s32.totalorder %s38, 0
        %p620 = pnand %p618, %p619
        %p621 = pneg %p620
        // Predicated region
        $region85: #{tpu_custom_call.1} parent=51 // pred_check
          _
        $region86: #{tpu_custom_call.1} parent=51 // pred_check_branch
          %623 = sbr.rel (%p620) target = $region88
        $region87: #{tpu_custom_call.1} parent=51 // pred_region
          %624 = vst [vmem:[#allocation2] sm:$0xff] 0.0
          %625 = vst [vmem:[#allocation2 + $0x8] sm:$0xff] 0.0
          %626 = vst [vmem:[#allocation2 + $0x10] sm:$0xff] 0.0
          %627 = vst [vmem:[#allocation2 + $0x18] sm:$0xff] 0.0
          %628 = vst [vmem:[#allocation2 + $0x20] sm:$0xff] 0.0
          %629 = vst [vmem:[#allocation2 + $0x28] sm:$0xff] 0.0
          %630 = vst [vmem:[#allocation2 + $0x30] sm:$0xff] 0.0
          %631 = vst [vmem:[#allocation2 + $0x38] sm:$0xff] 0.0
        $region88: #{tpu_custom_call.1} parent=51 // pred_fallthru
          _
        %s632 = sld [smem:[#allocation3]]
        %s633 = sld [smem:[#allocation3 + $0x1]]
        %s634 = sld [smem:[#allocation3 + $0x2]]
        %s635 = sld [smem:[#allocation3 + $0x3]]
        %s636 = sld [smem:[#allocation3 + $0x4]]
        %s637 = sld [smem:[#allocation3 + $0x5]]
        %s638 = sld [smem:[#allocation3 + $0x6]]
        %s639 = sld [smem:[#allocation3 + $0x7]]
        %s640 = sld [smem:[#allocation3 + $0x8]]
        %s641 = sld [smem:[#allocation3 + $0x9]]
        %s642 = sld [smem:[#allocation3 + $0xa]]
        %s643 = sld [smem:[#allocation3 + $0xb]]
        %s644 = sld [smem:[#allocation3 + $0xc]]
        %s645 = sld [smem:[#allocation3 + $0xd]]
        %s646 = sld [smem:[#allocation3 + $0xe]]
        %s647 = sld [smem:[#allocation3 + $0xf]]
        %s648 = sld [smem:[#allocation3 + $0x10]]
        %s649 = sld [smem:[#allocation3 + $0x11]]
        %s650 = sld [smem:[#allocation3 + $0x12]]
        %s651 = sld [smem:[#allocation3 + $0x13]]
        %s652 = sld [smem:[#allocation3 + $0x14]]
        %s653 = sld [smem:[#allocation3 + $0x15]]
        %s654 = sld [smem:[#allocation3 + $0x16]]
        %s655 = sld [smem:[#allocation3 + $0x17]]
        %s656 = sld [smem:[#allocation3 + $0x18]]
        %s657 = sld [smem:[#allocation3 + $0x19]]
        %s658 = sld [smem:[#allocation3 + $0x1a]]
        %v659 = vld [vmem:[%s491] sm:$0xff]
        %v660 = vld [vmem:[%s491 + $0x8] sm:$0xff]
        %v661 = vld [vmem:[%s491 + $0x10] sm:$0xff]
        %v662 = vld [vmem:[%s491 + $0x18] sm:$0xff]
        %v663 = vld [vmem:[%s491 + $0x20] sm:$0xff]
        %v664 = vld [vmem:[%s491 + $0x28] sm:$0xff]
        %v665 = vld [vmem:[%s491 + $0x30] sm:$0xff]
        %v666 = vld [vmem:[%s491 + $0x38] sm:$0xff]
        %v667 = vld [vmem:[%s501] sm:$0xff]
        %v668 = vld [vmem:[%s501 + $0x8] sm:$0xff]
        %v669 = vld [vmem:[%s501 + $0x10] sm:$0xff]
        %v670 = vld [vmem:[%s501 + $0x18] sm:$0xff]
        %v671 = vld [vmem:[%s501 + $0x20] sm:$0xff]
        %v672 = vld [vmem:[%s501 + $0x28] sm:$0xff]
        %v673 = vld [vmem:[%s501 + $0x30] sm:$0xff]
        %v674 = vld [vmem:[%s501 + $0x38] sm:$0xff]
        %v675 = vld [vmem:[%s511] sm:$0xff]
        %v676 = vld [vmem:[%s511 + $0x8] sm:$0xff]
        %v677 = vld [vmem:[%s511 + $0x10] sm:$0xff]
        %v678 = vld [vmem:[%s511 + $0x18] sm:$0xff]
        %v679 = vld [vmem:[%s511 + $0x20] sm:$0xff]
        %v680 = vld [vmem:[%s511 + $0x28] sm:$0xff]
        %v681 = vld [vmem:[%s511 + $0x30] sm:$0xff]
        %v682 = vld [vmem:[%s511 + $0x38] sm:$0xff]
        %v683 = vld [vmem:[%s521] sm:$0xff]
        %v684 = vld [vmem:[%s521 + $0x8] sm:$0xff]
        %v685 = vld [vmem:[%s521 + $0x10] sm:$0xff]
        %v686 = vld [vmem:[%s521 + $0x18] sm:$0xff]
        %v687 = vld [vmem:[%s521 + $0x20] sm:$0xff]
        %v688 = vld [vmem:[%s521 + $0x28] sm:$0xff]
        %v689 = vld [vmem:[%s521 + $0x30] sm:$0xff]
        %v690 = vld [vmem:[%s521 + $0x38] sm:$0xff]
        %v691 = vld [vmem:[%s531] sm:$0xff]
        %v692 = vld [vmem:[%s531 + $0x8] sm:$0xff]
        %v693 = vld [vmem:[%s531 + $0x10] sm:$0xff]
        %v694 = vld [vmem:[%s531 + $0x18] sm:$0xff]
        %v695 = vld [vmem:[%s531 + $0x20] sm:$0xff]
        %v696 = vld [vmem:[%s531 + $0x28] sm:$0xff]
        %v697 = vld [vmem:[%s531 + $0x30] sm:$0xff]
        %v698 = vld [vmem:[%s531 + $0x38] sm:$0xff]
        %v699 = vld [vmem:[%s541] sm:$0xff]
        %v700 = vld [vmem:[%s541 + $0x8] sm:$0xff]
        %v701 = vld [vmem:[%s541 + $0x10] sm:$0xff]
        %v702 = vld [vmem:[%s541 + $0x18] sm:$0xff]
        %v703 = vld [vmem:[%s541 + $0x20] sm:$0xff]
        %v704 = vld [vmem:[%s541 + $0x28] sm:$0xff]
        %v705 = vld [vmem:[%s541 + $0x30] sm:$0xff]
        %v706 = vld [vmem:[%s541 + $0x38] sm:$0xff]
        %v707 = vld [vmem:[%s551] sm:$0xff]
        %v708 = vld [vmem:[%s551 + $0x8] sm:$0xff]
        %v709 = vld [vmem:[%s551 + $0x10] sm:$0xff]
        %v710 = vld [vmem:[%s551 + $0x18] sm:$0xff]
        %v711 = vld [vmem:[%s551 + $0x20] sm:$0xff]
        %v712 = vld [vmem:[%s551 + $0x28] sm:$0xff]
        %v713 = vld [vmem:[%s551 + $0x30] sm:$0xff]
        %v714 = vld [vmem:[%s551 + $0x38] sm:$0xff]
        %v715 = vand.u32 2147483647, %v667
        %v716 = vand.u32 2147483647, %v668
        %v717 = vand.u32 2147483647, %v669
        %v718 = vand.u32 2147483647, %v670
        %v719 = vand.u32 2147483647, %v671
        %v720 = vand.u32 2147483647, %v672
        %v721 = vand.u32 2147483647, %v673
        %v722 = vand.u32 2147483647, %v674
        %v723 = vsub.f32 0.0, %v715
        %v724 = vsub.f32 0.0, %v716
        %v725 = vsub.f32 0.0, %v717
        %v726 = vsub.f32 0.0, %v718
        %v727 = vsub.f32 0.0, %v719
        %v728 = vsub.f32 0.0, %v720
        %v729 = vsub.f32 0.0, %v721
        %v730 = vsub.f32 0.0, %v722
        %v731 = vmul.f32 %v723, 1.442695
        %v732 = vpow.pop %v731
        %v733 = vmul.f32 %v724, 1.442695
        %v734 = vpow.pop %v733
        %v735 = vmul.f32 %v725, 1.442695
        %v736 = vpow.pop %v735
        %v737 = vmul.f32 %v726, 1.442695
        %v738 = vpow.pop %v737
        %v739 = vmul.f32 %v727, 1.442695
        %v740 = vpow.pop %v739
        %v741 = vmul.f32 %v728, 1.442695
        %v742 = vpow.pop %v741
        %v743 = vmul.f32 %v729, 1.442695
        %v744 = vpow.pop %v743
        %v745 = vmul.f32 %v730, 1.442695
        %v746 = vpow.pop %v745
        %v747 = vadd.f32 %v732, 1.0
        %v748 = vadd.f32 %v734, 1.0
        %v749 = vadd.f32 %v736, 1.0
        %v750 = vadd.f32 %v738, 1.0
        %v751 = vadd.f32 %v740, 1.0
        %v752 = vadd.f32 %v742, 1.0
        %v753 = vadd.f32 %v744, 1.0
        %v754 = vadd.f32 %v746, 1.0
        %v755 = vrcp.pop %v747
        %v756 = vmul.f32 %v747, %v755
        %v757 = vsub.f32 1.0, %v756
        %v758 = vmul.f32 %v755, %v757
        %v759 = vadd.f32 %v755, %v758
        %vm760 = vweird.f32 %v747
        %vm761 = vweird.f32 %v755
        %vm762 = vmor %vm760, %vm761
        %v763 = vsel %vm762, %v755, %v759
        %v764 = vand.u32 2147483647, %v747
        %vm765 = vcmp.eq.f32.partialorder %v764, 8.507059e+37
        %v766 = vand.u32 %v747, 2147483648
        %v767 = vor.u32 1.1754944e-38, %v766
        %v768 = vsel %vm765, %v767, %v763
        %v769 = vmul.f32 1.0, %v768
        %v770 = vrcp.pop %v748
        %v771 = vmul.f32 %v748, %v770
        %v772 = vsub.f32 1.0, %v771
        %v773 = vmul.f32 %v770, %v772
        %v774 = vadd.f32 %v770, %v773
        %vm775 = vweird.f32 %v748
        %vm776 = vweird.f32 %v770
        %vm777 = vmor %vm775, %vm776
        %v778 = vsel %vm777, %v770, %v774
        %v779 = vand.u32 2147483647, %v748
        %vm780 = vcmp.eq.f32.partialorder %v779, 8.507059e+37
        %v781 = vand.u32 %v748, 2147483648
        %v782 = vor.u32 1.1754944e-38, %v781
        %v783 = vsel %vm780, %v782, %v778
        %v784 = vmul.f32 1.0, %v783
        %v785 = vrcp.pop %v749
        %v786 = vmul.f32 %v749, %v785
        %v787 = vsub.f32 1.0, %v786
        %v788 = vmul.f32 %v785, %v787
        %v789 = vadd.f32 %v785, %v788
        %vm790 = vweird.f32 %v749
        %vm791 = vweird.f32 %v785
        %vm792 = vmor %vm790, %vm791
        %v793 = vsel %vm792, %v785, %v789
        %v794 = vand.u32 2147483647, %v749
        %vm795 = vcmp.eq.f32.partialorder %v794, 8.507059e+37
        %v796 = vand.u32 %v749, 2147483648
        %v797 = vor.u32 1.1754944e-38, %v796
        %v798 = vsel %vm795, %v797, %v793
        %v799 = vmul.f32 1.0, %v798
        %v800 = vrcp.pop %v750
        %v801 = vmul.f32 %v750, %v800
        %v802 = vsub.f32 1.0, %v801
        %v803 = vmul.f32 %v800, %v802
        %v804 = vadd.f32 %v800, %v803
        %vm805 = vweird.f32 %v750
        %vm806 = vweird.f32 %v800
        %vm807 = vmor %vm805, %vm806
        %v808 = vsel %vm807, %v800, %v804
        %v809 = vand.u32 2147483647, %v750
        %vm810 = vcmp.eq.f32.partialorder %v809, 8.507059e+37
        %v811 = vand.u32 %v750, 2147483648
        %v812 = vor.u32 1.1754944e-38, %v811
        %v813 = vsel %vm810, %v812, %v808
        %v814 = vmul.f32 1.0, %v813
        %v815 = vrcp.pop %v751
        %v816 = vmul.f32 %v751, %v815
        %v817 = vsub.f32 1.0, %v816
        %v818 = vmul.f32 %v815, %v817
        %v819 = vadd.f32 %v815, %v818
        %vm820 = vweird.f32 %v751
        %vm821 = vweird.f32 %v815
        %vm822 = vmor %vm820, %vm821
        %v823 = vsel %vm822, %v815, %v819
        %v824 = vand.u32 2147483647, %v751
        %vm825 = vcmp.eq.f32.partialorder %v824, 8.507059e+37
        %v826 = vand.u32 %v751, 2147483648
        %v827 = vor.u32 1.1754944e-38, %v826
        %v828 = vsel %vm825, %v827, %v823
        %v829 = vmul.f32 1.0, %v828
        %v830 = vrcp.pop %v752
        %v831 = vmul.f32 %v752, %v830
        %v832 = vsub.f32 1.0, %v831
        %v833 = vmul.f32 %v830, %v832
        %v834 = vadd.f32 %v830, %v833
        %vm835 = vweird.f32 %v752
        %vm836 = vweird.f32 %v830
        %vm837 = vmor %vm835, %vm836
        %v838 = vsel %vm837, %v830, %v834
        %v839 = vand.u32 2147483647, %v752
        %vm840 = vcmp.eq.f32.partialorder %v839, 8.507059e+37
        %v841 = vand.u32 %v752, 2147483648
        %v842 = vor.u32 1.1754944e-38, %v841
        %v843 = vsel %vm840, %v842, %v838
        %v844 = vmul.f32 1.0, %v843
        %v845 = vrcp.pop %v753
        %v846 = vmul.f32 %v753, %v845
        %v847 = vsub.f32 1.0, %v846
        %v848 = vmul.f32 %v845, %v847
        %v849 = vadd.f32 %v845, %v848
        %vm850 = vweird.f32 %v753
        %vm851 = vweird.f32 %v845
        %vm852 = vmor %vm850, %vm851
        %v853 = vsel %vm852, %v845, %v849
        %v854 = vand.u32 2147483647, %v753
        %vm855 = vcmp.eq.f32.partialorder %v854, 8.507059e+37
        %v856 = vand.u32 %v753, 2147483648
        %v857 = vor.u32 1.1754944e-38, %v856
        %v858 = vsel %vm855, %v857, %v853
        %v859 = vmul.f32 1.0, %v858
        %v860 = vrcp.pop %v754
        %v861 = vmul.f32 %v754, %v860
        %v862 = vsub.f32 1.0, %v861
        %v863 = vmul.f32 %v860, %v862
        %v864 = vadd.f32 %v860, %v863
        %vm865 = vweird.f32 %v754
        %vm866 = vweird.f32 %v860
        %vm867 = vmor %vm865, %vm866
        %v868 = vsel %vm867, %v860, %v864
        %v869 = vand.u32 2147483647, %v754
        %vm870 = vcmp.eq.f32.partialorder %v869, 8.507059e+37
        %v871 = vand.u32 %v754, 2147483648
        %v872 = vor.u32 1.1754944e-38, %v871
        %v873 = vsel %vm870, %v872, %v868
        %v874 = vmul.f32 1.0, %v873
        %vm875 = vcmp.ge.f32.partialorder %v667, 0.0
        %vm876 = vcmp.ge.f32.partialorder %v668, 0.0
        %vm877 = vcmp.ge.f32.partialorder %v669, 0.0
        %vm878 = vcmp.ge.f32.partialorder %v670, 0.0
        %vm879 = vcmp.ge.f32.partialorder %v671, 0.0
        %vm880 = vcmp.ge.f32.partialorder %v672, 0.0
        %vm881 = vcmp.ge.f32.partialorder %v673, 0.0
        %vm882 = vcmp.ge.f32.partialorder %v674, 0.0
        %v883 = vmul.f32 %v732, %v769
        %v884 = vmul.f32 %v734, %v784
        %v885 = vmul.f32 %v736, %v799
        %v886 = vmul.f32 %v738, %v814
        %v887 = vmul.f32 %v740, %v829
        %v888 = vmul.f32 %v742, %v844
        %v889 = vmul.f32 %v744, %v859
        %v890 = vmul.f32 %v746, %v874
        %v891 = vsel %vm875, %v769, %v883
        %v892 = vsel %vm876, %v784, %v884
        %v893 = vsel %vm877, %v799, %v885
        %v894 = vsel %vm878, %v814, %v886
        %v895 = vsel %vm879, %v829, %v887
        %v896 = vsel %vm880, %v844, %v888
        %v897 = vsel %vm881, %v859, %v889
        %v898 = vsel %vm882, %v874, %v890
        %v899 = vmax.f32 %v667, 0.0
        %v900 = vmax.f32 %v668, 0.0
        %v901 = vmax.f32 %v669, 0.0
        %v902 = vmax.f32 %v670, 0.0
        %v903 = vmax.f32 %v671, 0.0
        %v904 = vmax.f32 %v672, 0.0
        %v905 = vmax.f32 %v673, 0.0
        %v906 = vmax.f32 %v674, 0.0
        %v907 = vlog2.pop %v747
        %v908 = vmul.f32 %v907, 0.6931472
        %v909 = vlog2.pop %v748
        %v910 = vmul.f32 %v909, 0.6931472
        %v911 = vlog2.pop %v749
        %v912 = vmul.f32 %v911, 0.6931472
        %v913 = vlog2.pop %v750
        %v914 = vmul.f32 %v913, 0.6931472
        %v915 = vlog2.pop %v751
        %v916 = vmul.f32 %v915, 0.6931472
        %v917 = vlog2.pop %v752
        %v918 = vmul.f32 %v917, 0.6931472
        %v919 = vlog2.pop %v753
        %v920 = vmul.f32 %v919, 0.6931472
        %v921 = vlog2.pop %v754
        %v922 = vmul.f32 %v921, 0.6931472
        %v923 = vadd.f32 %v899, %v908
        %v924 = vadd.f32 %v900, %v910
        %v925 = vadd.f32 %v901, %v912
        %v926 = vadd.f32 %v902, %v914
        %v927 = vadd.f32 %v903, %v916
        %v928 = vadd.f32 %v904, %v918
        %v929 = vadd.f32 %v905, %v920
        %v930 = vadd.f32 %v906, %v922
        %v931 = vsub.f32 %v923, %v667
        %v932 = vsub.f32 %v924, %v668
        %v933 = vsub.f32 %v925, %v669
        %v934 = vsub.f32 %v926, %v670
        %v935 = vsub.f32 %v927, %v671
        %v936 = vsub.f32 %v928, %v672
        %v937 = vsub.f32 %v929, %v673
        %v938 = vsub.f32 %v930, %v674
        %v939 = vmul.f32 %v891, %v931
        %v940 = vmul.f32 %v892, %v932
        %v941 = vmul.f32 %v893, %v933
        %v942 = vmul.f32 %v894, %v934
        %v943 = vmul.f32 %v895, %v935
        %v944 = vmul.f32 %v896, %v936
        %v945 = vmul.f32 %v897, %v937
        %v946 = vmul.f32 %v898, %v938
        %v947 = vsub.f32 1.0, %v891
        %v948 = vsub.f32 1.0, %v892
        %v949 = vsub.f32 1.0, %v893
        %v950 = vsub.f32 1.0, %v894
        %v951 = vsub.f32 1.0, %v895
        %v952 = vsub.f32 1.0, %v896
        %v953 = vsub.f32 1.0, %v897
        %v954 = vsub.f32 1.0, %v898
        %v955 = vmul.f32 %v947, %v923
        %v956 = vmul.f32 %v948, %v924
        %v957 = vmul.f32 %v949, %v925
        %v958 = vmul.f32 %v950, %v926
        %v959 = vmul.f32 %v951, %v927
        %v960 = vmul.f32 %v952, %v928
        %v961 = vmul.f32 %v953, %v929
        %v962 = vmul.f32 %v954, %v930
        %v963 = vadd.f32 %v939, %v955
        %v964 = vadd.f32 %v940, %v956
        %v965 = vadd.f32 %v941, %v957
        %v966 = vadd.f32 %v942, %v958
        %v967 = vadd.f32 %v943, %v959
        %v968 = vadd.f32 %v944, %v960
        %v969 = vadd.f32 %v945, %v961
        %v970 = vadd.f32 %v946, %v962
        %v971 = vand.u32 2147483647, %v675
        %v972 = vand.u32 2147483647, %v676
        %v973 = vand.u32 2147483647, %v677
        %v974 = vand.u32 2147483647, %v678
        %v975 = vand.u32 2147483647, %v679
        %v976 = vand.u32 2147483647, %v680
        %v977 = vand.u32 2147483647, %v681
        %v978 = vand.u32 2147483647, %v682
        %v979 = vsub.f32 0.0, %v971
        %v980 = vsub.f32 0.0, %v972
        %v981 = vsub.f32 0.0, %v973
        %v982 = vsub.f32 0.0, %v974
        %v983 = vsub.f32 0.0, %v975
        %v984 = vsub.f32 0.0, %v976
        %v985 = vsub.f32 0.0, %v977
        %v986 = vsub.f32 0.0, %v978
        %v987 = vmul.f32 %v979, 1.442695
        %v988 = vpow.pop %v987
        %v989 = vmul.f32 %v980, 1.442695
        %v990 = vpow.pop %v989
        %v991 = vmul.f32 %v981, 1.442695
        %v992 = vpow.pop %v991
        %v993 = vmul.f32 %v982, 1.442695
        %v994 = vpow.pop %v993
        %v995 = vmul.f32 %v983, 1.442695
        %v996 = vpow.pop %v995
        %v997 = vmul.f32 %v984, 1.442695
        %v998 = vpow.pop %v997
        %v999 = vmul.f32 %v985, 1.442695
        %v1000 = vpow.pop %v999
        %v1001 = vmul.f32 %v986, 1.442695
        %v1002 = vpow.pop %v1001
        %v1003 = vadd.f32 %v988, 1.0
        %v1004 = vadd.f32 %v990, 1.0
        %v1005 = vadd.f32 %v992, 1.0
        %v1006 = vadd.f32 %v994, 1.0
        %v1007 = vadd.f32 %v996, 1.0
        %v1008 = vadd.f32 %v998, 1.0
        %v1009 = vadd.f32 %v1000, 1.0
        %v1010 = vadd.f32 %v1002, 1.0
        %v1011 = vrcp.pop %v1003
        %v1012 = vmul.f32 %v1003, %v1011
        %v1013 = vsub.f32 1.0, %v1012
        %v1014 = vmul.f32 %v1011, %v1013
        %v1015 = vadd.f32 %v1011, %v1014
        %vm1016 = vweird.f32 %v1003
        %vm1017 = vweird.f32 %v1011
        %vm1018 = vmor %vm1016, %vm1017
        %v1019 = vsel %vm1018, %v1011, %v1015
        %v1020 = vand.u32 2147483647, %v1003
        %vm1021 = vcmp.eq.f32.partialorder %v1020, 8.507059e+37
        %v1022 = vand.u32 %v1003, 2147483648
        %v1023 = vor.u32 1.1754944e-38, %v1022
        %v1024 = vsel %vm1021, %v1023, %v1019
        %v1025 = vmul.f32 1.0, %v1024
        %v1026 = vrcp.pop %v1004
        %v1027 = vmul.f32 %v1004, %v1026
        %v1028 = vsub.f32 1.0, %v1027
        %v1029 = vmul.f32 %v1026, %v1028
        %v1030 = vadd.f32 %v1026, %v1029
        %vm1031 = vweird.f32 %v1004
        %vm1032 = vweird.f32 %v1026
        %vm1033 = vmor %vm1031, %vm1032
        %v1034 = vsel %vm1033, %v1026, %v1030
        %v1035 = vand.u32 2147483647, %v1004
        %vm1036 = vcmp.eq.f32.partialorder %v1035, 8.507059e+37
        %v1037 = vand.u32 %v1004, 2147483648
        %v1038 = vor.u32 1.1754944e-38, %v1037
        %v1039 = vsel %vm1036, %v1038, %v1034
        %v1040 = vmul.f32 1.0, %v1039
        %v1041 = vrcp.pop %v1005
        %v1042 = vmul.f32 %v1005, %v1041
        %v1043 = vsub.f32 1.0, %v1042
        %v1044 = vmul.f32 %v1041, %v1043
        %v1045 = vadd.f32 %v1041, %v1044
        %vm1046 = vweird.f32 %v1005
        %vm1047 = vweird.f32 %v1041
        %vm1048 = vmor %vm1046, %vm1047
        %v1049 = vsel %vm1048, %v1041, %v1045
        %v1050 = vand.u32 2147483647, %v1005
        %vm1051 = vcmp.eq.f32.partialorder %v1050, 8.507059e+37
        %v1052 = vand.u32 %v1005, 2147483648
        %v1053 = vor.u32 1.1754944e-38, %v1052
        %v1054 = vsel %vm1051, %v1053, %v1049
        %v1055 = vmul.f32 1.0, %v1054
        %v1056 = vrcp.pop %v1006
        %v1057 = vmul.f32 %v1006, %v1056
        %v1058 = vsub.f32 1.0, %v1057
        %v1059 = vmul.f32 %v1056, %v1058
        %v1060 = vadd.f32 %v1056, %v1059
        %vm1061 = vweird.f32 %v1006
        %vm1062 = vweird.f32 %v1056
        %vm1063 = vmor %vm1061, %vm1062
        %v1064 = vsel %vm1063, %v1056, %v1060
        %v1065 = vand.u32 2147483647, %v1006
        %vm1066 = vcmp.eq.f32.partialorder %v1065, 8.507059e+37
        %v1067 = vand.u32 %v1006, 2147483648
        %v1068 = vor.u32 1.1754944e-38, %v1067
        %v1069 = vsel %vm1066, %v1068, %v1064
        %v1070 = vmul.f32 1.0, %v1069
        %v1071 = vrcp.pop %v1007
        %v1072 = vmul.f32 %v1007, %v1071
        %v1073 = vsub.f32 1.0, %v1072
        %v1074 = vmul.f32 %v1071, %v1073
        %v1075 = vadd.f32 %v1071, %v1074
        %vm1076 = vweird.f32 %v1007
        %vm1077 = vweird.f32 %v1071
        %vm1078 = vmor %vm1076, %vm1077
        %v1079 = vsel %vm1078, %v1071, %v1075
        %v1080 = vand.u32 2147483647, %v1007
        %vm1081 = vcmp.eq.f32.partialorder %v1080, 8.507059e+37
        %v1082 = vand.u32 %v1007, 2147483648
        %v1083 = vor.u32 1.1754944e-38, %v1082
        %v1084 = vsel %vm1081, %v1083, %v1079
        %v1085 = vmul.f32 1.0, %v1084
        %v1086 = vrcp.pop %v1008
        %v1087 = vmul.f32 %v1008, %v1086
        %v1088 = vsub.f32 1.0, %v1087
        %v1089 = vmul.f32 %v1086, %v1088
        %v1090 = vadd.f32 %v1086, %v1089
        %vm1091 = vweird.f32 %v1008
        %vm1092 = vweird.f32 %v1086
        %vm1093 = vmor %vm1091, %vm1092
        %v1094 = vsel %vm1093, %v1086, %v1090
        %v1095 = vand.u32 2147483647, %v1008
        %vm1096 = vcmp.eq.f32.partialorder %v1095, 8.507059e+37
        %v1097 = vand.u32 %v1008, 2147483648
        %v1098 = vor.u32 1.1754944e-38, %v1097
        %v1099 = vsel %vm1096, %v1098, %v1094
        %v1100 = vmul.f32 1.0, %v1099
        %v1101 = vrcp.pop %v1009
        %v1102 = vmul.f32 %v1009, %v1101
        %v1103 = vsub.f32 1.0, %v1102
        %v1104 = vmul.f32 %v1101, %v1103
        %v1105 = vadd.f32 %v1101, %v1104
        %vm1106 = vweird.f32 %v1009
        %vm1107 = vweird.f32 %v1101
        %vm1108 = vmor %vm1106, %vm1107
        %v1109 = vsel %vm1108, %v1101, %v1105
        %v1110 = vand.u32 2147483647, %v1009
        %vm1111 = vcmp.eq.f32.partialorder %v1110, 8.507059e+37
        %v1112 = vand.u32 %v1009, 2147483648
        %v1113 = vor.u32 1.1754944e-38, %v1112
        %v1114 = vsel %vm1111, %v1113, %v1109
        %v1115 = vmul.f32 1.0, %v1114
        %v1116 = vrcp.pop %v1010
        %v1117 = vmul.f32 %v1010, %v1116
        %v1118 = vsub.f32 1.0, %v1117
        %v1119 = vmul.f32 %v1116, %v1118
        %v1120 = vadd.f32 %v1116, %v1119
        %vm1121 = vweird.f32 %v1010
        %vm1122 = vweird.f32 %v1116
        %vm1123 = vmor %vm1121, %vm1122
        %v1124 = vsel %vm1123, %v1116, %v1120
        %v1125 = vand.u32 2147483647, %v1010
        %vm1126 = vcmp.eq.f32.partialorder %v1125, 8.507059e+37
        %v1127 = vand.u32 %v1010, 2147483648
        %v1128 = vor.u32 1.1754944e-38, %v1127
        %v1129 = vsel %vm1126, %v1128, %v1124
        %v1130 = vmul.f32 1.0, %v1129
        %vm1131 = vcmp.ge.f32.partialorder %v675, 0.0
        %vm1132 = vcmp.ge.f32.partialorder %v676, 0.0
        %vm1133 = vcmp.ge.f32.partialorder %v677, 0.0
        %vm1134 = vcmp.ge.f32.partialorder %v678, 0.0
        %vm1135 = vcmp.ge.f32.partialorder %v679, 0.0
        %vm1136 = vcmp.ge.f32.partialorder %v680, 0.0
        %vm1137 = vcmp.ge.f32.partialorder %v681, 0.0
        %vm1138 = vcmp.ge.f32.partialorder %v682, 0.0
        %v1139 = vmul.f32 %v988, %v1025
        %v1140 = vmul.f32 %v990, %v1040
        %v1141 = vmul.f32 %v992, %v1055
        %v1142 = vmul.f32 %v994, %v1070
        %v1143 = vmul.f32 %v996, %v1085
        %v1144 = vmul.f32 %v998, %v1100
        %v1145 = vmul.f32 %v1000, %v1115
        %v1146 = vmul.f32 %v1002, %v1130
        %v1147 = vsel %vm1131, %v1025, %v1139
        %v1148 = vsel %vm1132, %v1040, %v1140
        %v1149 = vsel %vm1133, %v1055, %v1141
        %v1150 = vsel %vm1134, %v1070, %v1142
        %v1151 = vsel %vm1135, %v1085, %v1143
        %v1152 = vsel %vm1136, %v1100, %v1144
        %v1153 = vsel %vm1137, %v1115, %v1145
        %v1154 = vsel %vm1138, %v1130, %v1146
        %v1155 = vmax.f32 %v675, 0.0
        %v1156 = vmax.f32 %v676, 0.0
        %v1157 = vmax.f32 %v677, 0.0
        %v1158 = vmax.f32 %v678, 0.0
        %v1159 = vmax.f32 %v679, 0.0
        %v1160 = vmax.f32 %v680, 0.0
        %v1161 = vmax.f32 %v681, 0.0
        %v1162 = vmax.f32 %v682, 0.0
        %v1163 = vlog2.pop %v1003
        %v1164 = vmul.f32 %v1163, 0.6931472
        %v1165 = vlog2.pop %v1004
        %v1166 = vmul.f32 %v1165, 0.6931472
        %v1167 = vlog2.pop %v1005
        %v1168 = vmul.f32 %v1167, 0.6931472
        %v1169 = vlog2.pop %v1006
        %v1170 = vmul.f32 %v1169, 0.6931472
        %v1171 = vlog2.pop %v1007
        %v1172 = vmul.f32 %v1171, 0.6931472
        %v1173 = vlog2.pop %v1008
        %v1174 = vmul.f32 %v1173, 0.6931472
        %v1175 = vlog2.pop %v1009
        %v1176 = vmul.f32 %v1175, 0.6931472
        %v1177 = vlog2.pop %v1010
        %v1178 = vmul.f32 %v1177, 0.6931472
        %v1179 = vadd.f32 %v1155, %v1164
        %v1180 = vadd.f32 %v1156, %v1166
        %v1181 = vadd.f32 %v1157, %v1168
        %v1182 = vadd.f32 %v1158, %v1170
        %v1183 = vadd.f32 %v1159, %v1172
        %v1184 = vadd.f32 %v1160, %v1174
        %v1185 = vadd.f32 %v1161, %v1176
        %v1186 = vadd.f32 %v1162, %v1178
        %v1187 = vsub.f32 %v1179, %v675
        %v1188 = vsub.f32 %v1180, %v676
        %v1189 = vsub.f32 %v1181, %v677
        %v1190 = vsub.f32 %v1182, %v678
        %v1191 = vsub.f32 %v1183, %v679
        %v1192 = vsub.f32 %v1184, %v680
        %v1193 = vsub.f32 %v1185, %v681
        %v1194 = vsub.f32 %v1186, %v682
        %v1195 = vmul.f32 %v1147, %v1187
        %v1196 = vmul.f32 %v1148, %v1188
        %v1197 = vmul.f32 %v1149, %v1189
        %v1198 = vmul.f32 %v1150, %v1190
        %v1199 = vmul.f32 %v1151, %v1191
        %v1200 = vmul.f32 %v1152, %v1192
        %v1201 = vmul.f32 %v1153, %v1193
        %v1202 = vmul.f32 %v1154, %v1194
        %v1203 = vsub.f32 1.0, %v1147
        %v1204 = vsub.f32 1.0, %v1148
        %v1205 = vsub.f32 1.0, %v1149
        %v1206 = vsub.f32 1.0, %v1150
        %v1207 = vsub.f32 1.0, %v1151
        %v1208 = vsub.f32 1.0, %v1152
        %v1209 = vsub.f32 1.0, %v1153
        %v1210 = vsub.f32 1.0, %v1154
        %v1211 = vmul.f32 %v1203, %v1179
        %v1212 = vmul.f32 %v1204, %v1180
        %v1213 = vmul.f32 %v1205, %v1181
        %v1214 = vmul.f32 %v1206, %v1182
        %v1215 = vmul.f32 %v1207, %v1183
        %v1216 = vmul.f32 %v1208, %v1184
        %v1217 = vmul.f32 %v1209, %v1185
        %v1218 = vmul.f32 %v1210, %v1186
        %v1219 = vadd.f32 %v1195, %v1211
        %v1220 = vadd.f32 %v1196, %v1212
        %v1221 = vadd.f32 %v1197, %v1213
        %v1222 = vadd.f32 %v1198, %v1214
        %v1223 = vadd.f32 %v1199, %v1215
        %v1224 = vadd.f32 %v1200, %v1216
        %v1225 = vadd.f32 %v1201, %v1217
        %v1226 = vadd.f32 %v1202, %v1218
        %v1227 = vand.u32 2147483647, %v683
        %v1228 = vand.u32 2147483647, %v684
        %v1229 = vand.u32 2147483647, %v685
        %v1230 = vand.u32 2147483647, %v686
        %v1231 = vand.u32 2147483647, %v687
        %v1232 = vand.u32 2147483647, %v688
        %v1233 = vand.u32 2147483647, %v689
        %v1234 = vand.u32 2147483647, %v690
        %v1235 = vsub.f32 0.0, %v1227
        %v1236 = vsub.f32 0.0, %v1228
        %v1237 = vsub.f32 0.0, %v1229
        %v1238 = vsub.f32 0.0, %v1230
        %v1239 = vsub.f32 0.0, %v1231
        %v1240 = vsub.f32 0.0, %v1232
        %v1241 = vsub.f32 0.0, %v1233
        %v1242 = vsub.f32 0.0, %v1234
        %v1243 = vmul.f32 %v1235, 1.442695
        %v1244 = vpow.pop %v1243
        %v1245 = vmul.f32 %v1236, 1.442695
        %v1246 = vpow.pop %v1245
        %v1247 = vmul.f32 %v1237, 1.442695
        %v1248 = vpow.pop %v1247
        %v1249 = vmul.f32 %v1238, 1.442695
        %v1250 = vpow.pop %v1249
        %v1251 = vmul.f32 %v1239, 1.442695
        %v1252 = vpow.pop %v1251
        %v1253 = vmul.f32 %v1240, 1.442695
        %v1254 = vpow.pop %v1253
        %v1255 = vmul.f32 %v1241, 1.442695
        %v1256 = vpow.pop %v1255
        %v1257 = vmul.f32 %v1242, 1.442695
        %v1258 = vpow.pop %v1257
        %v1259 = vadd.f32 %v1244, 1.0
        %v1260 = vadd.f32 %v1246, 1.0
        %v1261 = vadd.f32 %v1248, 1.0
        %v1262 = vadd.f32 %v1250, 1.0
        %v1263 = vadd.f32 %v1252, 1.0
        %v1264 = vadd.f32 %v1254, 1.0
        %v1265 = vadd.f32 %v1256, 1.0
        %v1266 = vadd.f32 %v1258, 1.0
        %v1267 = vrcp.pop %v1259
        %v1268 = vmul.f32 %v1259, %v1267
        %v1269 = vsub.f32 1.0, %v1268
        %v1270 = vmul.f32 %v1267, %v1269
        %v1271 = vadd.f32 %v1267, %v1270
        %vm1272 = vweird.f32 %v1259
        %vm1273 = vweird.f32 %v1267
        %vm1274 = vmor %vm1272, %vm1273
        %v1275 = vsel %vm1274, %v1267, %v1271
        %v1276 = vand.u32 2147483647, %v1259
        %vm1277 = vcmp.eq.f32.partialorder %v1276, 8.507059e+37
        %v1278 = vand.u32 %v1259, 2147483648
        %v1279 = vor.u32 1.1754944e-38, %v1278
        %v1280 = vsel %vm1277, %v1279, %v1275
        %v1281 = vmul.f32 1.0, %v1280
        %v1282 = vrcp.pop %v1260
        %v1283 = vmul.f32 %v1260, %v1282
        %v1284 = vsub.f32 1.0, %v1283
        %v1285 = vmul.f32 %v1282, %v1284
        %v1286 = vadd.f32 %v1282, %v1285
        %vm1287 = vweird.f32 %v1260
        %vm1288 = vweird.f32 %v1282
        %vm1289 = vmor %vm1287, %vm1288
        %v1290 = vsel %vm1289, %v1282, %v1286
        %v1291 = vand.u32 2147483647, %v1260
        %vm1292 = vcmp.eq.f32.partialorder %v1291, 8.507059e+37
        %v1293 = vand.u32 %v1260, 2147483648
        %v1294 = vor.u32 1.1754944e-38, %v1293
        %v1295 = vsel %vm1292, %v1294, %v1290
        %v1296 = vmul.f32 1.0, %v1295
        %v1297 = vrcp.pop %v1261
        %v1298 = vmul.f32 %v1261, %v1297
        %v1299 = vsub.f32 1.0, %v1298
        %v1300 = vmul.f32 %v1297, %v1299
        %v1301 = vadd.f32 %v1297, %v1300
        %vm1302 = vweird.f32 %v1261
        %vm1303 = vweird.f32 %v1297
        %vm1304 = vmor %vm1302, %vm1303
        %v1305 = vsel %vm1304, %v1297, %v1301
        %v1306 = vand.u32 2147483647, %v1261
        %vm1307 = vcmp.eq.f32.partialorder %v1306, 8.507059e+37
        %v1308 = vand.u32 %v1261, 2147483648
        %v1309 = vor.u32 1.1754944e-38, %v1308
        %v1310 = vsel %vm1307, %v1309, %v1305
        %v1311 = vmul.f32 1.0, %v1310
        %v1312 = vrcp.pop %v1262
        %v1313 = vmul.f32 %v1262, %v1312
        %v1314 = vsub.f32 1.0, %v1313
        %v1315 = vmul.f32 %v1312, %v1314
        %v1316 = vadd.f32 %v1312, %v1315
        %vm1317 = vweird.f32 %v1262
        %vm1318 = vweird.f32 %v1312
        %vm1319 = vmor %vm1317, %vm1318
        %v1320 = vsel %vm1319, %v1312, %v1316
        %v1321 = vand.u32 2147483647, %v1262
        %vm1322 = vcmp.eq.f32.partialorder %v1321, 8.507059e+37
        %v1323 = vand.u32 %v1262, 2147483648
        %v1324 = vor.u32 1.1754944e-38, %v1323
        %v1325 = vsel %vm1322, %v1324, %v1320
        %v1326 = vmul.f32 1.0, %v1325
        %v1327 = vrcp.pop %v1263
        %v1328 = vmul.f32 %v1263, %v1327
        %v1329 = vsub.f32 1.0, %v1328
        %v1330 = vmul.f32 %v1327, %v1329
        %v1331 = vadd.f32 %v1327, %v1330
        %vm1332 = vweird.f32 %v1263
        %vm1333 = vweird.f32 %v1327
        %vm1334 = vmor %vm1332, %vm1333
        %v1335 = vsel %vm1334, %v1327, %v1331
        %v1336 = vand.u32 2147483647, %v1263
        %vm1337 = vcmp.eq.f32.partialorder %v1336, 8.507059e+37
        %v1338 = vand.u32 %v1263, 2147483648
        %v1339 = vor.u32 1.1754944e-38, %v1338
        %v1340 = vsel %vm1337, %v1339, %v1335
        %v1341 = vmul.f32 1.0, %v1340
        %v1342 = vrcp.pop %v1264
        %v1343 = vmul.f32 %v1264, %v1342
        %v1344 = vsub.f32 1.0, %v1343
        %v1345 = vmul.f32 %v1342, %v1344
        %v1346 = vadd.f32 %v1342, %v1345
        %vm1347 = vweird.f32 %v1264
        %vm1348 = vweird.f32 %v1342
        %vm1349 = vmor %vm1347, %vm1348
        %v1350 = vsel %vm1349, %v1342, %v1346
        %v1351 = vand.u32 2147483647, %v1264
        %vm1352 = vcmp.eq.f32.partialorder %v1351, 8.507059e+37
        %v1353 = vand.u32 %v1264, 2147483648
        %v1354 = vor.u32 1.1754944e-38, %v1353
        %v1355 = vsel %vm1352, %v1354, %v1350
        %v1356 = vmul.f32 1.0, %v1355
        %v1357 = vrcp.pop %v1265
        %v1358 = vmul.f32 %v1265, %v1357
        %v1359 = vsub.f32 1.0, %v1358
        %v1360 = vmul.f32 %v1357, %v1359
        %v1361 = vadd.f32 %v1357, %v1360
        %vm1362 = vweird.f32 %v1265
        %vm1363 = vweird.f32 %v1357
        %vm1364 = vmor %vm1362, %vm1363
        %v1365 = vsel %vm1364, %v1357, %v1361
        %v1366 = vand.u32 2147483647, %v1265
        %vm1367 = vcmp.eq.f32.partialorder %v1366, 8.507059e+37
        %v1368 = vand.u32 %v1265, 2147483648
        %v1369 = vor.u32 1.1754944e-38, %v1368
        %v1370 = vsel %vm1367, %v1369, %v1365
        %v1371 = vmul.f32 1.0, %v1370
        %v1372 = vrcp.pop %v1266
        %v1373 = vmul.f32 %v1266, %v1372
        %v1374 = vsub.f32 1.0, %v1373
        %v1375 = vmul.f32 %v1372, %v1374
        %v1376 = vadd.f32 %v1372, %v1375
        %vm1377 = vweird.f32 %v1266
        %vm1378 = vweird.f32 %v1372
        %vm1379 = vmor %vm1377, %vm1378
        %v1380 = vsel %vm1379, %v1372, %v1376
        %v1381 = vand.u32 2147483647, %v1266
        %vm1382 = vcmp.eq.f32.partialorder %v1381, 8.507059e+37
        %v1383 = vand.u32 %v1266, 2147483648
        %v1384 = vor.u32 1.1754944e-38, %v1383
        %v1385 = vsel %vm1382, %v1384, %v1380
        %v1386 = vmul.f32 1.0, %v1385
        %vm1387 = vcmp.ge.f32.partialorder %v683, 0.0
        %vm1388 = vcmp.ge.f32.partialorder %v684, 0.0
        %vm1389 = vcmp.ge.f32.partialorder %v685, 0.0
        %vm1390 = vcmp.ge.f32.partialorder %v686, 0.0
        %vm1391 = vcmp.ge.f32.partialorder %v687, 0.0
        %vm1392 = vcmp.ge.f32.partialorder %v688, 0.0
        %vm1393 = vcmp.ge.f32.partialorder %v689, 0.0
        %vm1394 = vcmp.ge.f32.partialorder %v690, 0.0
        %v1395 = vmul.f32 %v1244, %v1281
        %v1396 = vmul.f32 %v1246, %v1296
        %v1397 = vmul.f32 %v1248, %v1311
        %v1398 = vmul.f32 %v1250, %v1326
        %v1399 = vmul.f32 %v1252, %v1341
        %v1400 = vmul.f32 %v1254, %v1356
        %v1401 = vmul.f32 %v1256, %v1371
        %v1402 = vmul.f32 %v1258, %v1386
        %v1403 = vsel %vm1387, %v1281, %v1395
        %v1404 = vsel %vm1388, %v1296, %v1396
        %v1405 = vsel %vm1389, %v1311, %v1397
        %v1406 = vsel %vm1390, %v1326, %v1398
        %v1407 = vsel %vm1391, %v1341, %v1399
        %v1408 = vsel %vm1392, %v1356, %v1400
        %v1409 = vsel %vm1393, %v1371, %v1401
        %v1410 = vsel %vm1394, %v1386, %v1402
        %v1411 = vmax.f32 %v683, 0.0
        %v1412 = vmax.f32 %v684, 0.0
        %v1413 = vmax.f32 %v685, 0.0
        %v1414 = vmax.f32 %v686, 0.0
        %v1415 = vmax.f32 %v687, 0.0
        %v1416 = vmax.f32 %v688, 0.0
        %v1417 = vmax.f32 %v689, 0.0
        %v1418 = vmax.f32 %v690, 0.0
        %v1419 = vlog2.pop %v1259
        %v1420 = vmul.f32 %v1419, 0.6931472
        %v1421 = vlog2.pop %v1260
        %v1422 = vmul.f32 %v1421, 0.6931472
        %v1423 = vlog2.pop %v1261
        %v1424 = vmul.f32 %v1423, 0.6931472
        %v1425 = vlog2.pop %v1262
        %v1426 = vmul.f32 %v1425, 0.6931472
        %v1427 = vlog2.pop %v1263
        %v1428 = vmul.f32 %v1427, 0.6931472
        %v1429 = vlog2.pop %v1264
        %v1430 = vmul.f32 %v1429, 0.6931472
        %v1431 = vlog2.pop %v1265
        %v1432 = vmul.f32 %v1431, 0.6931472
        %v1433 = vlog2.pop %v1266
        %v1434 = vmul.f32 %v1433, 0.6931472
        %v1435 = vadd.f32 %v1411, %v1420
        %v1436 = vadd.f32 %v1412, %v1422
        %v1437 = vadd.f32 %v1413, %v1424
        %v1438 = vadd.f32 %v1414, %v1426
        %v1439 = vadd.f32 %v1415, %v1428
        %v1440 = vadd.f32 %v1416, %v1430
        %v1441 = vadd.f32 %v1417, %v1432
        %v1442 = vadd.f32 %v1418, %v1434
        %v1443 = vsub.f32 %v1435, %v683
        %v1444 = vsub.f32 %v1436, %v684
        %v1445 = vsub.f32 %v1437, %v685
        %v1446 = vsub.f32 %v1438, %v686
        %v1447 = vsub.f32 %v1439, %v687
        %v1448 = vsub.f32 %v1440, %v688
        %v1449 = vsub.f32 %v1441, %v689
        %v1450 = vsub.f32 %v1442, %v690
        %v1451 = vmul.f32 %v1403, %v1443
        %v1452 = vmul.f32 %v1404, %v1444
        %v1453 = vmul.f32 %v1405, %v1445
        %v1454 = vmul.f32 %v1406, %v1446
        %v1455 = vmul.f32 %v1407, %v1447
        %v1456 = vmul.f32 %v1408, %v1448
        %v1457 = vmul.f32 %v1409, %v1449
        %v1458 = vmul.f32 %v1410, %v1450
        %v1459 = vsub.f32 1.0, %v1403
        %v1460 = vsub.f32 1.0, %v1404
        %v1461 = vsub.f32 1.0, %v1405
        %v1462 = vsub.f32 1.0, %v1406
        %v1463 = vsub.f32 1.0, %v1407
        %v1464 = vsub.f32 1.0, %v1408
        %v1465 = vsub.f32 1.0, %v1409
        %v1466 = vsub.f32 1.0, %v1410
        %v1467 = vmul.f32 %v1459, %v1435
        %v1468 = vmul.f32 %v1460, %v1436
        %v1469 = vmul.f32 %v1461, %v1437
        %v1470 = vmul.f32 %v1462, %v1438
        %v1471 = vmul.f32 %v1463, %v1439
        %v1472 = vmul.f32 %v1464, %v1440
        %v1473 = vmul.f32 %v1465, %v1441
        %v1474 = vmul.f32 %v1466, %v1442
        %v1475 = vadd.f32 %v1451, %v1467
        %v1476 = vadd.f32 %v1452, %v1468
        %v1477 = vadd.f32 %v1453, %v1469
        %v1478 = vadd.f32 %v1454, %v1470
        %v1479 = vadd.f32 %v1455, %v1471
        %v1480 = vadd.f32 %v1456, %v1472
        %v1481 = vadd.f32 %v1457, %v1473
        %v1482 = vadd.f32 %v1458, %v1474
        %vm1483 = vcmp.eq.s32.totalorder %v707, 1
        %vm1484 = vcmp.eq.s32.totalorder %v708, 1
        %vm1485 = vcmp.eq.s32.totalorder %v709, 1
        %vm1486 = vcmp.eq.s32.totalorder %v710, 1
        %vm1487 = vcmp.eq.s32.totalorder %v711, 1
        %vm1488 = vcmp.eq.s32.totalorder %v712, 1
        %vm1489 = vcmp.eq.s32.totalorder %v713, 1
        %vm1490 = vcmp.eq.s32.totalorder %v714, 1
        %vm1491 = vcmp.eq.s32.totalorder %v707, 2
        %vm1492 = vcmp.eq.s32.totalorder %v708, 2
        %vm1493 = vcmp.eq.s32.totalorder %v709, 2
        %vm1494 = vcmp.eq.s32.totalorder %v710, 2
        %vm1495 = vcmp.eq.s32.totalorder %v711, 2
        %vm1496 = vcmp.eq.s32.totalorder %v712, 2
        %vm1497 = vcmp.eq.s32.totalorder %v713, 2
        %vm1498 = vcmp.eq.s32.totalorder %v714, 2
        %vm1499 = vcmp.eq.s32.totalorder %v707, 3
        %vm1500 = vcmp.eq.s32.totalorder %v708, 3
        %vm1501 = vcmp.eq.s32.totalorder %v709, 3
        %vm1502 = vcmp.eq.s32.totalorder %v710, 3
        %vm1503 = vcmp.eq.s32.totalorder %v711, 3
        %vm1504 = vcmp.eq.s32.totalorder %v712, 3
        %vm1505 = vcmp.eq.s32.totalorder %v713, 3
        %vm1506 = vcmp.eq.s32.totalorder %v714, 3
        %vm1507 = vcmp.eq.s32.totalorder %v707, 4
        %vm1508 = vcmp.eq.s32.totalorder %v708, 4
        %vm1509 = vcmp.eq.s32.totalorder %v709, 4
        %vm1510 = vcmp.eq.s32.totalorder %v710, 4
        %vm1511 = vcmp.eq.s32.totalorder %v711, 4
        %vm1512 = vcmp.eq.s32.totalorder %v712, 4
        %vm1513 = vcmp.eq.s32.totalorder %v713, 4
        %vm1514 = vcmp.eq.s32.totalorder %v714, 4
        %vm1515 = vcmp.eq.s32.totalorder %v707, 5
        %vm1516 = vcmp.eq.s32.totalorder %v708, 5
        %vm1517 = vcmp.eq.s32.totalorder %v709, 5
        %vm1518 = vcmp.eq.s32.totalorder %v710, 5
        %vm1519 = vcmp.eq.s32.totalorder %v711, 5
        %vm1520 = vcmp.eq.s32.totalorder %v712, 5
        %vm1521 = vcmp.eq.s32.totalorder %v713, 5
        %vm1522 = vcmp.eq.s32.totalorder %v714, 5
        %vm1523 = vcmp.eq.s32.totalorder %v707, 6
        %vm1524 = vcmp.eq.s32.totalorder %v708, 6
        %vm1525 = vcmp.eq.s32.totalorder %v709, 6
        %vm1526 = vcmp.eq.s32.totalorder %v710, 6
        %vm1527 = vcmp.eq.s32.totalorder %v711, 6
        %vm1528 = vcmp.eq.s32.totalorder %v712, 6
        %vm1529 = vcmp.eq.s32.totalorder %v713, 6
        %vm1530 = vcmp.eq.s32.totalorder %v714, 6
        %v1531 = vsel %vm1499, 1, 0
        %v1532 = vsel %vm1500, 1, 0
        %v1533 = vsel %vm1501, 1, 0
        %v1534 = vsel %vm1502, 1, 0
        %v1535 = vsel %vm1503, 1, 0
        %v1536 = vsel %vm1504, 1, 0
        %v1537 = vsel %vm1505, 1, 0
        %v1538 = vsel %vm1506, 1, 0
        %v1539 = vcvt.s32.f32 %v1531
        %v1540 = vcvt.s32.f32 %v1532
        %v1541 = vcvt.s32.f32 %v1533
        %v1542 = vcvt.s32.f32 %v1534
        %v1543 = vcvt.s32.f32 %v1535
        %v1544 = vcvt.s32.f32 %v1536
        %v1545 = vcvt.s32.f32 %v1537
        %v1546 = vcvt.s32.f32 %v1538
        %v1547 = vsel %vm1507, 1, 0
        %v1548 = vsel %vm1508, 1, 0
        %v1549 = vsel %vm1509, 1, 0
        %v1550 = vsel %vm1510, 1, 0
        %v1551 = vsel %vm1511, 1, 0
        %v1552 = vsel %vm1512, 1, 0
        %v1553 = vsel %vm1513, 1, 0
        %v1554 = vsel %vm1514, 1, 0
        %v1555 = vcvt.s32.f32 %v1547
        %v1556 = vcvt.s32.f32 %v1548
        %v1557 = vcvt.s32.f32 %v1549
        %v1558 = vcvt.s32.f32 %v1550
        %v1559 = vcvt.s32.f32 %v1551
        %v1560 = vcvt.s32.f32 %v1552
        %v1561 = vcvt.s32.f32 %v1553
        %v1562 = vcvt.s32.f32 %v1554
        %v1563 = vsel %vm1515, 1, 0
        %v1564 = vsel %vm1516, 1, 0
        %v1565 = vsel %vm1517, 1, 0
        %v1566 = vsel %vm1518, 1, 0
        %v1567 = vsel %vm1519, 1, 0
        %v1568 = vsel %vm1520, 1, 0
        %v1569 = vsel %vm1521, 1, 0
        %v1570 = vsel %vm1522, 1, 0
        %v1571 = vcvt.s32.f32 %v1563
        %v1572 = vcvt.s32.f32 %v1564
        %v1573 = vcvt.s32.f32 %v1565
        %v1574 = vcvt.s32.f32 %v1566
        %v1575 = vcvt.s32.f32 %v1567
        %v1576 = vcvt.s32.f32 %v1568
        %v1577 = vcvt.s32.f32 %v1569
        %v1578 = vcvt.s32.f32 %v1570
        %v1579 = vsel %vm1523, 1, 0
        %v1580 = vsel %vm1524, 1, 0
        %v1581 = vsel %vm1525, 1, 0
        %v1582 = vsel %vm1526, 1, 0
        %v1583 = vsel %vm1527, 1, 0
        %v1584 = vsel %vm1528, 1, 0
        %v1585 = vsel %vm1529, 1, 0
        %v1586 = vsel %vm1530, 1, 0
        %v1587 = vcvt.s32.f32 %v1579
        %v1588 = vcvt.s32.f32 %v1580
        %v1589 = vcvt.s32.f32 %v1581
        %v1590 = vcvt.s32.f32 %v1582
        %v1591 = vcvt.s32.f32 %v1583
        %v1592 = vcvt.s32.f32 %v1584
        %v1593 = vcvt.s32.f32 %v1585
        %v1594 = vcvt.s32.f32 %v1586
        %vm1595 = vmor %vm1499, %vm1507
        %vm1596 = vmor %vm1500, %vm1508
        %vm1597 = vmor %vm1501, %vm1509
        %vm1598 = vmor %vm1502, %vm1510
        %vm1599 = vmor %vm1503, %vm1511
        %vm1600 = vmor %vm1504, %vm1512
        %vm1601 = vmor %vm1505, %vm1513
        %vm1602 = vmor %vm1506, %vm1514
        %vm1603 = vmor %vm1595, %vm1523
        %vm1604 = vmor %vm1596, %vm1524
        %vm1605 = vmor %vm1597, %vm1525
        %vm1606 = vmor %vm1598, %vm1526
        %vm1607 = vmor %vm1599, %vm1527
        %vm1608 = vmor %vm1600, %vm1528
        %vm1609 = vmor %vm1601, %vm1529
        %vm1610 = vmor %vm1602, %vm1530
        %v1611 = vsel %vm1603, 1, 0
        %v1612 = vsel %vm1604, 1, 0
        %v1613 = vsel %vm1605, 1, 0
        %v1614 = vsel %vm1606, 1, 0
        %v1615 = vsel %vm1607, 1, 0
        %v1616 = vsel %vm1608, 1, 0
        %v1617 = vsel %vm1609, 1, 0
        %v1618 = vsel %vm1610, 1, 0
        %v1619 = vcvt.s32.f32 %v1611
        %v1620 = vcvt.s32.f32 %v1612
        %v1621 = vcvt.s32.f32 %v1613
        %v1622 = vcvt.s32.f32 %v1614
        %v1623 = vcvt.s32.f32 %v1615
        %v1624 = vcvt.s32.f32 %v1616
        %v1625 = vcvt.s32.f32 %v1617
        %v1626 = vcvt.s32.f32 %v1618
        %vm1627 = vmor %vm1483, %vm1499
        %vm1628 = vmor %vm1484, %vm1500
        %vm1629 = vmor %vm1485, %vm1501
        %vm1630 = vmor %vm1486, %vm1502
        %vm1631 = vmor %vm1487, %vm1503
        %vm1632 = vmor %vm1488, %vm1504
        %vm1633 = vmor %vm1489, %vm1505
        %vm1634 = vmor %vm1490, %vm1506
        %vm1635 = vmor %vm1627, %vm1515
        %vm1636 = vmor %vm1628, %vm1516
        %vm1637 = vmor %vm1629, %vm1517
        %vm1638 = vmor %vm1630, %vm1518
        %vm1639 = vmor %vm1631, %vm1519
        %vm1640 = vmor %vm1632, %vm1520
        %vm1641 = vmor %vm1633, %vm1521
        %vm1642 = vmor %vm1634, %vm1522
        %vm1643 = vmor %vm1635, %vm1523
        %vm1644 = vmor %vm1636, %vm1524
        %vm1645 = vmor %vm1637, %vm1525
        %vm1646 = vmor %vm1638, %vm1526
        %vm1647 = vmor %vm1639, %vm1527
        %vm1648 = vmor %vm1640, %vm1528
        %vm1649 = vmor %vm1641, %vm1529
        %vm1650 = vmor %vm1642, %vm1530
        %v1651 = vsel %vm1643, 1, 0
        %v1652 = vsel %vm1644, 1, 0
        %v1653 = vsel %vm1645, 1, 0
        %v1654 = vsel %vm1646, 1, 0
        %v1655 = vsel %vm1647, 1, 0
        %v1656 = vsel %vm1648, 1, 0
        %v1657 = vsel %vm1649, 1, 0
        %v1658 = vsel %vm1650, 1, 0
        %v1659 = vcvt.s32.f32 %v1651
        %v1660 = vcvt.s32.f32 %v1652
        %v1661 = vcvt.s32.f32 %v1653
        %v1662 = vcvt.s32.f32 %v1654
        %v1663 = vcvt.s32.f32 %v1655
        %v1664 = vcvt.s32.f32 %v1656
        %v1665 = vcvt.s32.f32 %v1657
        %v1666 = vcvt.s32.f32 %v1658
        %vm1667 = vmor %vm1491, %vm1507
        %vm1668 = vmor %vm1492, %vm1508
        %vm1669 = vmor %vm1493, %vm1509
        %vm1670 = vmor %vm1494, %vm1510
        %vm1671 = vmor %vm1495, %vm1511
        %vm1672 = vmor %vm1496, %vm1512
        %vm1673 = vmor %vm1497, %vm1513
        %vm1674 = vmor %vm1498, %vm1514
        %vm1675 = vmor %vm1667, %vm1515
        %vm1676 = vmor %vm1668, %vm1516
        %vm1677 = vmor %vm1669, %vm1517
        %vm1678 = vmor %vm1670, %vm1518
        %vm1679 = vmor %vm1671, %vm1519
        %vm1680 = vmor %vm1672, %vm1520
        %vm1681 = vmor %vm1673, %vm1521
        %vm1682 = vmor %vm1674, %vm1522
        %vm1683 = vmor %vm1675, %vm1523
        %vm1684 = vmor %vm1676, %vm1524
        %vm1685 = vmor %vm1677, %vm1525
        %vm1686 = vmor %vm1678, %vm1526
        %vm1687 = vmor %vm1679, %vm1527
        %vm1688 = vmor %vm1680, %vm1528
        %vm1689 = vmor %vm1681, %vm1529
        %vm1690 = vmor %vm1682, %vm1530
        %v1691 = vsel %vm1683, 1, 0
        %v1692 = vsel %vm1684, 1, 0
        %v1693 = vsel %vm1685, 1, 0
        %v1694 = vsel %vm1686, 1, 0
        %v1695 = vsel %vm1687, 1, 0
        %v1696 = vsel %vm1688, 1, 0
        %v1697 = vsel %vm1689, 1, 0
        %v1698 = vsel %vm1690, 1, 0
        %v1699 = vcvt.s32.f32 %v1691
        %v1700 = vcvt.s32.f32 %v1692
        %v1701 = vcvt.s32.f32 %v1693
        %v1702 = vcvt.s32.f32 %v1694
        %v1703 = vcvt.s32.f32 %v1695
        %v1704 = vcvt.s32.f32 %v1696
        %v1705 = vcvt.s32.f32 %v1697
        %v1706 = vcvt.s32.f32 %v1698
        %vm1707 = vmor %vm1515, %vm1523
        %vm1708 = vmor %vm1516, %vm1524
        %vm1709 = vmor %vm1517, %vm1525
        %vm1710 = vmor %vm1518, %vm1526
        %vm1711 = vmor %vm1519, %vm1527
        %vm1712 = vmor %vm1520, %vm1528
        %vm1713 = vmor %vm1521, %vm1529
        %vm1714 = vmor %vm1522, %vm1530
        %v1715 = vsel %vm1707, 1, 0
        %v1716 = vsel %vm1708, 1, 0
        %v1717 = vsel %vm1709, 1, 0
        %v1718 = vsel %vm1710, 1, 0
        %v1719 = vsel %vm1711, 1, 0
        %v1720 = vsel %vm1712, 1, 0
        %v1721 = vsel %vm1713, 1, 0
        %v1722 = vsel %vm1714, 1, 0
        %v1723 = vcvt.s32.f32 %v1715
        %v1724 = vcvt.s32.f32 %v1716
        %v1725 = vcvt.s32.f32 %v1717
        %v1726 = vcvt.s32.f32 %v1718
        %v1727 = vcvt.s32.f32 %v1719
        %v1728 = vcvt.s32.f32 %v1720
        %v1729 = vcvt.s32.f32 %v1721
        %v1730 = vcvt.s32.f32 %v1722
        %v1731 = vmul.f32 %v1539, %v891
        %v1732 = vmul.f32 %v1540, %v892
        %v1733 = vmul.f32 %v1541, %v893
        %v1734 = vmul.f32 %v1542, %v894
        %v1735 = vmul.f32 %v1543, %v895
        %v1736 = vmul.f32 %v1544, %v896
        %v1737 = vmul.f32 %v1545, %v897
        %v1738 = vmul.f32 %v1546, %v898
        %v1739 = vstv %s633
        %v1740 = vmul.f32 %v1147, %v1739
        %v1741 = vmul.f32 %v1148, %v1739
        %v1742 = vmul.f32 %v1149, %v1739
        %v1743 = vmul.f32 %v1150, %v1739
        %v1744 = vmul.f32 %v1151, %v1739
        %v1745 = vmul.f32 %v1152, %v1739
        %v1746 = vmul.f32 %v1153, %v1739
        %v1747 = vmul.f32 %v1154, %v1739
        %v1748 = vstv %s634
        %v1749 = vmul.f32 %v1203, %v1748
        %v1750 = vmul.f32 %v1204, %v1748
        %v1751 = vmul.f32 %v1205, %v1748
        %v1752 = vmul.f32 %v1206, %v1748
        %v1753 = vmul.f32 %v1207, %v1748
        %v1754 = vmul.f32 %v1208, %v1748
        %v1755 = vmul.f32 %v1209, %v1748
        %v1756 = vmul.f32 %v1210, %v1748
        %v1757 = vadd.f32 %v1740, %v1749
        %v1758 = vadd.f32 %v1741, %v1750
        %v1759 = vadd.f32 %v1742, %v1751
        %v1760 = vadd.f32 %v1743, %v1752
        %v1761 = vadd.f32 %v1744, %v1753
        %v1762 = vadd.f32 %v1745, %v1754
        %v1763 = vadd.f32 %v1746, %v1755
        %v1764 = vadd.f32 %v1747, %v1756
        %v1765 = vmul.f32 %v1731, %v1757
        %v1766 = vmul.f32 %v1732, %v1758
        %v1767 = vmul.f32 %v1733, %v1759
        %v1768 = vmul.f32 %v1734, %v1760
        %v1769 = vmul.f32 %v1735, %v1761
        %v1770 = vmul.f32 %v1736, %v1762
        %v1771 = vmul.f32 %v1737, %v1763
        %v1772 = vmul.f32 %v1738, %v1764
        %v1773 = vmul.f32 %v1539, %v947
        %v1774 = vmul.f32 %v1540, %v948
        %v1775 = vmul.f32 %v1541, %v949
        %v1776 = vmul.f32 %v1542, %v950
        %v1777 = vmul.f32 %v1543, %v951
        %v1778 = vmul.f32 %v1544, %v952
        %v1779 = vmul.f32 %v1545, %v953
        %v1780 = vmul.f32 %v1546, %v954
        %v1781 = vstv %s635
        %v1782 = vmul.f32 %v1147, %v1781
        %v1783 = vmul.f32 %v1148, %v1781
        %v1784 = vmul.f32 %v1149, %v1781
        %v1785 = vmul.f32 %v1150, %v1781
        %v1786 = vmul.f32 %v1151, %v1781
        %v1787 = vmul.f32 %v1152, %v1781
        %v1788 = vmul.f32 %v1153, %v1781
        %v1789 = vmul.f32 %v1154, %v1781
        %v1790 = vstv %s636
        %v1791 = vmul.f32 %v1203, %v1790
        %v1792 = vmul.f32 %v1204, %v1790
        %v1793 = vmul.f32 %v1205, %v1790
        %v1794 = vmul.f32 %v1206, %v1790
        %v1795 = vmul.f32 %v1207, %v1790
        %v1796 = vmul.f32 %v1208, %v1790
        %v1797 = vmul.f32 %v1209, %v1790
        %v1798 = vmul.f32 %v1210, %v1790
        %v1799 = vadd.f32 %v1782, %v1791
        %v1800 = vadd.f32 %v1783, %v1792
        %v1801 = vadd.f32 %v1784, %v1793
        %v1802 = vadd.f32 %v1785, %v1794
        %v1803 = vadd.f32 %v1786, %v1795
        %v1804 = vadd.f32 %v1787, %v1796
        %v1805 = vadd.f32 %v1788, %v1797
        %v1806 = vadd.f32 %v1789, %v1798
        %v1807 = vmul.f32 %v1773, %v1799
        %v1808 = vmul.f32 %v1774, %v1800
        %v1809 = vmul.f32 %v1775, %v1801
        %v1810 = vmul.f32 %v1776, %v1802
        %v1811 = vmul.f32 %v1777, %v1803
        %v1812 = vmul.f32 %v1778, %v1804
        %v1813 = vmul.f32 %v1779, %v1805
        %v1814 = vmul.f32 %v1780, %v1806
        %v1815 = vmul.f32 %v1555, %v891
        %v1816 = vmul.f32 %v1556, %v892
        %v1817 = vmul.f32 %v1557, %v893
        %v1818 = vmul.f32 %v1558, %v894
        %v1819 = vmul.f32 %v1559, %v895
        %v1820 = vmul.f32 %v1560, %v896
        %v1821 = vmul.f32 %v1561, %v897
        %v1822 = vmul.f32 %v1562, %v898
        %v1823 = vstv %s637
        %v1824 = vmul.f32 %v1403, %v1823
        %v1825 = vmul.f32 %v1404, %v1823
        %v1826 = vmul.f32 %v1405, %v1823
        %v1827 = vmul.f32 %v1406, %v1823
        %v1828 = vmul.f32 %v1407, %v1823
        %v1829 = vmul.f32 %v1408, %v1823
        %v1830 = vmul.f32 %v1409, %v1823
        %v1831 = vmul.f32 %v1410, %v1823
        %v1832 = vmul.f32 %v1459, %v1748
        %v1833 = vmul.f32 %v1460, %v1748
        %v1834 = vmul.f32 %v1461, %v1748
        %v1835 = vmul.f32 %v1462, %v1748
        %v1836 = vmul.f32 %v1463, %v1748
        %v1837 = vmul.f32 %v1464, %v1748
        %v1838 = vmul.f32 %v1465, %v1748
        %v1839 = vmul.f32 %v1466, %v1748
        %v1840 = vadd.f32 %v1824, %v1832
        %v1841 = vadd.f32 %v1825, %v1833
        %v1842 = vadd.f32 %v1826, %v1834
        %v1843 = vadd.f32 %v1827, %v1835
        %v1844 = vadd.f32 %v1828, %v1836
        %v1845 = vadd.f32 %v1829, %v1837
        %v1846 = vadd.f32 %v1830, %v1838
        %v1847 = vadd.f32 %v1831, %v1839
        %v1848 = vmul.f32 %v1815, %v1840
        %v1849 = vmul.f32 %v1816, %v1841
        %v1850 = vmul.f32 %v1817, %v1842
        %v1851 = vmul.f32 %v1818, %v1843
        %v1852 = vmul.f32 %v1819, %v1844
        %v1853 = vmul.f32 %v1820, %v1845
        %v1854 = vmul.f32 %v1821, %v1846
        %v1855 = vmul.f32 %v1822, %v1847
        %v1856 = vmul.f32 %v1555, %v947
        %v1857 = vmul.f32 %v1556, %v948
        %v1858 = vmul.f32 %v1557, %v949
        %v1859 = vmul.f32 %v1558, %v950
        %v1860 = vmul.f32 %v1559, %v951
        %v1861 = vmul.f32 %v1560, %v952
        %v1862 = vmul.f32 %v1561, %v953
        %v1863 = vmul.f32 %v1562, %v954
        %v1864 = vstv %s638
        %v1865 = vmul.f32 %v1403, %v1864
        %v1866 = vmul.f32 %v1404, %v1864
        %v1867 = vmul.f32 %v1405, %v1864
        %v1868 = vmul.f32 %v1406, %v1864
        %v1869 = vmul.f32 %v1407, %v1864
        %v1870 = vmul.f32 %v1408, %v1864
        %v1871 = vmul.f32 %v1409, %v1864
        %v1872 = vmul.f32 %v1410, %v1864
        %v1873 = vmul.f32 %v1459, %v1790
        %v1874 = vmul.f32 %v1460, %v1790
        %v1875 = vmul.f32 %v1461, %v1790
        %v1876 = vmul.f32 %v1462, %v1790
        %v1877 = vmul.f32 %v1463, %v1790
        %v1878 = vmul.f32 %v1464, %v1790
        %v1879 = vmul.f32 %v1465, %v1790
        %v1880 = vmul.f32 %v1466, %v1790
        %v1881 = vadd.f32 %v1865, %v1873
        %v1882 = vadd.f32 %v1866, %v1874
        %v1883 = vadd.f32 %v1867, %v1875
        %v1884 = vadd.f32 %v1868, %v1876
        %v1885 = vadd.f32 %v1869, %v1877
        %v1886 = vadd.f32 %v1870, %v1878
        %v1887 = vadd.f32 %v1871, %v1879
        %v1888 = vadd.f32 %v1872, %v1880
        %v1889 = vmul.f32 %v1856, %v1881
        %v1890 = vmul.f32 %v1857, %v1882
        %v1891 = vmul.f32 %v1858, %v1883
        %v1892 = vmul.f32 %v1859, %v1884
        %v1893 = vmul.f32 %v1860, %v1885
        %v1894 = vmul.f32 %v1861, %v1886
        %v1895 = vmul.f32 %v1862, %v1887
        %v1896 = vmul.f32 %v1863, %v1888
        %v1897 = vmul.f32 %v1147, %v1403
        %v1898 = vmul.f32 %v1148, %v1404
        %v1899 = vmul.f32 %v1149, %v1405
        %v1900 = vmul.f32 %v1150, %v1406
        %v1901 = vmul.f32 %v1151, %v1407
        %v1902 = vmul.f32 %v1152, %v1408
        %v1903 = vmul.f32 %v1153, %v1409
        %v1904 = vmul.f32 %v1154, %v1410
        %v1905 = vstv %s639
        %v1906 = vmul.f32 %v1897, %v1905
        %v1907 = vmul.f32 %v1898, %v1905
        %v1908 = vmul.f32 %v1899, %v1905
        %v1909 = vmul.f32 %v1900, %v1905
        %v1910 = vmul.f32 %v1901, %v1905
        %v1911 = vmul.f32 %v1902, %v1905
        %v1912 = vmul.f32 %v1903, %v1905
        %v1913 = vmul.f32 %v1904, %v1905
        %v1914 = vmul.f32 %v1147, %v1459
        %v1915 = vmul.f32 %v1148, %v1460
        %v1916 = vmul.f32 %v1149, %v1461
        %v1917 = vmul.f32 %v1150, %v1462
        %v1918 = vmul.f32 %v1151, %v1463
        %v1919 = vmul.f32 %v1152, %v1464
        %v1920 = vmul.f32 %v1153, %v1465
        %v1921 = vmul.f32 %v1154, %v1466
        %v1922 = vmul.f32 %v1914, %v1739
        %v1923 = vmul.f32 %v1915, %v1739
        %v1924 = vmul.f32 %v1916, %v1739
        %v1925 = vmul.f32 %v1917, %v1739
        %v1926 = vmul.f32 %v1918, %v1739
        %v1927 = vmul.f32 %v1919, %v1739
        %v1928 = vmul.f32 %v1920, %v1739
        %v1929 = vmul.f32 %v1921, %v1739
        %v1930 = vadd.f32 %v1906, %v1922
        %v1931 = vadd.f32 %v1907, %v1923
        %v1932 = vadd.f32 %v1908, %v1924
        %v1933 = vadd.f32 %v1909, %v1925
        %v1934 = vadd.f32 %v1910, %v1926
        %v1935 = vadd.f32 %v1911, %v1927
        %v1936 = vadd.f32 %v1912, %v1928
        %v1937 = vadd.f32 %v1913, %v1929
        %v1938 = vmul.f32 %v1203, %v1403
        %v1939 = vmul.f32 %v1204, %v1404
        %v1940 = vmul.f32 %v1205, %v1405
        %v1941 = vmul.f32 %v1206, %v1406
        %v1942 = vmul.f32 %v1207, %v1407
        %v1943 = vmul.f32 %v1208, %v1408
        %v1944 = vmul.f32 %v1209, %v1409
        %v1945 = vmul.f32 %v1210, %v1410
        %v1946 = vmul.f32 %v1938, %v1823
        %v1947 = vmul.f32 %v1939, %v1823
        %v1948 = vmul.f32 %v1940, %v1823
        %v1949 = vmul.f32 %v1941, %v1823
        %v1950 = vmul.f32 %v1942, %v1823
        %v1951 = vmul.f32 %v1943, %v1823
        %v1952 = vmul.f32 %v1944, %v1823
        %v1953 = vmul.f32 %v1945, %v1823
        %v1954 = vadd.f32 %v1930, %v1946
        %v1955 = vadd.f32 %v1931, %v1947
        %v1956 = vadd.f32 %v1932, %v1948
        %v1957 = vadd.f32 %v1933, %v1949
        %v1958 = vadd.f32 %v1934, %v1950
        %v1959 = vadd.f32 %v1935, %v1951
        %v1960 = vadd.f32 %v1936, %v1952
        %v1961 = vadd.f32 %v1937, %v1953
        %v1962 = vmul.f32 %v1203, %v1459
        %v1963 = vmul.f32 %v1204, %v1460
        %v1964 = vmul.f32 %v1205, %v1461
        %v1965 = vmul.f32 %v1206, %v1462
        %v1966 = vmul.f32 %v1207, %v1463
        %v1967 = vmul.f32 %v1208, %v1464
        %v1968 = vmul.f32 %v1209, %v1465
        %v1969 = vmul.f32 %v1210, %v1466
        %v1970 = vmul.f32 %v1962, %v1748
        %v1971 = vmul.f32 %v1963, %v1748
        %v1972 = vmul.f32 %v1964, %v1748
        %v1973 = vmul.f32 %v1965, %v1748
        %v1974 = vmul.f32 %v1966, %v1748
        %v1975 = vmul.f32 %v1967, %v1748
        %v1976 = vmul.f32 %v1968, %v1748
        %v1977 = vmul.f32 %v1969, %v1748
        %v1978 = vadd.f32 %v1954, %v1970
        %v1979 = vadd.f32 %v1955, %v1971
        %v1980 = vadd.f32 %v1956, %v1972
        %v1981 = vadd.f32 %v1957, %v1973
        %v1982 = vadd.f32 %v1958, %v1974
        %v1983 = vadd.f32 %v1959, %v1975
        %v1984 = vadd.f32 %v1960, %v1976
        %v1985 = vadd.f32 %v1961, %v1977
        %v1986 = vmul.f32 %v891, %v1978
        %v1987 = vmul.f32 %v892, %v1979
        %v1988 = vmul.f32 %v893, %v1980
        %v1989 = vmul.f32 %v894, %v1981
        %v1990 = vmul.f32 %v895, %v1982
        %v1991 = vmul.f32 %v896, %v1983
        %v1992 = vmul.f32 %v897, %v1984
        %v1993 = vmul.f32 %v898, %v1985
        %v1994 = vstv %s640
        %v1995 = vmul.f32 %v1897, %v1994
        %v1996 = vmul.f32 %v1898, %v1994
        %v1997 = vmul.f32 %v1899, %v1994
        %v1998 = vmul.f32 %v1900, %v1994
        %v1999 = vmul.f32 %v1901, %v1994
        %v2000 = vmul.f32 %v1902, %v1994
        %v2001 = vmul.f32 %v1903, %v1994
        %v2002 = vmul.f32 %v1904, %v1994
        %v2003 = vmul.f32 %v1914, %v1781
        %v2004 = vmul.f32 %v1915, %v1781
        %v2005 = vmul.f32 %v1916, %v1781
        %v2006 = vmul.f32 %v1917, %v1781
        %v2007 = vmul.f32 %v1918, %v1781
        %v2008 = vmul.f32 %v1919, %v1781
        %v2009 = vmul.f32 %v1920, %v1781
        %v2010 = vmul.f32 %v1921, %v1781
        %v2011 = vadd.f32 %v1995, %v2003
        %v2012 = vadd.f32 %v1996, %v2004
        %v2013 = vadd.f32 %v1997, %v2005
        %v2014 = vadd.f32 %v1998, %v2006
        %v2015 = vadd.f32 %v1999, %v2007
        %v2016 = vadd.f32 %v2000, %v2008
        %v2017 = vadd.f32 %v2001, %v2009
        %v2018 = vadd.f32 %v2002, %v2010
        %v2019 = vmul.f32 %v1938, %v1864
        %v2020 = vmul.f32 %v1939, %v1864
        %v2021 = vmul.f32 %v1940, %v1864
        %v2022 = vmul.f32 %v1941, %v1864
        %v2023 = vmul.f32 %v1942, %v1864
        %v2024 = vmul.f32 %v1943, %v1864
        %v2025 = vmul.f32 %v1944, %v1864
        %v2026 = vmul.f32 %v1945, %v1864
        %v2027 = vadd.f32 %v2011, %v2019
        %v2028 = vadd.f32 %v2012, %v2020
        %v2029 = vadd.f32 %v2013, %v2021
        %v2030 = vadd.f32 %v2014, %v2022
        %v2031 = vadd.f32 %v2015, %v2023
        %v2032 = vadd.f32 %v2016, %v2024
        %v2033 = vadd.f32 %v2017, %v2025
        %v2034 = vadd.f32 %v2018, %v2026
        %v2035 = vmul.f32 %v1962, %v1790
        %v2036 = vmul.f32 %v1963, %v1790
        %v2037 = vmul.f32 %v1964, %v1790
        %v2038 = vmul.f32 %v1965, %v1790
        %v2039 = vmul.f32 %v1966, %v1790
        %v2040 = vmul.f32 %v1967, %v1790
        %v2041 = vmul.f32 %v1968, %v1790
        %v2042 = vmul.f32 %v1969, %v1790
        %v2043 = vadd.f32 %v2027, %v2035
        %v2044 = vadd.f32 %v2028, %v2036
        %v2045 = vadd.f32 %v2029, %v2037
        %v2046 = vadd.f32 %v2030, %v2038
        %v2047 = vadd.f32 %v2031, %v2039
        %v2048 = vadd.f32 %v2032, %v2040
        %v2049 = vadd.f32 %v2033, %v2041
        %v2050 = vadd.f32 %v2034, %v2042
        %v2051 = vmul.f32 %v947, %v2043
        %v2052 = vmul.f32 %v948, %v2044
        %v2053 = vmul.f32 %v949, %v2045
        %v2054 = vmul.f32 %v950, %v2046
        %v2055 = vmul.f32 %v951, %v2047
        %v2056 = vmul.f32 %v952, %v2048
        %v2057 = vmul.f32 %v953, %v2049
        %v2058 = vmul.f32 %v954, %v2050
        %v2059 = vadd.f32 %v1986, %v2051
        %v2060 = vadd.f32 %v1987, %v2052
        %v2061 = vadd.f32 %v1988, %v2053
        %v2062 = vadd.f32 %v1989, %v2054
        %v2063 = vadd.f32 %v1990, %v2055
        %v2064 = vadd.f32 %v1991, %v2056
        %v2065 = vadd.f32 %v1992, %v2057
        %v2066 = vadd.f32 %v1993, %v2058
        %v2067 = vmul.f32 %v1587, %v2059
        %v2068 = vmul.f32 %v1588, %v2060
        %v2069 = vmul.f32 %v1589, %v2061
        %v2070 = vmul.f32 %v1590, %v2062
        %v2071 = vmul.f32 %v1591, %v2063
        %v2072 = vmul.f32 %v1592, %v2064
        %v2073 = vmul.f32 %v1593, %v2065
        %v2074 = vmul.f32 %v1594, %v2066
        %v2075 = vmul.f32 %v1619, %v963
        %v2076 = vmul.f32 %v1620, %v964
        %v2077 = vmul.f32 %v1621, %v965
        %v2078 = vmul.f32 %v1622, %v966
        %v2079 = vmul.f32 %v1623, %v967
        %v2080 = vmul.f32 %v1624, %v968
        %v2081 = vmul.f32 %v1625, %v969
        %v2082 = vmul.f32 %v1626, %v970
        %v2083 = vadd.f32 %v1765, %v1807
        %v2084 = vadd.f32 %v1766, %v1808
        %v2085 = vadd.f32 %v1767, %v1809
        %v2086 = vadd.f32 %v1768, %v1810
        %v2087 = vadd.f32 %v1769, %v1811
        %v2088 = vadd.f32 %v1770, %v1812
        %v2089 = vadd.f32 %v1771, %v1813
        %v2090 = vadd.f32 %v1772, %v1814
        %v2091 = vadd.f32 %v2083, %v1848
        %v2092 = vadd.f32 %v2084, %v1849
        %v2093 = vadd.f32 %v2085, %v1850
        %v2094 = vadd.f32 %v2086, %v1851
        %v2095 = vadd.f32 %v2087, %v1852
        %v2096 = vadd.f32 %v2088, %v1853
        %v2097 = vadd.f32 %v2089, %v1854
        %v2098 = vadd.f32 %v2090, %v1855
        %v2099 = vadd.f32 %v2091, %v1889
        %v2100 = vadd.f32 %v2092, %v1890
        %v2101 = vadd.f32 %v2093, %v1891
        %v2102 = vadd.f32 %v2094, %v1892
        %v2103 = vadd.f32 %v2095, %v1893
        %v2104 = vadd.f32 %v2096, %v1894
        %v2105 = vadd.f32 %v2097, %v1895
        %v2106 = vadd.f32 %v2098, %v1896
        %v2107 = vadd.f32 %v2099, %v2067
        %v2108 = vadd.f32 %v2100, %v2068
        %v2109 = vadd.f32 %v2101, %v2069
        %v2110 = vadd.f32 %v2102, %v2070
        %v2111 = vadd.f32 %v2103, %v2071
        %v2112 = vadd.f32 %v2104, %v2072
        %v2113 = vadd.f32 %v2105, %v2073
        %v2114 = vadd.f32 %v2106, %v2074
        %v2115 = vadd.f32 %v2107, %v2075
        %v2116 = vadd.f32 %v2108, %v2076
        %v2117 = vadd.f32 %v2109, %v2077
        %v2118 = vadd.f32 %v2110, %v2078
        %v2119 = vadd.f32 %v2111, %v2079
        %v2120 = vadd.f32 %v2112, %v2080
        %v2121 = vadd.f32 %v2113, %v2081
        %v2122 = vadd.f32 %v2114, %v2082
        %v2123 = vstv %s642
        %v2124 = vmul.f32 %v2123, %v691
        %v2125 = vmul.f32 %v2123, %v692
        %v2126 = vmul.f32 %v2123, %v693
        %v2127 = vmul.f32 %v2123, %v694
        %v2128 = vmul.f32 %v2123, %v695
        %v2129 = vmul.f32 %v2123, %v696
        %v2130 = vmul.f32 %v2123, %v697
        %v2131 = vmul.f32 %v2123, %v698
        %v2132 = vstv %s641
        %v2133 = vadd.f32 %v2132, %v2124
        %v2134 = vadd.f32 %v2132, %v2125
        %v2135 = vadd.f32 %v2132, %v2126
        %v2136 = vadd.f32 %v2132, %v2127
        %v2137 = vadd.f32 %v2132, %v2128
        %v2138 = vadd.f32 %v2132, %v2129
        %v2139 = vadd.f32 %v2132, %v2130
        %v2140 = vadd.f32 %v2132, %v2131
        %v2141 = vstv %s643
        %v2142 = vsub.f32 %v2141, %v2133
        %v2143 = vsub.f32 %v2141, %v2134
        %v2144 = vsub.f32 %v2141, %v2135
        %v2145 = vsub.f32 %v2141, %v2136
        %v2146 = vsub.f32 %v2141, %v2137
        %v2147 = vsub.f32 %v2141, %v2138
        %v2148 = vsub.f32 %v2141, %v2139
        %v2149 = vsub.f32 %v2141, %v2140
        %v2150 = vmax.f32 %v2142, 0.0
        %v2151 = vmax.f32 %v2143, 0.0
        %v2152 = vmax.f32 %v2144, 0.0
        %v2153 = vmax.f32 %v2145, 0.0
        %v2154 = vmax.f32 %v2146, 0.0
        %v2155 = vmax.f32 %v2147, 0.0
        %v2156 = vmax.f32 %v2148, 0.0
        %v2157 = vmax.f32 %v2149, 0.0
        %v2158 = vand.u32 2147483647, %v2142
        %v2159 = vand.u32 2147483647, %v2143
        %v2160 = vand.u32 2147483647, %v2144
        %v2161 = vand.u32 2147483647, %v2145
        %v2162 = vand.u32 2147483647, %v2146
        %v2163 = vand.u32 2147483647, %v2147
        %v2164 = vand.u32 2147483647, %v2148
        %v2165 = vand.u32 2147483647, %v2149
        %v2166 = vsub.f32 0.0, %v2158
        %v2167 = vsub.f32 0.0, %v2159
        %v2168 = vsub.f32 0.0, %v2160
        %v2169 = vsub.f32 0.0, %v2161
        %v2170 = vsub.f32 0.0, %v2162
        %v2171 = vsub.f32 0.0, %v2163
        %v2172 = vsub.f32 0.0, %v2164
        %v2173 = vsub.f32 0.0, %v2165
        %v2174 = vmul.f32 %v2166, 1.442695
        %v2175 = vpow.pop %v2174
        %v2176 = vmul.f32 %v2167, 1.442695
        %v2177 = vpow.pop %v2176
        %v2178 = vmul.f32 %v2168, 1.442695
        %v2179 = vpow.pop %v2178
        %v2180 = vmul.f32 %v2169, 1.442695
        %v2181 = vpow.pop %v2180
        %v2182 = vmul.f32 %v2170, 1.442695
        %v2183 = vpow.pop %v2182
        %v2184 = vmul.f32 %v2171, 1.442695
        %v2185 = vpow.pop %v2184
        %v2186 = vmul.f32 %v2172, 1.442695
        %v2187 = vpow.pop %v2186
        %v2188 = vmul.f32 %v2173, 1.442695
        %v2189 = vpow.pop %v2188
        %v2190 = vadd.f32 %v2175, 1.0
        %v2191 = vadd.f32 %v2177, 1.0
        %v2192 = vadd.f32 %v2179, 1.0
        %v2193 = vadd.f32 %v2181, 1.0
        %v2194 = vadd.f32 %v2183, 1.0
        %v2195 = vadd.f32 %v2185, 1.0
        %v2196 = vadd.f32 %v2187, 1.0
        %v2197 = vadd.f32 %v2189, 1.0
        %v2198 = vlog2.pop %v2190
        %v2199 = vmul.f32 %v2198, 0.6931472
        %v2200 = vlog2.pop %v2191
        %v2201 = vmul.f32 %v2200, 0.6931472
        %v2202 = vlog2.pop %v2192
        %v2203 = vmul.f32 %v2202, 0.6931472
        %v2204 = vlog2.pop %v2193
        %v2205 = vmul.f32 %v2204, 0.6931472
        %v2206 = vlog2.pop %v2194
        %v2207 = vmul.f32 %v2206, 0.6931472
        %v2208 = vlog2.pop %v2195
        %v2209 = vmul.f32 %v2208, 0.6931472
        %v2210 = vlog2.pop %v2196
        %v2211 = vmul.f32 %v2210, 0.6931472
        %v2212 = vlog2.pop %v2197
        %v2213 = vmul.f32 %v2212, 0.6931472
        %v2214 = vadd.f32 %v2150, %v2199
        %v2215 = vadd.f32 %v2151, %v2201
        %v2216 = vadd.f32 %v2152, %v2203
        %v2217 = vadd.f32 %v2153, %v2205
        %v2218 = vadd.f32 %v2154, %v2207
        %v2219 = vadd.f32 %v2155, %v2209
        %v2220 = vadd.f32 %v2156, %v2211
        %v2221 = vadd.f32 %v2157, %v2213
        %v2222 = vsub.f32 0.0, %v2214
        %v2223 = vsub.f32 0.0, %v2215
        %v2224 = vsub.f32 0.0, %v2216
        %v2225 = vsub.f32 0.0, %v2217
        %v2226 = vsub.f32 0.0, %v2218
        %v2227 = vsub.f32 0.0, %v2219
        %v2228 = vsub.f32 0.0, %v2220
        %v2229 = vsub.f32 0.0, %v2221
        %v2230 = vmul.f32 %v1147, %v2222
        %v2231 = vmul.f32 %v1148, %v2223
        %v2232 = vmul.f32 %v1149, %v2224
        %v2233 = vmul.f32 %v1150, %v2225
        %v2234 = vmul.f32 %v1151, %v2226
        %v2235 = vmul.f32 %v1152, %v2227
        %v2236 = vmul.f32 %v1153, %v2228
        %v2237 = vmul.f32 %v1154, %v2229
        %v2238 = vadd.f32 %v2141, %v2133
        %v2239 = vadd.f32 %v2141, %v2134
        %v2240 = vadd.f32 %v2141, %v2135
        %v2241 = vadd.f32 %v2141, %v2136
        %v2242 = vadd.f32 %v2141, %v2137
        %v2243 = vadd.f32 %v2141, %v2138
        %v2244 = vadd.f32 %v2141, %v2139
        %v2245 = vadd.f32 %v2141, %v2140
        %v2246 = vmax.f32 %v2238, 0.0
        %v2247 = vmax.f32 %v2239, 0.0
        %v2248 = vmax.f32 %v2240, 0.0
        %v2249 = vmax.f32 %v2241, 0.0
        %v2250 = vmax.f32 %v2242, 0.0
        %v2251 = vmax.f32 %v2243, 0.0
        %v2252 = vmax.f32 %v2244, 0.0
        %v2253 = vmax.f32 %v2245, 0.0
        %v2254 = vand.u32 2147483647, %v2238
        %v2255 = vand.u32 2147483647, %v2239
        %v2256 = vand.u32 2147483647, %v2240
        %v2257 = vand.u32 2147483647, %v2241
        %v2258 = vand.u32 2147483647, %v2242
        %v2259 = vand.u32 2147483647, %v2243
        %v2260 = vand.u32 2147483647, %v2244
        %v2261 = vand.u32 2147483647, %v2245
        %v2262 = vsub.f32 0.0, %v2254
        %v2263 = vsub.f32 0.0, %v2255
        %v2264 = vsub.f32 0.0, %v2256
        %v2265 = vsub.f32 0.0, %v2257
        %v2266 = vsub.f32 0.0, %v2258
        %v2267 = vsub.f32 0.0, %v2259
        %v2268 = vsub.f32 0.0, %v2260
        %v2269 = vsub.f32 0.0, %v2261
        %v2270 = vmul.f32 %v2262, 1.442695
        %v2271 = vpow.pop %v2270
        %v2272 = vmul.f32 %v2263, 1.442695
        %v2273 = vpow.pop %v2272
        %v2274 = vmul.f32 %v2264, 1.442695
        %v2275 = vpow.pop %v2274
        %v2276 = vmul.f32 %v2265, 1.442695
        %v2277 = vpow.pop %v2276
        %v2278 = vmul.f32 %v2266, 1.442695
        %v2279 = vpow.pop %v2278
        %v2280 = vmul.f32 %v2267, 1.442695
        %v2281 = vpow.pop %v2280
        %v2282 = vmul.f32 %v2268, 1.442695
        %v2283 = vpow.pop %v2282
        %v2284 = vmul.f32 %v2269, 1.442695
        %v2285 = vpow.pop %v2284
        %v2286 = vadd.f32 %v2271, 1.0
        %v2287 = vadd.f32 %v2273, 1.0
        %v2288 = vadd.f32 %v2275, 1.0
        %v2289 = vadd.f32 %v2277, 1.0
        %v2290 = vadd.f32 %v2279, 1.0
        %v2291 = vadd.f32 %v2281, 1.0
        %v2292 = vadd.f32 %v2283, 1.0
        %v2293 = vadd.f32 %v2285, 1.0
        %v2294 = vlog2.pop %v2286
        %v2295 = vmul.f32 %v2294, 0.6931472
        %v2296 = vlog2.pop %v2287
        %v2297 = vmul.f32 %v2296, 0.6931472
        %v2298 = vlog2.pop %v2288
        %v2299 = vmul.f32 %v2298, 0.6931472
        %v2300 = vlog2.pop %v2289
        %v2301 = vmul.f32 %v2300, 0.6931472
        %v2302 = vlog2.pop %v2290
        %v2303 = vmul.f32 %v2302, 0.6931472
        %v2304 = vlog2.pop %v2291
        %v2305 = vmul.f32 %v2304, 0.6931472
        %v2306 = vlog2.pop %v2292
        %v2307 = vmul.f32 %v2306, 0.6931472
        %v2308 = vlog2.pop %v2293
        %v2309 = vmul.f32 %v2308, 0.6931472
        %v2310 = vadd.f32 %v2246, %v2295
        %v2311 = vadd.f32 %v2247, %v2297
        %v2312 = vadd.f32 %v2248, %v2299
        %v2313 = vadd.f32 %v2249, %v2301
        %v2314 = vadd.f32 %v2250, %v2303
        %v2315 = vadd.f32 %v2251, %v2305
        %v2316 = vadd.f32 %v2252, %v2307
        %v2317 = vadd.f32 %v2253, %v2309
        %v2318 = vsub.f32 0.0, %v2310
        %v2319 = vsub.f32 0.0, %v2311
        %v2320 = vsub.f32 0.0, %v2312
        %v2321 = vsub.f32 0.0, %v2313
        %v2322 = vsub.f32 0.0, %v2314
        %v2323 = vsub.f32 0.0, %v2315
        %v2324 = vsub.f32 0.0, %v2316
        %v2325 = vsub.f32 0.0, %v2317
        %v2326 = vmul.f32 %v1203, %v2318
        %v2327 = vmul.f32 %v1204, %v2319
        %v2328 = vmul.f32 %v1205, %v2320
        %v2329 = vmul.f32 %v1206, %v2321
        %v2330 = vmul.f32 %v1207, %v2322
        %v2331 = vmul.f32 %v1208, %v2323
        %v2332 = vmul.f32 %v1209, %v2324
        %v2333 = vmul.f32 %v1210, %v2325
        %v2334 = vadd.f32 %v2230, %v2326
        %v2335 = vadd.f32 %v2231, %v2327
        %v2336 = vadd.f32 %v2232, %v2328
        %v2337 = vadd.f32 %v2233, %v2329
        %v2338 = vadd.f32 %v2234, %v2330
        %v2339 = vadd.f32 %v2235, %v2331
        %v2340 = vadd.f32 %v2236, %v2332
        %v2341 = vadd.f32 %v2237, %v2333
        %v2342 = vadd.f32 %v2334, %v1219
        %v2343 = vadd.f32 %v2335, %v1220
        %v2344 = vadd.f32 %v2336, %v1221
        %v2345 = vadd.f32 %v2337, %v1222
        %v2346 = vadd.f32 %v2338, %v1223
        %v2347 = vadd.f32 %v2339, %v1224
        %v2348 = vadd.f32 %v2340, %v1225
        %v2349 = vadd.f32 %v2341, %v1226
        %v2350 = vmul.f32 %v1659, %v2342
        %v2351 = vmul.f32 %v1660, %v2343
        %v2352 = vmul.f32 %v1661, %v2344
        %v2353 = vmul.f32 %v1662, %v2345
        %v2354 = vmul.f32 %v1663, %v2346
        %v2355 = vmul.f32 %v1664, %v2347
        %v2356 = vmul.f32 %v1665, %v2348
        %v2357 = vmul.f32 %v1666, %v2349
        %v2358 = vstv %s645
        %v2359 = vmul.f32 %v2358, %v699
        %v2360 = vmul.f32 %v2358, %v700
        %v2361 = vmul.f32 %v2358, %v701
        %v2362 = vmul.f32 %v2358, %v702
        %v2363 = vmul.f32 %v2358, %v703
        %v2364 = vmul.f32 %v2358, %v704
        %v2365 = vmul.f32 %v2358, %v705
        %v2366 = vmul.f32 %v2358, %v706
        %v2367 = vstv %s644
        %v2368 = vadd.f32 %v2367, %v2359
        %v2369 = vadd.f32 %v2367, %v2360
        %v2370 = vadd.f32 %v2367, %v2361
        %v2371 = vadd.f32 %v2367, %v2362
        %v2372 = vadd.f32 %v2367, %v2363
        %v2373 = vadd.f32 %v2367, %v2364
        %v2374 = vadd.f32 %v2367, %v2365
        %v2375 = vadd.f32 %v2367, %v2366
        %v2376 = vstv %s646
        %v2377 = vsub.f32 %v2376, %v2368
        %v2378 = vsub.f32 %v2376, %v2369
        %v2379 = vsub.f32 %v2376, %v2370
        %v2380 = vsub.f32 %v2376, %v2371
        %v2381 = vsub.f32 %v2376, %v2372
        %v2382 = vsub.f32 %v2376, %v2373
        %v2383 = vsub.f32 %v2376, %v2374
        %v2384 = vsub.f32 %v2376, %v2375
        %v2385 = vmax.f32 %v2377, 0.0
        %v2386 = vmax.f32 %v2378, 0.0
        %v2387 = vmax.f32 %v2379, 0.0
        %v2388 = vmax.f32 %v2380, 0.0
        %v2389 = vmax.f32 %v2381, 0.0
        %v2390 = vmax.f32 %v2382, 0.0
        %v2391 = vmax.f32 %v2383, 0.0
        %v2392 = vmax.f32 %v2384, 0.0
        %v2393 = vand.u32 2147483647, %v2377
        %v2394 = vand.u32 2147483647, %v2378
        %v2395 = vand.u32 2147483647, %v2379
        %v2396 = vand.u32 2147483647, %v2380
        %v2397 = vand.u32 2147483647, %v2381
        %v2398 = vand.u32 2147483647, %v2382
        %v2399 = vand.u32 2147483647, %v2383
        %v2400 = vand.u32 2147483647, %v2384
        %v2401 = vsub.f32 0.0, %v2393
        %v2402 = vsub.f32 0.0, %v2394
        %v2403 = vsub.f32 0.0, %v2395
        %v2404 = vsub.f32 0.0, %v2396
        %v2405 = vsub.f32 0.0, %v2397
        %v2406 = vsub.f32 0.0, %v2398
        %v2407 = vsub.f32 0.0, %v2399
        %v2408 = vsub.f32 0.0, %v2400
        %v2409 = vmul.f32 %v2401, 1.442695
        %v2410 = vpow.pop %v2409
        %v2411 = vmul.f32 %v2402, 1.442695
        %v2412 = vpow.pop %v2411
        %v2413 = vmul.f32 %v2403, 1.442695
        %v2414 = vpow.pop %v2413
        %v2415 = vmul.f32 %v2404, 1.442695
        %v2416 = vpow.pop %v2415
        %v2417 = vmul.f32 %v2405, 1.442695
        %v2418 = vpow.pop %v2417
        %v2419 = vmul.f32 %v2406, 1.442695
        %v2420 = vpow.pop %v2419
        %v2421 = vmul.f32 %v2407, 1.442695
        %v2422 = vpow.pop %v2421
        %v2423 = vmul.f32 %v2408, 1.442695
        %v2424 = vpow.pop %v2423
        %v2425 = vadd.f32 %v2410, 1.0
        %v2426 = vadd.f32 %v2412, 1.0
        %v2427 = vadd.f32 %v2414, 1.0
        %v2428 = vadd.f32 %v2416, 1.0
        %v2429 = vadd.f32 %v2418, 1.0
        %v2430 = vadd.f32 %v2420, 1.0
        %v2431 = vadd.f32 %v2422, 1.0
        %v2432 = vadd.f32 %v2424, 1.0
        %v2433 = vlog2.pop %v2425
        %v2434 = vmul.f32 %v2433, 0.6931472
        %v2435 = vlog2.pop %v2426
        %v2436 = vmul.f32 %v2435, 0.6931472
        %v2437 = vlog2.pop %v2427
        %v2438 = vmul.f32 %v2437, 0.6931472
        %v2439 = vlog2.pop %v2428
        %v2440 = vmul.f32 %v2439, 0.6931472
        %v2441 = vlog2.pop %v2429
        %v2442 = vmul.f32 %v2441, 0.6931472
        %v2443 = vlog2.pop %v2430
        %v2444 = vmul.f32 %v2443, 0.6931472
        %v2445 = vlog2.pop %v2431
        %v2446 = vmul.f32 %v2445, 0.6931472
        %v2447 = vlog2.pop %v2432
        %v2448 = vmul.f32 %v2447, 0.6931472
        %v2449 = vadd.f32 %v2385, %v2434
        %v2450 = vadd.f32 %v2386, %v2436
        %v2451 = vadd.f32 %v2387, %v2438
        %v2452 = vadd.f32 %v2388, %v2440
        %v2453 = vadd.f32 %v2389, %v2442
        %v2454 = vadd.f32 %v2390, %v2444
        %v2455 = vadd.f32 %v2391, %v2446
        %v2456 = vadd.f32 %v2392, %v2448
        %v2457 = vsub.f32 0.0, %v2449
        %v2458 = vsub.f32 0.0, %v2450
        %v2459 = vsub.f32 0.0, %v2451
        %v2460 = vsub.f32 0.0, %v2452
        %v2461 = vsub.f32 0.0, %v2453
        %v2462 = vsub.f32 0.0, %v2454
        %v2463 = vsub.f32 0.0, %v2455
        %v2464 = vsub.f32 0.0, %v2456
        %v2465 = vmul.f32 %v1403, %v2457
        %v2466 = vmul.f32 %v1404, %v2458
        %v2467 = vmul.f32 %v1405, %v2459
        %v2468 = vmul.f32 %v1406, %v2460
        %v2469 = vmul.f32 %v1407, %v2461
        %v2470 = vmul.f32 %v1408, %v2462
        %v2471 = vmul.f32 %v1409, %v2463
        %v2472 = vmul.f32 %v1410, %v2464
        %v2473 = vadd.f32 %v2376, %v2368
        %v2474 = vadd.f32 %v2376, %v2369
        %v2475 = vadd.f32 %v2376, %v2370
        %v2476 = vadd.f32 %v2376, %v2371
        %v2477 = vadd.f32 %v2376, %v2372
        %v2478 = vadd.f32 %v2376, %v2373
        %v2479 = vadd.f32 %v2376, %v2374
        %v2480 = vadd.f32 %v2376, %v2375
        %v2481 = vmax.f32 %v2473, 0.0
        %v2482 = vmax.f32 %v2474, 0.0
        %v2483 = vmax.f32 %v2475, 0.0
        %v2484 = vmax.f32 %v2476, 0.0
        %v2485 = vmax.f32 %v2477, 0.0
        %v2486 = vmax.f32 %v2478, 0.0
        %v2487 = vmax.f32 %v2479, 0.0
        %v2488 = vmax.f32 %v2480, 0.0
        %v2489 = vand.u32 2147483647, %v2473
        %v2490 = vand.u32 2147483647, %v2474
        %v2491 = vand.u32 2147483647, %v2475
        %v2492 = vand.u32 2147483647, %v2476
        %v2493 = vand.u32 2147483647, %v2477
        %v2494 = vand.u32 2147483647, %v2478
        %v2495 = vand.u32 2147483647, %v2479
        %v2496 = vand.u32 2147483647, %v2480
        %v2497 = vsub.f32 0.0, %v2489
        %v2498 = vsub.f32 0.0, %v2490
        %v2499 = vsub.f32 0.0, %v2491
        %v2500 = vsub.f32 0.0, %v2492
        %v2501 = vsub.f32 0.0, %v2493
        %v2502 = vsub.f32 0.0, %v2494
        %v2503 = vsub.f32 0.0, %v2495
        %v2504 = vsub.f32 0.0, %v2496
        %v2505 = vmul.f32 %v2497, 1.442695
        %v2506 = vpow.pop %v2505
        %v2507 = vmul.f32 %v2498, 1.442695
        %v2508 = vpow.pop %v2507
        %v2509 = vmul.f32 %v2499, 1.442695
        %v2510 = vpow.pop %v2509
        %v2511 = vmul.f32 %v2500, 1.442695
        %v2512 = vpow.pop %v2511
        %v2513 = vmul.f32 %v2501, 1.442695
        %v2514 = vpow.pop %v2513
        %v2515 = vmul.f32 %v2502, 1.442695
        %v2516 = vpow.pop %v2515
        %v2517 = vmul.f32 %v2503, 1.442695
        %v2518 = vpow.pop %v2517
        %v2519 = vmul.f32 %v2504, 1.442695
        %v2520 = vpow.pop %v2519
        %v2521 = vadd.f32 %v2506, 1.0
        %v2522 = vadd.f32 %v2508, 1.0
        %v2523 = vadd.f32 %v2510, 1.0
        %v2524 = vadd.f32 %v2512, 1.0
        %v2525 = vadd.f32 %v2514, 1.0
        %v2526 = vadd.f32 %v2516, 1.0
        %v2527 = vadd.f32 %v2518, 1.0
        %v2528 = vadd.f32 %v2520, 1.0
        %v2529 = vlog2.pop %v2521
        %v2530 = vmul.f32 %v2529, 0.6931472
        %v2531 = vlog2.pop %v2522
        %v2532 = vmul.f32 %v2531, 0.6931472
        %v2533 = vlog2.pop %v2523
        %v2534 = vmul.f32 %v2533, 0.6931472
        %v2535 = vlog2.pop %v2524
        %v2536 = vmul.f32 %v2535, 0.6931472
        %v2537 = vlog2.pop %v2525
        %v2538 = vmul.f32 %v2537, 0.6931472
        %v2539 = vlog2.pop %v2526
        %v2540 = vmul.f32 %v2539, 0.6931472
        %v2541 = vlog2.pop %v2527
        %v2542 = vmul.f32 %v2541, 0.6931472
        %v2543 = vlog2.pop %v2528
        %v2544 = vmul.f32 %v2543, 0.6931472
        %v2545 = vadd.f32 %v2481, %v2530
        %v2546 = vadd.f32 %v2482, %v2532
        %v2547 = vadd.f32 %v2483, %v2534
        %v2548 = vadd.f32 %v2484, %v2536
        %v2549 = vadd.f32 %v2485, %v2538
        %v2550 = vadd.f32 %v2486, %v2540
        %v2551 = vadd.f32 %v2487, %v2542
        %v2552 = vadd.f32 %v2488, %v2544
        %v2553 = vsub.f32 0.0, %v2545
        %v2554 = vsub.f32 0.0, %v2546
        %v2555 = vsub.f32 0.0, %v2547
        %v2556 = vsub.f32 0.0, %v2548
        %v2557 = vsub.f32 0.0, %v2549
        %v2558 = vsub.f32 0.0, %v2550
        %v2559 = vsub.f32 0.0, %v2551
        %v2560 = vsub.f32 0.0, %v2552
        %v2561 = vmul.f32 %v1459, %v2553
        %v2562 = vmul.f32 %v1460, %v2554
        %v2563 = vmul.f32 %v1461, %v2555
        %v2564 = vmul.f32 %v1462, %v2556
        %v2565 = vmul.f32 %v1463, %v2557
        %v2566 = vmul.f32 %v1464, %v2558
        %v2567 = vmul.f32 %v1465, %v2559
        %v2568 = vmul.f32 %v1466, %v2560
        %v2569 = vadd.f32 %v2465, %v2561
        %v2570 = vadd.f32 %v2466, %v2562
        %v2571 = vadd.f32 %v2467, %v2563
        %v2572 = vadd.f32 %v2468, %v2564
        %v2573 = vadd.f32 %v2469, %v2565
        %v2574 = vadd.f32 %v2470, %v2566
        %v2575 = vadd.f32 %v2471, %v2567
        %v2576 = vadd.f32 %v2472, %v2568
        %v2577 = vadd.f32 %v2569, %v1475
        %v2578 = vadd.f32 %v2570, %v1476
        %v2579 = vadd.f32 %v2571, %v1477
        %v2580 = vadd.f32 %v2572, %v1478
        %v2581 = vadd.f32 %v2573, %v1479
        %v2582 = vadd.f32 %v2574, %v1480
        %v2583 = vadd.f32 %v2575, %v1481
        %v2584 = vadd.f32 %v2576, %v1482
        %v2585 = vmul.f32 %v1699, %v2577
        %v2586 = vmul.f32 %v1700, %v2578
        %v2587 = vmul.f32 %v1701, %v2579
        %v2588 = vmul.f32 %v1702, %v2580
        %v2589 = vmul.f32 %v1703, %v2581
        %v2590 = vmul.f32 %v1704, %v2582
        %v2591 = vmul.f32 %v1705, %v2583
        %v2592 = vmul.f32 %v1706, %v2584
        %v2593 = vadd.f32 %v659, 1e-06
        %v2594 = vadd.f32 %v660, 1e-06
        %v2595 = vadd.f32 %v661, 1e-06
        %v2596 = vadd.f32 %v662, 1e-06
        %v2597 = vadd.f32 %v663, 1e-06
        %v2598 = vadd.f32 %v664, 1e-06
        %v2599 = vadd.f32 %v665, 1e-06
        %v2600 = vadd.f32 %v666, 1e-06
        %v2601 = vlog2.pop %v2593
        %v2602 = vmul.f32 %v2601, 0.6931472
        %v2603 = vlog2.pop %v2594
        %v2604 = vmul.f32 %v2603, 0.6931472
        %v2605 = vlog2.pop %v2595
        %v2606 = vmul.f32 %v2605, 0.6931472
        %v2607 = vlog2.pop %v2596
        %v2608 = vmul.f32 %v2607, 0.6931472
        %v2609 = vlog2.pop %v2597
        %v2610 = vmul.f32 %v2609, 0.6931472
        %v2611 = vlog2.pop %v2598
        %v2612 = vmul.f32 %v2611, 0.6931472
        %v2613 = vlog2.pop %v2599
        %v2614 = vmul.f32 %v2613, 0.6931472
        %v2615 = vlog2.pop %v2600
        %v2616 = vmul.f32 %v2615, 0.6931472
        %v2617 = vstv %s632
        %v2618 = vsub.f32 %v2602, %v2617
        %v2619 = vsub.f32 %v2604, %v2617
        %v2620 = vsub.f32 %v2606, %v2617
        %v2621 = vsub.f32 %v2608, %v2617
        %v2622 = vsub.f32 %v2610, %v2617
        %v2623 = vsub.f32 %v2612, %v2617
        %v2624 = vsub.f32 %v2614, %v2617
        %v2625 = vsub.f32 %v2616, %v2617
        %v2626 = vmul.f32 %v2618, %v2618
        %v2627 = vmul.f32 %v2619, %v2619
        %v2628 = vmul.f32 %v2620, %v2620
        %v2629 = vmul.f32 %v2621, %v2621
        %v2630 = vmul.f32 %v2622, %v2622
        %v2631 = vmul.f32 %v2623, %v2623
        %v2632 = vmul.f32 %v2624, %v2624
        %v2633 = vmul.f32 %v2625, %v2625
        %v2634 = vstv %s648
        %v2635 = vmul.f32 %v2626, %v2634
        %v2636 = vmul.f32 %v2627, %v2634
        %v2637 = vmul.f32 %v2628, %v2634
        %v2638 = vmul.f32 %v2629, %v2634
        %v2639 = vmul.f32 %v2630, %v2634
        %v2640 = vmul.f32 %v2631, %v2634
        %v2641 = vmul.f32 %v2632, %v2634
        %v2642 = vmul.f32 %v2633, %v2634
        %v2643 = vstv %s647
        %v2644 = vadd.f32 %v2643, %v2635
        %v2645 = vadd.f32 %v2643, %v2636
        %v2646 = vadd.f32 %v2643, %v2637
        %v2647 = vadd.f32 %v2643, %v2638
        %v2648 = vadd.f32 %v2643, %v2639
        %v2649 = vadd.f32 %v2643, %v2640
        %v2650 = vadd.f32 %v2643, %v2641
        %v2651 = vadd.f32 %v2643, %v2642
        %v2652 = vsub.f32 0.0, %v2644
        %v2653 = vsub.f32 0.0, %v2645
        %v2654 = vsub.f32 0.0, %v2646
        %v2655 = vsub.f32 0.0, %v2647
        %v2656 = vsub.f32 0.0, %v2648
        %v2657 = vsub.f32 0.0, %v2649
        %v2658 = vsub.f32 0.0, %v2650
        %v2659 = vsub.f32 0.0, %v2651
        %v2660 = vstv %s649
        %v2661 = vmul.f32 %v2660, %v1619
        %v2662 = vmul.f32 %v2660, %v1620
        %v2663 = vmul.f32 %v2660, %v1621
        %v2664 = vmul.f32 %v2660, %v1622
        %v2665 = vmul.f32 %v2660, %v1623
        %v2666 = vmul.f32 %v2660, %v1624
        %v2667 = vmul.f32 %v2660, %v1625
        %v2668 = vmul.f32 %v2660, %v1626
        %v2669 = vstv %s651
        %v2670 = vmul.f32 %v2661, %v2669
        %v2671 = vmul.f32 %v2662, %v2669
        %v2672 = vmul.f32 %v2663, %v2669
        %v2673 = vmul.f32 %v2664, %v2669
        %v2674 = vmul.f32 %v2665, %v2669
        %v2675 = vmul.f32 %v2666, %v2669
        %v2676 = vmul.f32 %v2667, %v2669
        %v2677 = vmul.f32 %v2668, %v2669
        %v2678 = vmul.f32 %v2670, %v891
        %v2679 = vmul.f32 %v2671, %v892
        %v2680 = vmul.f32 %v2672, %v893
        %v2681 = vmul.f32 %v2673, %v894
        %v2682 = vmul.f32 %v2674, %v895
        %v2683 = vmul.f32 %v2675, %v896
        %v2684 = vmul.f32 %v2676, %v897
        %v2685 = vmul.f32 %v2677, %v898
        %v2686 = vmul.f32 %v2618, 2.0
        %v2687 = vmul.f32 %v2619, 2.0
        %v2688 = vmul.f32 %v2620, 2.0
        %v2689 = vmul.f32 %v2621, 2.0
        %v2690 = vmul.f32 %v2622, 2.0
        %v2691 = vmul.f32 %v2623, 2.0
        %v2692 = vmul.f32 %v2624, 2.0
        %v2693 = vmul.f32 %v2625, 2.0
        %v2694 = vsub.f32 %v2669, %v2686
        %v2695 = vsub.f32 %v2669, %v2687
        %v2696 = vsub.f32 %v2669, %v2688
        %v2697 = vsub.f32 %v2669, %v2689
        %v2698 = vsub.f32 %v2669, %v2690
        %v2699 = vsub.f32 %v2669, %v2691
        %v2700 = vsub.f32 %v2669, %v2692
        %v2701 = vsub.f32 %v2669, %v2693
        %v2702 = vmul.f32 %v2678, %v2694
        %v2703 = vmul.f32 %v2679, %v2695
        %v2704 = vmul.f32 %v2680, %v2696
        %v2705 = vmul.f32 %v2681, %v2697
        %v2706 = vmul.f32 %v2682, %v2698
        %v2707 = vmul.f32 %v2683, %v2699
        %v2708 = vmul.f32 %v2684, %v2700
        %v2709 = vmul.f32 %v2685, %v2701
        %v2710 = vsub.f32 %v2652, %v2702
        %v2711 = vsub.f32 %v2653, %v2703
        %v2712 = vsub.f32 %v2654, %v2704
        %v2713 = vsub.f32 %v2655, %v2705
        %v2714 = vsub.f32 %v2656, %v2706
        %v2715 = vsub.f32 %v2657, %v2707
        %v2716 = vsub.f32 %v2658, %v2708
        %v2717 = vsub.f32 %v2659, %v2709
        %v2718 = vmul.f32 %v2660, %v1659
        %v2719 = vmul.f32 %v2660, %v1660
        %v2720 = vmul.f32 %v2660, %v1661
        %v2721 = vmul.f32 %v2660, %v1662
        %v2722 = vmul.f32 %v2660, %v1663
        %v2723 = vmul.f32 %v2660, %v1664
        %v2724 = vmul.f32 %v2660, %v1665
        %v2725 = vmul.f32 %v2660, %v1666
        %v2726 = vstv %s652
        %v2727 = vmul.f32 %v2718, %v2726
        %v2728 = vmul.f32 %v2719, %v2726
        %v2729 = vmul.f32 %v2720, %v2726
        %v2730 = vmul.f32 %v2721, %v2726
        %v2731 = vmul.f32 %v2722, %v2726
        %v2732 = vmul.f32 %v2723, %v2726
        %v2733 = vmul.f32 %v2724, %v2726
        %v2734 = vmul.f32 %v2725, %v2726
        %v2735 = vmul.f32 %v2727, %v1147
        %v2736 = vmul.f32 %v2728, %v1148
        %v2737 = vmul.f32 %v2729, %v1149
        %v2738 = vmul.f32 %v2730, %v1150
        %v2739 = vmul.f32 %v2731, %v1151
        %v2740 = vmul.f32 %v2732, %v1152
        %v2741 = vmul.f32 %v2733, %v1153
        %v2742 = vmul.f32 %v2734, %v1154
        %v2743 = vsub.f32 %v2726, %v2686
        %v2744 = vsub.f32 %v2726, %v2687
        %v2745 = vsub.f32 %v2726, %v2688
        %v2746 = vsub.f32 %v2726, %v2689
        %v2747 = vsub.f32 %v2726, %v2690
        %v2748 = vsub.f32 %v2726, %v2691
        %v2749 = vsub.f32 %v2726, %v2692
        %v2750 = vsub.f32 %v2726, %v2693
        %v2751 = vmul.f32 %v2735, %v2743
        %v2752 = vmul.f32 %v2736, %v2744
        %v2753 = vmul.f32 %v2737, %v2745
        %v2754 = vmul.f32 %v2738, %v2746
        %v2755 = vmul.f32 %v2739, %v2747
        %v2756 = vmul.f32 %v2740, %v2748
        %v2757 = vmul.f32 %v2741, %v2749
        %v2758 = vmul.f32 %v2742, %v2750
        %v2759 = vsub.f32 %v2710, %v2751
        %v2760 = vsub.f32 %v2711, %v2752
        %v2761 = vsub.f32 %v2712, %v2753
        %v2762 = vsub.f32 %v2713, %v2754
        %v2763 = vsub.f32 %v2714, %v2755
        %v2764 = vsub.f32 %v2715, %v2756
        %v2765 = vsub.f32 %v2716, %v2757
        %v2766 = vsub.f32 %v2717, %v2758
        %v2767 = vmul.f32 %v2660, %v1699
        %v2768 = vmul.f32 %v2660, %v1700
        %v2769 = vmul.f32 %v2660, %v1701
        %v2770 = vmul.f32 %v2660, %v1702
        %v2771 = vmul.f32 %v2660, %v1703
        %v2772 = vmul.f32 %v2660, %v1704
        %v2773 = vmul.f32 %v2660, %v1705
        %v2774 = vmul.f32 %v2660, %v1706
        %v2775 = vstv %s653
        %v2776 = vmul.f32 %v2767, %v2775
        %v2777 = vmul.f32 %v2768, %v2775
        %v2778 = vmul.f32 %v2769, %v2775
        %v2779 = vmul.f32 %v2770, %v2775
        %v2780 = vmul.f32 %v2771, %v2775
        %v2781 = vmul.f32 %v2772, %v2775
        %v2782 = vmul.f32 %v2773, %v2775
        %v2783 = vmul.f32 %v2774, %v2775
        %v2784 = vmul.f32 %v2776, %v1403
        %v2785 = vmul.f32 %v2777, %v1404
        %v2786 = vmul.f32 %v2778, %v1405
        %v2787 = vmul.f32 %v2779, %v1406
        %v2788 = vmul.f32 %v2780, %v1407
        %v2789 = vmul.f32 %v2781, %v1408
        %v2790 = vmul.f32 %v2782, %v1409
        %v2791 = vmul.f32 %v2783, %v1410
        %v2792 = vsub.f32 %v2775, %v2686
        %v2793 = vsub.f32 %v2775, %v2687
        %v2794 = vsub.f32 %v2775, %v2688
        %v2795 = vsub.f32 %v2775, %v2689
        %v2796 = vsub.f32 %v2775, %v2690
        %v2797 = vsub.f32 %v2775, %v2691
        %v2798 = vsub.f32 %v2775, %v2692
        %v2799 = vsub.f32 %v2775, %v2693
        %v2800 = vmul.f32 %v2784, %v2792
        %v2801 = vmul.f32 %v2785, %v2793
        %v2802 = vmul.f32 %v2786, %v2794
        %v2803 = vmul.f32 %v2787, %v2795
        %v2804 = vmul.f32 %v2788, %v2796
        %v2805 = vmul.f32 %v2789, %v2797
        %v2806 = vmul.f32 %v2790, %v2798
        %v2807 = vmul.f32 %v2791, %v2799
        %v2808 = vsub.f32 %v2759, %v2800
        %v2809 = vsub.f32 %v2760, %v2801
        %v2810 = vsub.f32 %v2761, %v2802
        %v2811 = vsub.f32 %v2762, %v2803
        %v2812 = vsub.f32 %v2763, %v2804
        %v2813 = vsub.f32 %v2764, %v2805
        %v2814 = vsub.f32 %v2765, %v2806
        %v2815 = vsub.f32 %v2766, %v2807
        %v2816 = vstv %s654
        %v2817 = vmul.f32 %v1539, %v2816
        %v2818 = vmul.f32 %v1540, %v2816
        %v2819 = vmul.f32 %v1541, %v2816
        %v2820 = vmul.f32 %v1542, %v2816
        %v2821 = vmul.f32 %v1543, %v2816
        %v2822 = vmul.f32 %v1544, %v2816
        %v2823 = vmul.f32 %v1545, %v2816
        %v2824 = vmul.f32 %v1546, %v2816
        %v2825 = vmul.f32 %v2817, %v891
        %v2826 = vmul.f32 %v2818, %v892
        %v2827 = vmul.f32 %v2819, %v893
        %v2828 = vmul.f32 %v2820, %v894
        %v2829 = vmul.f32 %v2821, %v895
        %v2830 = vmul.f32 %v2822, %v896
        %v2831 = vmul.f32 %v2823, %v897
        %v2832 = vmul.f32 %v2824, %v898
        %v2833 = vmul.f32 %v2825, %v1147
        %v2834 = vmul.f32 %v2826, %v1148
        %v2835 = vmul.f32 %v2827, %v1149
        %v2836 = vmul.f32 %v2828, %v1150
        %v2837 = vmul.f32 %v2829, %v1151
        %v2838 = vmul.f32 %v2830, %v1152
        %v2839 = vmul.f32 %v2831, %v1153
        %v2840 = vmul.f32 %v2832, %v1154
        %v2841 = vstv %s655
        %v2842 = vmul.f32 %v1555, %v2841
        %v2843 = vmul.f32 %v1556, %v2841
        %v2844 = vmul.f32 %v1557, %v2841
        %v2845 = vmul.f32 %v1558, %v2841
        %v2846 = vmul.f32 %v1559, %v2841
        %v2847 = vmul.f32 %v1560, %v2841
        %v2848 = vmul.f32 %v1561, %v2841
        %v2849 = vmul.f32 %v1562, %v2841
        %v2850 = vmul.f32 %v2842, %v891
        %v2851 = vmul.f32 %v2843, %v892
        %v2852 = vmul.f32 %v2844, %v893
        %v2853 = vmul.f32 %v2845, %v894
        %v2854 = vmul.f32 %v2846, %v895
        %v2855 = vmul.f32 %v2847, %v896
        %v2856 = vmul.f32 %v2848, %v897
        %v2857 = vmul.f32 %v2849, %v898
        %v2858 = vmul.f32 %v2850, %v1403
        %v2859 = vmul.f32 %v2851, %v1404
        %v2860 = vmul.f32 %v2852, %v1405
        %v2861 = vmul.f32 %v2853, %v1406
        %v2862 = vmul.f32 %v2854, %v1407
        %v2863 = vmul.f32 %v2855, %v1408
        %v2864 = vmul.f32 %v2856, %v1409
        %v2865 = vmul.f32 %v2857, %v1410
        %v2866 = vadd.f32 %v2833, %v2858
        %v2867 = vadd.f32 %v2834, %v2859
        %v2868 = vadd.f32 %v2835, %v2860
        %v2869 = vadd.f32 %v2836, %v2861
        %v2870 = vadd.f32 %v2837, %v2862
        %v2871 = vadd.f32 %v2838, %v2863
        %v2872 = vadd.f32 %v2839, %v2864
        %v2873 = vadd.f32 %v2840, %v2865
        %v2874 = vstv %s656
        %v2875 = vmul.f32 %v1571, %v2874
        %v2876 = vmul.f32 %v1572, %v2874
        %v2877 = vmul.f32 %v1573, %v2874
        %v2878 = vmul.f32 %v1574, %v2874
        %v2879 = vmul.f32 %v1575, %v2874
        %v2880 = vmul.f32 %v1576, %v2874
        %v2881 = vmul.f32 %v1577, %v2874
        %v2882 = vmul.f32 %v1578, %v2874
        %v2883 = vmul.f32 %v2875, %v1147
        %v2884 = vmul.f32 %v2876, %v1148
        %v2885 = vmul.f32 %v2877, %v1149
        %v2886 = vmul.f32 %v2878, %v1150
        %v2887 = vmul.f32 %v2879, %v1151
        %v2888 = vmul.f32 %v2880, %v1152
        %v2889 = vmul.f32 %v2881, %v1153
        %v2890 = vmul.f32 %v2882, %v1154
        %v2891 = vmul.f32 %v2883, %v1403
        %v2892 = vmul.f32 %v2884, %v1404
        %v2893 = vmul.f32 %v2885, %v1405
        %v2894 = vmul.f32 %v2886, %v1406
        %v2895 = vmul.f32 %v2887, %v1407
        %v2896 = vmul.f32 %v2888, %v1408
        %v2897 = vmul.f32 %v2889, %v1409
        %v2898 = vmul.f32 %v2890, %v1410
        %v2899 = vadd.f32 %v2866, %v2891
        %v2900 = vadd.f32 %v2867, %v2892
        %v2901 = vadd.f32 %v2868, %v2893
        %v2902 = vadd.f32 %v2869, %v2894
        %v2903 = vadd.f32 %v2870, %v2895
        %v2904 = vadd.f32 %v2871, %v2896
        %v2905 = vadd.f32 %v2872, %v2897
        %v2906 = vadd.f32 %v2873, %v2898
        %v2907 = vstv %s657
        %v2908 = vmul.f32 %v1587, %v2907
        %v2909 = vmul.f32 %v1588, %v2907
        %v2910 = vmul.f32 %v1589, %v2907
        %v2911 = vmul.f32 %v1590, %v2907
        %v2912 = vmul.f32 %v1591, %v2907
        %v2913 = vmul.f32 %v1592, %v2907
        %v2914 = vmul.f32 %v1593, %v2907
        %v2915 = vmul.f32 %v1594, %v2907
        %v2916 = vmul.f32 %v2908, %v891
        %v2917 = vmul.f32 %v2909, %v892
        %v2918 = vmul.f32 %v2910, %v893
        %v2919 = vmul.f32 %v2911, %v894
        %v2920 = vmul.f32 %v2912, %v895
        %v2921 = vmul.f32 %v2913, %v896
        %v2922 = vmul.f32 %v2914, %v897
        %v2923 = vmul.f32 %v2915, %v898
        %v2924 = vmul.f32 %v2916, %v1147
        %v2925 = vmul.f32 %v2917, %v1148
        %v2926 = vmul.f32 %v2918, %v1149
        %v2927 = vmul.f32 %v2919, %v1150
        %v2928 = vmul.f32 %v2920, %v1151
        %v2929 = vmul.f32 %v2921, %v1152
        %v2930 = vmul.f32 %v2922, %v1153
        %v2931 = vmul.f32 %v2923, %v1154
        %v2932 = vmul.f32 %v2924, %v1403
        %v2933 = vmul.f32 %v2925, %v1404
        %v2934 = vmul.f32 %v2926, %v1405
        %v2935 = vmul.f32 %v2927, %v1406
        %v2936 = vmul.f32 %v2928, %v1407
        %v2937 = vmul.f32 %v2929, %v1408
        %v2938 = vmul.f32 %v2930, %v1409
        %v2939 = vmul.f32 %v2931, %v1410
        %v2940 = vadd.f32 %v2899, %v2932
        %v2941 = vadd.f32 %v2900, %v2933
        %v2942 = vadd.f32 %v2901, %v2934
        %v2943 = vadd.f32 %v2902, %v2935
        %v2944 = vadd.f32 %v2903, %v2936
        %v2945 = vadd.f32 %v2904, %v2937
        %v2946 = vadd.f32 %v2905, %v2938
        %v2947 = vadd.f32 %v2906, %v2939
        %v2948 = vstv %s650
        %v2949 = vmul.f32 %v2948, %v2940
        %v2950 = vmul.f32 %v2948, %v2941
        %v2951 = vmul.f32 %v2948, %v2942
        %v2952 = vmul.f32 %v2948, %v2943
        %v2953 = vmul.f32 %v2948, %v2944
        %v2954 = vmul.f32 %v2948, %v2945
        %v2955 = vmul.f32 %v2948, %v2946
        %v2956 = vmul.f32 %v2948, %v2947
        %v2957 = vsub.f32 %v2808, %v2949
        %v2958 = vsub.f32 %v2809, %v2950
        %v2959 = vsub.f32 %v2810, %v2951
        %v2960 = vsub.f32 %v2811, %v2952
        %v2961 = vsub.f32 %v2812, %v2953
        %v2962 = vsub.f32 %v2813, %v2954
        %v2963 = vsub.f32 %v2814, %v2955
        %v2964 = vsub.f32 %v2815, %v2956
        %v2965 = vsub.f32 %v2957, %v2602
        %v2966 = vsub.f32 %v2958, %v2604
        %v2967 = vsub.f32 %v2959, %v2606
        %v2968 = vsub.f32 %v2960, %v2608
        %v2969 = vsub.f32 %v2961, %v2610
        %v2970 = vsub.f32 %v2962, %v2612
        %v2971 = vsub.f32 %v2963, %v2614
        %v2972 = vsub.f32 %v2964, %v2616
        %v2973 = vmax.f32 %v1147, 1e-06
        %v2974 = vmax.f32 %v1148, 1e-06
        %v2975 = vmax.f32 %v1149, 1e-06
        %v2976 = vmax.f32 %v1150, 1e-06
        %v2977 = vmax.f32 %v1151, 1e-06
        %v2978 = vmax.f32 %v1152, 1e-06
        %v2979 = vmax.f32 %v1153, 1e-06
        %v2980 = vmax.f32 %v1154, 1e-06
        %v2981 = vmin.f32 %v2973, 0.999999
        %v2982 = vmin.f32 %v2974, 0.999999
        %v2983 = vmin.f32 %v2975, 0.999999
        %v2984 = vmin.f32 %v2976, 0.999999
        %v2985 = vmin.f32 %v2977, 0.999999
        %v2986 = vmin.f32 %v2978, 0.999999
        %v2987 = vmin.f32 %v2979, 0.999999
        %v2988 = vmin.f32 %v2980, 0.999999
        %v2989 = vmax.f32 %v1403, 1e-06
        %v2990 = vmax.f32 %v1404, 1e-06
        %v2991 = vmax.f32 %v1405, 1e-06
        %v2992 = vmax.f32 %v1406, 1e-06
        %v2993 = vmax.f32 %v1407, 1e-06
        %v2994 = vmax.f32 %v1408, 1e-06
        %v2995 = vmax.f32 %v1409, 1e-06
        %v2996 = vmax.f32 %v1410, 1e-06
        %v2997 = vmin.f32 %v2989, 0.999999
        %v2998 = vmin.f32 %v2990, 0.999999
        %v2999 = vmin.f32 %v2991, 0.999999
        %v3000 = vmin.f32 %v2992, 0.999999
        %v3001 = vmin.f32 %v2993, 0.999999
        %v3002 = vmin.f32 %v2994, 0.999999
        %v3003 = vmin.f32 %v2995, 0.999999
        %v3004 = vmin.f32 %v2996, 0.999999
        %v3005 = vsub.f32 0.0, %v1723
        %v3006 = vsub.f32 0.0, %v1724
        %v3007 = vsub.f32 0.0, %v1725
        %v3008 = vsub.f32 0.0, %v1726
        %v3009 = vsub.f32 0.0, %v1727
        %v3010 = vsub.f32 0.0, %v1728
        %v3011 = vsub.f32 0.0, %v1729
        %v3012 = vsub.f32 0.0, %v1730
        %v3013 = vmul.f32 %v2981, %v2997
        %v3014 = vmul.f32 %v2982, %v2998
        %v3015 = vmul.f32 %v2983, %v2999
        %v3016 = vmul.f32 %v2984, %v3000
        %v3017 = vmul.f32 %v2985, %v3001
        %v3018 = vmul.f32 %v2986, %v3002
        %v3019 = vmul.f32 %v2987, %v3003
        %v3020 = vmul.f32 %v2988, %v3004
        %v3021 = vmul.f32 %v3005, %v3013
        %v3022 = vmul.f32 %v3006, %v3014
        %v3023 = vmul.f32 %v3007, %v3015
        %v3024 = vmul.f32 %v3008, %v3016
        %v3025 = vmul.f32 %v3009, %v3017
        %v3026 = vmul.f32 %v3010, %v3018
        %v3027 = vmul.f32 %v3011, %v3019
        %v3028 = vmul.f32 %v3012, %v3020
        %v3029 = vstv %s658
        %v3030 = vmul.f32 %v3021, %v3029
        %v3031 = vmul.f32 %v3022, %v3029
        %v3032 = vmul.f32 %v3023, %v3029
        %v3033 = vmul.f32 %v3024, %v3029
        %v3034 = vmul.f32 %v3025, %v3029
        %v3035 = vmul.f32 %v3026, %v3029
        %v3036 = vmul.f32 %v3027, %v3029
        %v3037 = vmul.f32 %v3028, %v3029
        %v3038 = vmax.f32 %v3030, -100.0
        %v3039 = vmax.f32 %v3031, -100.0
        %v3040 = vmax.f32 %v3032, -100.0
        %v3041 = vmax.f32 %v3033, -100.0
        %v3042 = vmax.f32 %v3034, -100.0
        %v3043 = vmax.f32 %v3035, -100.0
        %v3044 = vmax.f32 %v3036, -100.0
        %v3045 = vmax.f32 %v3037, -100.0
        %v3046 = vadd.f32 %v2115, %v2350
        %v3047 = vadd.f32 %v2116, %v2351
        %v3048 = vadd.f32 %v2117, %v2352
        %v3049 = vadd.f32 %v2118, %v2353
        %v3050 = vadd.f32 %v2119, %v2354
        %v3051 = vadd.f32 %v2120, %v2355
        %v3052 = vadd.f32 %v2121, %v2356
        %v3053 = vadd.f32 %v2122, %v2357
        %v3054 = vadd.f32 %v3046, %v2585
        %v3055 = vadd.f32 %v3047, %v2586
        %v3056 = vadd.f32 %v3048, %v2587
        %v3057 = vadd.f32 %v3049, %v2588
        %v3058 = vadd.f32 %v3050, %v2589
        %v3059 = vadd.f32 %v3051, %v2590
        %v3060 = vadd.f32 %v3052, %v2591
        %v3061 = vadd.f32 %v3053, %v2592
        %v3062 = vadd.f32 %v3054, %v2965
        %v3063 = vadd.f32 %v3055, %v2966
        %v3064 = vadd.f32 %v3056, %v2967
        %v3065 = vadd.f32 %v3057, %v2968
        %v3066 = vadd.f32 %v3058, %v2969
        %v3067 = vadd.f32 %v3059, %v2970
        %v3068 = vadd.f32 %v3060, %v2971
        %v3069 = vadd.f32 %v3061, %v2972
        %v3070 = vadd.f32 %v3062, %v3038
        %v3071 = vadd.f32 %v3063, %v3039
        %v3072 = vadd.f32 %v3064, %v3040
        %v3073 = vadd.f32 %v3065, %v3041
        %v3074 = vadd.f32 %v3066, %v3042
        %v3075 = vadd.f32 %v3067, %v3043
        %v3076 = vadd.f32 %v3068, %v3044
        %v3077 = vadd.f32 %v3069, %v3045
        %v3078 = vld [vmem:[#allocation2] sm:$0xff]
        %v3079 = vld [vmem:[#allocation2 + $0x8] sm:$0xff]
        %v3080 = vld [vmem:[#allocation2 + $0x10] sm:$0xff]
        %v3081 = vld [vmem:[#allocation2 + $0x18] sm:$0xff]
        %v3082 = vld [vmem:[#allocation2 + $0x20] sm:$0xff]
        %v3083 = vld [vmem:[#allocation2 + $0x28] sm:$0xff]
        %v3084 = vld [vmem:[#allocation2 + $0x30] sm:$0xff]
        %v3085 = vld [vmem:[#allocation2 + $0x38] sm:$0xff]
        %v3086 = vsub.f32 0.0, %v3070
        %v3087 = vsub.f32 0.0, %v3071
        %v3088 = vsub.f32 0.0, %v3072
        %v3089 = vsub.f32 0.0, %v3073
        %v3090 = vsub.f32 0.0, %v3074
        %v3091 = vsub.f32 0.0, %v3075
        %v3092 = vsub.f32 0.0, %v3076
        %v3093 = vsub.f32 0.0, %v3077
        %v3094 = vadd.f32 %v3078, %v3086
        %v3095 = vadd.f32 %v3079, %v3087
        %v3096 = vadd.f32 %v3080, %v3088
        %v3097 = vadd.f32 %v3081, %v3089
        %v3098 = vadd.f32 %v3082, %v3090
        %v3099 = vadd.f32 %v3083, %v3091
        %v3100 = vadd.f32 %v3084, %v3092
        %v3101 = vadd.f32 %v3085, %v3093
        %3102 = vst [vmem:[#allocation2] sm:$0xff] %v3094
        %3103 = vst [vmem:[#allocation2 + $0x8] sm:$0xff] %v3095
        %3104 = vst [vmem:[#allocation2 + $0x10] sm:$0xff] %v3096
        %3105 = vst [vmem:[#allocation2 + $0x18] sm:$0xff] %v3097
        %3106 = vst [vmem:[#allocation2 + $0x20] sm:$0xff] %v3098
        %3107 = vst [vmem:[#allocation2 + $0x28] sm:$0xff] %v3099
        %3108 = vst [vmem:[#allocation2 + $0x30] sm:$0xff] %v3100
        %3109 = vst [vmem:[#allocation2 + $0x38] sm:$0xff] %v3101
        %p3110 = scmp.eq.s32.totalorder %s37, 3
        %p3111 = scmp.eq.s32.totalorder %s38, 3
        %p3112 = pnand %p3110, %p3111
        %p3113 = pneg %p3112
        // Predicated region
        $region89: #{tpu_custom_call.1} parent=51 // pred_check
          _
        $region90: #{tpu_custom_call.1} parent=51 // pred_check_branch
          %3115 = sbr.rel (%p3112) target = $region92
        $region91: #{tpu_custom_call.1} parent=51 // pred_region
          %v3116 = vld [vmem:[#allocation2] sm:$0xff]
          %v3117 = vld [vmem:[#allocation2 + $0x8] sm:$0xff]
          %v3118 = vld [vmem:[#allocation2 + $0x10] sm:$0xff]
          %v3119 = vld [vmem:[#allocation2 + $0x18] sm:$0xff]
          %v3120 = vld [vmem:[#allocation2 + $0x20] sm:$0xff]
          %v3121 = vld [vmem:[#allocation2 + $0x28] sm:$0xff]
          %v3122 = vld [vmem:[#allocation2 + $0x30] sm:$0xff]
          %v3123 = vld [vmem:[#allocation2 + $0x38] sm:$0xff]
          %v3124 = vadd.f32 %v3116, %v3117
          %v3125 = vadd.f32 %v3124, %v3118
          %v3126 = vadd.f32 %v3125, %v3119
          %v3127 = vadd.f32 %v3126, %v3120
          %v3128 = vadd.f32 %v3127, %v3121
          %v3129 = vadd.f32 %v3128, %v3122
          %v3130 = vadd.f32 %v3129, %v3123
          %3131 = vadd.xlane.f32.xlu0 %v3130
          %v3132 = vpop.xlane.xlu0 %3131
          %v3133 = vrot.slane %v3132, 4
          %v3134 = vadd.f32 %v3132, %v3133
          %v3135 = vrot.slane %v3134, 2
          %v3136 = vadd.f32 %v3134, %v3135
          %v3137 = vrot.slane %v3136, 1
          %v3138 = vadd.f32 %v3136, %v3137
          %s3139 = vtos %v3138
          %s3140 = scalar_lea.smem [#allocation17], 0
          %3141 = sst [smem:[%s3140]] %s3139
        $region92: #{tpu_custom_call.1} parent=51 // pred_fallthru
          _
        // Predicated region
        $region93: #{tpu_custom_call.1} parent=51 // pred_check
          %p3142 = pneg %p275
        $region94: #{tpu_custom_call.1} parent=51 // pred_check_branch
          %3144 = sbr.rel (%p3142) target = $region96
        $region95: #{tpu_custom_call.1} parent=51 // pred_region
          %3146 = vsyncadd [#allocation6], 0
          %s3148 = sshll.u32 %s8, 4
          %s3149 = int_to_ptr.hbm [resolvable:$true] %s3148
          %3151 = dma.smem_to_hbm [#allocation17], 16, %s3149, [#allocation6]
        $region96: #{tpu_custom_call.1} parent=51 // pred_fallthru
          _
        // Predicated region
        $region97: #{tpu_custom_call.1} parent=51 // pred_check
          %p3152 = pneg %p275
        $region98: #{tpu_custom_call.1} parent=51 // pred_check_branch
          %3154 = sbr.rel (%p3152) target = $region100
        $region99: #{tpu_custom_call.1} parent=51 // pred_region
          %3156 = dma.done [#allocation6], 16
        $region100: #{tpu_custom_call.1} parent=51 // pred_fallthru
          _
        %3157 = sfence
      $region52: #{tpu_custom_call.1} parent=5 // pred_fallthru
        _
      %p3158 = scmp.le.s32.totalorder 2, %s28
      // Predicated region
      $region101: #{tpu_custom_call.1} parent=5 // pred_check
        %p3159 = pneg %p3158
      $region102: #{tpu_custom_call.1} parent=5 // pred_check_branch
        %3161 = sbr.rel (%p3159) target = $region104
      $region103: #{tpu_custom_call.1} parent=5 // pred_region
        %s3162 = ssub.s32 %s28, 2
      $region104: #{tpu_custom_call.1} parent=5 // pred_fallthru
        _
    $region6: #{tpu_custom_call.1} parent=1 // loop_footer
      %s32 = sadd.s32 1, %s28
    $region7: #{tpu_custom_call.1} parent=1 // loop_footer_branch
      %27 = sbr.rel target = $region3
    $region8: #{tpu_custom_call.1} parent=1 // loop_exit
      _
    %3163 = vsyncpa [#allocation4], 1
    %s3164 = scalar_lea.sflag [#allocation4], 1
    %3165 = vsyncpa %s3164, 1
    %3166 = vsyncpa [#allocation9], 1
    %s3167 = scalar_lea.sflag [#allocation9], 1
    %3168 = vsyncpa %s3167, 1
    %3169 = vsyncpa [#allocation12], 1
    %s3170 = scalar_lea.sflag [#allocation12], 1
    %3171 = vsyncpa %s3170, 1
    %3172 = vsyncpa [#allocation15], 1
    %s3173 = scalar_lea.sflag [#allocation15], 1
    %3174 = vsyncpa %s3173, 1
    %3175 = vsyncpa [#allocation5], 1
    %s3176 = scalar_lea.sflag [#allocation5], 1
    %3177 = vsyncpa %s3176, 1
    %3178 = vsyncpa [#allocation6], 1
    %s3179 = scalar_lea.sflag [#allocation6], 1
    %3180 = vsyncpa %s3179, 1

</llo_original>
